<compile_context>
chip_gen: v6e
topology: v6e:2x2x1
jax: 0.10.0
libtpu: 0.0.40
codegen_flags: <defaults>
</compile_context>

<pallas_src>
import functools

import jax
import jax.numpy as jnp
from jax import lax
from jax.experimental import pallas as pl
from jax.experimental.pallas import tpu as pltpu


def _round_up(v, m):
    return (v + m - 1) // m * m


_VMEM = pl.BlockSpec(memory_space=pltpu.MemorySpace.VMEM)
_SMEM = pl.BlockSpec(memory_space=pltpu.MemorySpace.SMEM)

COUT_PAD = 128  # lane-dense output-channel padding


# --------------------------- fused per-layer kernel ---------------------------

def _fused_conv_kernel(*refs, act, has_bn, att_batch):
    """One conv layer, fully fused in VMEM:
         acc = patches @ W            (bf16 in, f32 acc, MXU)
         [BatchNorm: batch mean/var -> folded affine]
         activation (relu / leaky(0.2) / sigmoid / none)
         [CBAM-style channel attention: spatial avg+max pool -> scalar MLP
          -> sigmoid gate]
    """
    idx = 0
    p_ref = refs[idx]; idx += 1            # [M, Kp]   bf16 patches
    w_ref = refs[idx]; idx += 1            # [Kp, 128] bf16 weight matrix
    if has_bn:
        gb_ref = refs[idx]; idx += 1       # [2, 128]  f32 (gamma; beta), 0 in pad lanes
    if att_batch is not None:
        a_ref = refs[idx]; idx += 1        # SMEM (2,) f32 scalar MLP [w1, w2]
    o_ref = refs[idx]                      # [M, 128]  f32 (lane-dense)

    acc = jnp.dot(p_ref[...], w_ref[...], preferred_element_type=jnp.float32)

    if has_bn:
        inv_m = 1.0 / acc.shape[0]
        mean = jnp.sum(acc, axis=0, keepdims=True) * inv_m
        var = jnp.maximum(
            jnp.sum(acc * acc, axis=0, keepdims=True) * inv_m - mean * mean, 0.0)
        gb = gb_ref[...]
        scale = gb[0:1, :] * lax.rsqrt(var + 1e-5)
        y = (acc - mean) * scale + gb[1:2, :]
    else:
        y = acc

    if act == "relu":
        y = jnp.maximum(y, 0.0)
    elif act == "leaky":
        y = jnp.where(y > 0, y, 0.2 * y)
    elif act == "sigmoid":
        y = jax.nn.sigmoid(y)
    # act == "none": identity

    if att_batch is not None:
        n = att_batch
        m_rows, c = y.shape
        hw = m_rows // n
        yb = y.reshape(n, hw, c)
        avg = jnp.mean(yb, axis=1, keepdims=True)            # (n, 1, 128)
        mx = jnp.max(yb, axis=1, keepdims=True)               # (n, 1, 128)
        w1 = a_ref[0]
        w2 = a_ref[1]
        att = jax.nn.sigmoid(w2 * jnp.maximum(w1 * avg, 0.0)
                             + w2 * jnp.maximum(w1 * mx, 0.0))
        y = (yb * att).reshape(m_rows, c)

    o_ref[...] = y


# ------------------------------ JAX glue ops ------------------------------

def _im2col(x, k, stride, pad):
    """x: [N,H,W,C] -> patches [N*Ho*Wo, k*k*C] in (kh, kw, cin) order."""
    N, H, W, C = x.shape
    if pad:
        x = jnp.pad(x, ((0, 0), (pad, pad), (pad, pad), (0, 0)))
    Ho = (H + 2 * pad - k) // stride + 1
    Wo = (W + 2 * pad - k) // stride + 1
    cols = []
    for i in range(k):
        for j in range(k):
            cols.append(x[:, i:i + stride * Ho:stride,
                          j:j + stride * Wo:stride, :])
    patches = jnp.concatenate(cols, axis=-1)
    return patches.reshape(N * Ho * Wo, k * k * C), (N, Ho, Wo)


def conv_layer(x, w_oihw, stride, pad, gamma=None, beta=None, *,
               act="none", att_w=None):
    """Conv2d(bias=False) [+ BatchNorm2d (batch stats) + activation
    + optional channel attention] as ONE fused pallas_call."""
    Cout, Cin, k, _ = w_oihw.shape
    x = x.astype(jnp.bfloat16)                               # glue in bf16
    patches, (N, Ho, Wo) = _im2col(x, k, stride, pad)        # [M, K] bf16
    M, K = patches.shape
    Kp = _round_up(K, 128)

    patches = jnp.pad(patches, ((0, 0), (0, Kp - K)))
    wmat = jnp.transpose(w_oihw, (2, 3, 1, 0)).reshape(K, Cout)
    wmat = jnp.pad(wmat, ((0, Kp - K), (0, COUT_PAD - Cout))).astype(jnp.bfloat16)

    args = [patches, wmat]
    in_specs = [_VMEM, _VMEM]
    has_bn = gamma is not None
    if has_bn:
        gb = jnp.stack(
            [jnp.pad(gamma.astype(jnp.float32), (0, COUT_PAD - Cout)),
             jnp.pad(beta.astype(jnp.float32), (0, COUT_PAD - Cout))], axis=0)
        args.append(gb)
        in_specs.append(_VMEM)
    att_batch = None
    if att_w is not None:
        args.append(att_w.astype(jnp.float32))
        in_specs.append(_SMEM)
        att_batch = N

    out = pl.pallas_call(
        functools.partial(_fused_conv_kernel, act=act, has_bn=has_bn,
                          att_batch=att_batch),
        out_shape=jax.ShapeDtypeStruct((M, COUT_PAD), jnp.float32),
        in_specs=in_specs,
        out_specs=_VMEM,
    )(*args)
    return out[:, :Cout].reshape(N, Ho, Wo, Cout)


def convT_layer(x, w_iokk, stride, pad, gamma=None, beta=None, *,
                act="none", att_w=None):
    """ConvTranspose2d(bias=False) [+ BN + act + attention] via interior
    (zero-stuffing) dilation + flipped-kernel stride-1 convolution."""
    Cin, Cout, k, _ = w_iokk.shape
    w_conv = jnp.transpose(w_iokk[:, :, ::-1, ::-1], (1, 0, 2, 3))
    lh = k - 1 - pad
    x = x.astype(jnp.bfloat16)                               # dilate in bf16
    xd = lax.pad(x, jnp.array(0.0, x.dtype),
                 ((0, 0, 0), (lh, lh, stride - 1), (lh, lh, stride - 1),
                  (0, 0, 0)))
    return conv_layer(xd, w_conv, 1, 0, gamma, beta, act=act, att_w=att_w)


# ------------------------------- Generator --------------------------------

def init_params(key, nc, nz, ndf):
    ks = jax.random.split(key, 16)
    w = lambda k_, s: (0.02 * jax.random.normal(k_, s, jnp.float32))
    ones = lambda c: jnp.ones((c,), jnp.float32)
    zeros = lambda c: jnp.zeros((c,), jnp.float32)
    p = {
        # encoder
        "e1_w": w(ks[0], (ndf, nc, 4, 4)), "e1_g": ones(ndf), "e1_b": zeros(ndf),
        "ee_w": w(ks[1], (ndf, ndf, 3, 3)), "ee_g": ones(ndf), "ee_b": zeros(ndf),
        "e2_w": w(ks[2], (ndf * 2, ndf, 4, 4)), "e2_g": ones(ndf * 2), "e2_b": zeros(ndf * 2),
        "e3_w": w(ks[3], (ndf * 4, ndf * 2, 4, 4)), "e3_g": ones(ndf * 4), "e3_b": zeros(ndf * 4),
        "e4_w": w(ks[4], (nz, ndf * 4, 3, 3)),
        # decoder (ConvTranspose weights PyTorch-style: (Cin, Cout, k, k))
        "d4_w": w(ks[5], (nz, ndf * 4, 3, 3)), "d4_g": ones(ndf * 4), "d4_b": zeros(ndf * 4),
        "d3_w": w(ks[6], (ndf * 8, ndf * 2, 4, 4)), "d3_g": ones(ndf * 2), "d3_b": zeros(ndf * 2),
        "d2_w": w(ks[7], (ndf * 4, ndf, 4, 4)), "d2_g": ones(ndf), "d2_b": zeros(ndf),
        "de_w": w(ks[8], (ndf, ndf * 2, 3, 3)), "de_g": ones(ndf), "de_b": zeros(ndf),
        "d1_w": w(ks[9], (ndf * 2, 1, 4, 4)),
        # channel attention scalar MLPs (ChannelAttention(1))
        "at1_w": w(ks[10], (2,)),   # present in the module; unused in forward()
        "at2_w": w(ks[11], (2,)),
        "at3_w": w(ks[12], (2,)),
        "at4_w": w(ks[13], (2,)),
    }
    return p


def generator_forward(x_nchw, p):
    x = jnp.transpose(x_nchw, (0, 2, 3, 1)).astype(jnp.float32)  # -> NHWC

    e1 = conv_layer(x, p["e1_w"], 2, 1, p["e1_g"], p["e1_b"], act="relu")
    e_el = conv_layer(e1, p["ee_w"], 1, 1, p["ee_g"], p["ee_b"], act="leaky")
    e2 = conv_layer(e_el, p["e2_w"], 2, 1, p["e2_g"], p["e2_b"], act="leaky")
    e3 = conv_layer(e2, p["e3_w"], 2, 1, p["e3_g"], p["e3_b"], act="leaky")
    e4 = conv_layer(e3, p["e4_w"], 1, 1, act="none")

    d4 = convT_layer(e4, p["d4_w"], 1, 1, p["d4_g"], p["d4_b"], act="relu",
                     att_w=p["at4_w"])
    c34 = jnp.concatenate([e3, d4], axis=-1)

    d3 = convT_layer(c34, p["d3_w"], 2, 1, p["d3_g"], p["d3_b"], act="relu",
                     att_w=p["at3_w"])
    c23 = jnp.concatenate([e2, d3], axis=-1)

    d2 = convT_layer(c23, p["d2_w"], 2, 1, p["d2_g"], p["d2_b"], act="relu",
                     att_w=p["at2_w"])
    cel2 = jnp.concatenate([e_el, d2], axis=-1)

    d_el = conv_layer(cel2, p["de_w"], 1, 1, p["de_g"], p["de_b"], act="relu")
    # `e_el = self.at1(d_el)` in the reference is dead code (result unused).

    c11 = jnp.concatenate([e1, d_el], axis=-1)
    d1 = convT_layer(c11, p["d1_w"], 2, 1, act="sigmoid")

    return jnp.transpose(d1, (0, 3, 1, 2))  # back to NCHW


if __name__ == "__main__":
    # Generator(isize=16, nc=4, nz=32, ndf=8, n_extra_layers=1)
    N, nc, isize = 2, 4, 16
    nz, ndf = 32, 8

    key = jax.random.PRNGKey(0)
    kx, kp = jax.random.split(key)
    x = jax.random.normal(kx, (N, nc, isize, isize), jnp.float32)
    params = init_params(kp, nc, nz, ndf)

    fwd = jax.jit(generator_forward)
    out = fwd(x, params)
    out = jax.block_until_ready(out)

    assert out.shape == (N, 1, isize, isize), out.shape
    assert bool(jnp.all(jnp.isfinite(out)))
    assert bool(jnp.all((out >= 0.0) & (out <= 1.0)))  # sigmoid output
    print("KERNEL_OK")
</pallas_src>

<mosaic_0001>
module attributes {stable_mosaic.version = 11 : i64} {
  func.func @_fused_conv_kernel(%arg0: memref<128x128xbf16, #tpu.memory_space<vmem>>, %arg1: memref<128x128xbf16, #tpu.memory_space<vmem>>, %arg2: memref<2x128xf32, #tpu.memory_space<vmem>>, %arg3: memref<128x128xf32, #tpu.memory_space<vmem>>) attributes {dimension_semantics = [], scalar_prefetch = 0 : i64, scratch_operands = 0 : i64, tpu.core_type = #tpu.core_type<tc>} {
    %c0 = arith.constant 0 : index
    %c0_0 = arith.constant 0 : index
    %0 = vector.load %arg0[%c0, %c0_0] : memref<128x128xbf16, #tpu.memory_space<vmem>>, vector<128x128xbf16>
    %c0_1 = arith.constant 0 : index
    %c0_2 = arith.constant 0 : index
    %1 = vector.load %arg1[%c0_1, %c0_2] : memref<128x128xbf16, #tpu.memory_space<vmem>>, vector<128x128xbf16>
    %cst = arith.constant dense<0.000000e+00> : vector<128x128xf32>
    %2 = tpu.matmul %0, %1, %cst {dimension_numbers = #tpu.dot_dimension_numbers<[1], [0], [0], [1], [0, 0, 1, 1], [], []>} : vector<128x128xbf16>, vector<128x128xbf16>, vector<128x128xf32> -> vector<128x128xf32>
    %cst_3 = arith.constant dense<0.000000e+00> : vector<128xf32>
    %3 = vector.multi_reduction <add>, %2, %cst_3 [0] : vector<128x128xf32> to vector<128xf32>
    %4 = vector.shape_cast %3 : vector<128xf32> to vector<1x128xf32>
    %cst_4 = arith.constant 7.812500e-03 : f32
    %5 = vector.broadcast %cst_4 : f32 to vector<1x128xf32>
    %6 = arith.mulf %4, %5 : vector<1x128xf32>
    %7 = arith.mulf %2, %2 : vector<128x128xf32>
    %cst_5 = arith.constant dense<0.000000e+00> : vector<128xf32>
    %8 = vector.multi_reduction <add>, %7, %cst_5 [0] : vector<128x128xf32> to vector<128xf32>
    %9 = vector.shape_cast %8 : vector<128xf32> to vector<1x128xf32>
    %cst_6 = arith.constant 7.812500e-03 : f32
    %10 = vector.broadcast %cst_6 : f32 to vector<1x128xf32>
    %11 = arith.mulf %9, %10 : vector<1x128xf32>
    %12 = arith.mulf %6, %6 : vector<1x128xf32>
    %13 = arith.subf %11, %12 : vector<1x128xf32>
    %cst_7 = arith.constant 0.000000e+00 : f32
    %14 = vector.broadcast %cst_7 : f32 to vector<1x128xf32>
    %15 = arith.maximumf %13, %14 : vector<1x128xf32>
    %c0_8 = arith.constant 0 : index
    %c0_9 = arith.constant 0 : index
    %16 = vector.load %arg2[%c0_8, %c0_9] : memref<2x128xf32, #tpu.memory_space<vmem>>, vector<2x128xf32>
    %17 = vector.extract_strided_slice %16 {offsets = [0, 0], sizes = [1, 128], strides = [1, 1]} : vector<2x128xf32> to vector<1x128xf32>
    %cst_10 = arith.constant 9.99999974E-6 : f32
    %18 = vector.broadcast %cst_10 : f32 to vector<1x128xf32>
    %19 = arith.addf %15, %18 : vector<1x128xf32>
    %20 = math.rsqrt %19 : vector<1x128xf32>
    %21 = arith.mulf %17, %20 : vector<1x128xf32>
    %22 = vector.broadcast %6 : vector<1x128xf32> to vector<128x128xf32>
    %23 = arith.subf %2, %22 : vector<128x128xf32>
    %24 = vector.broadcast %21 : vector<1x128xf32> to vector<128x128xf32>
    %25 = arith.mulf %23, %24 : vector<128x128xf32>
    %26 = vector.extract_strided_slice %16 {offsets = [1, 0], sizes = [1, 128], strides = [1, 1]} : vector<2x128xf32> to vector<1x128xf32>
    %27 = vector.broadcast %26 : vector<1x128xf32> to vector<128x128xf32>
    %28 = arith.addf %25, %27 : vector<128x128xf32>
    %cst_11 = arith.constant 0.000000e+00 : f32
    %29 = vector.broadcast %cst_11 : f32 to vector<128x128xf32>
    %30 = arith.maximumf %28, %29 : vector<128x128xf32>
    %c0_12 = arith.constant 0 : index
    %c0_13 = arith.constant 0 : index
    %31 = vector.load %arg3[%c0_12, %c0_13] : memref<128x128xf32, #tpu.memory_space<vmem>>, vector<128x128xf32>
    tpu.vector_store %arg3[%c0_12, %c0_13], %30 {strides = array<i32>} : memref<128x128xf32, #tpu.memory_space<vmem>>, vector<128x128xf32>,
    return
  }
}

module attributes {stable_mosaic.version = 11 : i64} {
  func.func @_fused_conv_kernel(%arg0: memref<128x128xbf16, #tpu.memory_space<vmem>>, %arg1: memref<128x128xbf16, #tpu.memory_space<vmem>>, %arg2: memref<2x128xf32, #tpu.memory_space<vmem>>, %arg3: memref<128x128xf32, #tpu.memory_space<vmem>>) attributes {dimension_semantics = [], scalar_prefetch = 0 : i64, scratch_operands = 0 : i64, tpu.core_type = #tpu.core_type<tc>} {
    %c0 = arith.constant 0 : index
    %c0_0 = arith.constant 0 : index
    %0 = vector.load %arg0[%c0, %c0_0] : memref<128x128xbf16, #tpu.memory_space<vmem>>, vector<128x128xbf16>
    %c0_1 = arith.constant 0 : index
    %c0_2 = arith.constant 0 : index
    %1 = vector.load %arg1[%c0_1, %c0_2] : memref<128x128xbf16, #tpu.memory_space<vmem>>, vector<128x128xbf16>
    %cst = arith.constant dense<0.000000e+00> : vector<128x128xf32>
    %2 = tpu.matmul %0, %1, %cst {dimension_numbers = #tpu.dot_dimension_numbers<[1], [0], [0], [1], [0, 0, 1, 1], [], []>} : vector<128x128xbf16>, vector<128x128xbf16>, vector<128x128xf32> -> vector<128x128xf32>
    %cst_3 = arith.constant dense<0.000000e+00> : vector<128xf32>
    %3 = vector.multi_reduction <add>, %2, %cst_3 [0] : vector<128x128xf32> to vector<128xf32>
    %4 = vector.shape_cast %3 : vector<128xf32> to vector<1x128xf32>
    %cst_4 = arith.constant 7.812500e-03 : f32
    %5 = vector.broadcast %cst_4 : f32 to vector<1x128xf32>
    %6 = arith.mulf %4, %5 : vector<1x128xf32>
    %7 = arith.mulf %2, %2 : vector<128x128xf32>
    %cst_5 = arith.constant dense<0.000000e+00> : vector<128xf32>
    %8 = vector.multi_reduction <add>, %7, %cst_5 [0] : vector<128x128xf32> to vector<128xf32>
    %9 = vector.shape_cast %8 : vector<128xf32> to vector<1x128xf32>
    %cst_6 = arith.constant 7.812500e-03 : f32
    %10 = vector.broadcast %cst_6 : f32 to vector<1x128xf32>
    %11 = arith.mulf %9, %10 : vector<1x128xf32>
    %12 = arith.mulf %6, %6 : vector<1x128xf32>
    %13 = arith.subf %11, %12 : vector<1x128xf32>
    %cst_7 = arith.constant 0.000000e+00 : f32
    %14 = vector.broadcast %cst_7 : f32 to vector<1x128xf32>
    %15 = arith.maximumf %13, %14 : vector<1x128xf32>
    %c0_8 = arith.constant 0 : index
    %c0_9 = arith.constant 0 : index
    %16 = vector.load %arg2[%c0_8, %c0_9] : memref<2x128xf32, #tpu.memory_space<vmem>>, vector<2x128xf32>
    %17 = vector.extract_strided_slice %16 {offsets = [0, 0], sizes = [1, 128], strides = [1, 1]} : vector<2x128xf32> to vector<1x128xf32>
    %cst_10 = arith.constant 9.99999974E-6 : f32
    %18 = vector.broadcast %cst_10 : f32 to vector<1x128xf32>
    %19 = arith.addf %15, %18 : vector<1x128xf32>
    %20 = math.rsqrt %19 : vector<1x128xf32>
    %21 = arith.mulf %17, %20 : vector<1x128xf32>
    %22 = vector.broadcast %6 : vector<1x128xf32> to vector<128x128xf32>
    %23 = arith.subf %2, %22 : vector<128x128xf32>
    %24 = vector.broadcast %21 : vector<1x128xf32> to vector<128x128xf32>
    %25 = arith.mulf %23, %24 : vector<128x128xf32>
    %26 = vector.extract_strided_slice %16 {offsets = [1, 0], sizes = [1, 128], strides = [1, 1]} : vector<2x128xf32> to vector<1x128xf32>
    %27 = vector.broadcast %26 : vector<1x128xf32> to vector<128x128xf32>
    %28 = arith.addf %25, %27 : vector<128x128xf32>
    %cst_11 = arith.constant 0.000000e+00 : f32
    %29 = vector.broadcast %cst_11 : f32 to vector<128x128xf32>
    %30 = arith.cmpf ogt, %28, %29 : vector<128x128xf32>
    %cst_12 = arith.constant 2.000000e-01 : f32
    %31 = vector.broadcast %cst_12 : f32 to vector<128x128xf32>
    %32 = arith.mulf %31, %28 : vector<128x128xf32>
    %33 = arith.select %30, %28, %32 : vector<128x128xi1>, vector<128x128xf32>
    %c0_13 = arith.constant 0 : index
    %c0_14 = arith.constant 0 : index
    %34 = vector.load %arg3[%c0_13, %c0_14] : memref<128x128xf32, #tpu.memory_space<vmem>>, vector<128x128xf32>
    tpu.vector_store %arg3[%c0_13, %c0_14], %33 {strides = array<i32>} : memref<128x128xf32, #tpu.memory_space<vmem>>, vector<128x128xf32>,
    return
  }
}

module attributes {stable_mosaic.version = 11 : i64} {
  func.func @_fused_conv_kernel(%arg0: memref<32x128xbf16, #tpu.memory_space<vmem>>, %arg1: memref<128x128xbf16, #tpu.memory_space<vmem>>, %arg2: memref<2x128xf32, #tpu.memory_space<vmem>>, %arg3: memref<32x128xf32, #tpu.memory_space<vmem>>) attributes {dimension_semantics = [], scalar_prefetch = 0 : i64, scratch_operands = 0 : i64, tpu.core_type = #tpu.core_type<tc>} {
    %c0 = arith.constant 0 : index
    %c0_0 = arith.constant 0 : index
    %0 = vector.load %arg0[%c0, %c0_0] : memref<32x128xbf16, #tpu.memory_space<vmem>>, vector<32x128xbf16>
    %c0_1 = arith.constant 0 : index
    %c0_2 = arith.constant 0 : index
    %1 = vector.load %arg1[%c0_1, %c0_2] : memref<128x128xbf16, #tpu.memory_space<vmem>>, vector<128x128xbf16>
    %cst = arith.constant dense<0.000000e+00> : vector<32x128xf32>
    %2 = tpu.matmul %0, %1, %cst {dimension_numbers = #tpu.dot_dimension_numbers<[1], [0], [0], [1], [0, 0, 1, 1], [], []>} : vector<32x128xbf16>, vector<128x128xbf16>, vector<32x128xf32> -> vector<32x128xf32>
    %cst_3 = arith.constant dense<0.000000e+00> : vector<128xf32>
    %3 = vector.multi_reduction <add>, %2, %cst_3 [0] : vector<32x128xf32> to vector<128xf32>
    %4 = vector.shape_cast %3 : vector<128xf32> to vector<1x128xf32>
    %cst_4 = arith.constant 3.125000e-02 : f32
    %5 = vector.broadcast %cst_4 : f32 to vector<1x128xf32>
    %6 = arith.mulf %4, %5 : vector<1x128xf32>
    %7 = arith.mulf %2, %2 : vector<32x128xf32>
    %cst_5 = arith.constant dense<0.000000e+00> : vector<128xf32>
    %8 = vector.multi_reduction <add>, %7, %cst_5 [0] : vector<32x128xf32> to vector<128xf32>
    %9 = vector.shape_cast %8 : vector<128xf32> to vector<1x128xf32>
    %cst_6 = arith.constant 3.125000e-02 : f32
    %10 = vector.broadcast %cst_6 : f32 to vector<1x128xf32>
    %11 = arith.mulf %9, %10 : vector<1x128xf32>
    %12 = arith.mulf %6, %6 : vector<1x128xf32>
    %13 = arith.subf %11, %12 : vector<1x128xf32>
    %cst_7 = arith.constant 0.000000e+00 : f32
    %14 = vector.broadcast %cst_7 : f32 to vector<1x128xf32>
    %15 = arith.maximumf %13, %14 : vector<1x128xf32>
    %c0_8 = arith.constant 0 : index
    %c0_9 = arith.constant 0 : index
    %16 = vector.load %arg2[%c0_8, %c0_9] : memref<2x128xf32, #tpu.memory_space<vmem>>, vector<2x128xf32>
    %17 = vector.extract_strided_slice %16 {offsets = [0, 0], sizes = [1, 128], strides = [1, 1]} : vector<2x128xf32> to vector<1x128xf32>
    %cst_10 = arith.constant 9.99999974E-6 : f32
    %18 = vector.broadcast %cst_10 : f32 to vector<1x128xf32>
    %19 = arith.addf %15, %18 : vector<1x128xf32>
    %20 = math.rsqrt %19 : vector<1x128xf32>
    %21 = arith.mulf %17, %20 : vector<1x128xf32>
    %22 = vector.broadcast %6 : vector<1x128xf32> to vector<32x128xf32>
    %23 = arith.subf %2, %22 : vector<32x128xf32>
    %24 = vector.broadcast %21 : vector<1x128xf32> to vector<32x128xf32>
    %25 = arith.mulf %23, %24 : vector<32x128xf32>
    %26 = vector.extract_strided_slice %16 {offsets = [1, 0], sizes = [1, 128], strides = [1, 1]} : vector<2x128xf32> to vector<1x128xf32>
    %27 = vector.broadcast %26 : vector<1x128xf32> to vector<32x128xf32>
    %28 = arith.addf %25, %27 : vector<32x128xf32>
    %cst_11 = arith.constant 0.000000e+00 : f32
    %29 = vector.broadcast %cst_11 : f32 to vector<32x128xf32>
    %30 = arith.cmpf ogt, %28, %29 : vector<32x128xf32>
    %cst_12 = arith.constant 2.000000e-01 : f32
    %31 = vector.broadcast %cst_12 : f32 to vector<32x128xf32>
    %32 = arith.mulf %31, %28 : vector<32x128xf32>
    %33 = arith.select %30, %28, %32 : vector<32x128xi1>, vector<32x128xf32>
    %c0_13 = arith.constant 0 : index
    %c0_14 = arith.constant 0 : index
    %34 = vector.load %arg3[%c0_13, %c0_14] : memref<32x128xf32, #tpu.memory_space<vmem>>, vector<32x128xf32>
    tpu.vector_store %arg3[%c0_13, %c0_14], %33 {strides = array<i32>} : memref<32x128xf32, #tpu.memory_space<vmem>>, vector<32x128xf32>,
    return
  }
}

module attributes {stable_mosaic.version = 11 : i64} {
  func.func @_fused_conv_kernel(%arg0: memref<8x256xbf16, #tpu.memory_space<vmem>>, %arg1: memref<256x128xbf16, #tpu.memory_space<vmem>>, %arg2: memref<2x128xf32, #tpu.memory_space<vmem>>, %arg3: memref<8x128xf32, #tpu.memory_space<vmem>>) attributes {dimension_semantics = [], scalar_prefetch = 0 : i64, scratch_operands = 0 : i64, tpu.core_type = #tpu.core_type<tc>} {
    %c0 = arith.constant 0 : index
    %c0_0 = arith.constant 0 : index
    %0 = vector.load %arg0[%c0, %c0_0] : memref<8x256xbf16, #tpu.memory_space<vmem>>, vector<8x256xbf16>
    %c0_1 = arith.constant 0 : index
    %c0_2 = arith.constant 0 : index
    %1 = vector.load %arg1[%c0_1, %c0_2] : memref<256x128xbf16, #tpu.memory_space<vmem>>, vector<256x128xbf16>
    %cst = arith.constant dense<0.000000e+00> : vector<8x128xf32>
    %2 = tpu.matmul %0, %1, %cst {dimension_numbers = #tpu.dot_dimension_numbers<[1], [0], [0], [1], [0, 0, 1, 1], [], []>} : vector<8x256xbf16>, vector<256x128xbf16>, vector<8x128xf32> -> vector<8x128xf32>
    %cst_3 = arith.constant dense<0.000000e+00> : vector<128xf32>
    %3 = vector.multi_reduction <add>, %2, %cst_3 [0] : vector<8x128xf32> to vector<128xf32>
    %4 = vector.shape_cast %3 : vector<128xf32> to vector<1x128xf32>
    %cst_4 = arith.constant 1.250000e-01 : f32
    %5 = vector.broadcast %cst_4 : f32 to vector<1x128xf32>
    %6 = arith.mulf %4, %5 : vector<1x128xf32>
    %7 = arith.mulf %2, %2 : vector<8x128xf32>
    %cst_5 = arith.constant dense<0.000000e+00> : vector<128xf32>
    %8 = vector.multi_reduction <add>, %7, %cst_5 [0] : vector<8x128xf32> to vector<128xf32>
    %9 = vector.shape_cast %8 : vector<128xf32> to vector<1x128xf32>
    %cst_6 = arith.constant 1.250000e-01 : f32
    %10 = vector.broadcast %cst_6 : f32 to vector<1x128xf32>
    %11 = arith.mulf %9, %10 : vector<1x128xf32>
    %12 = arith.mulf %6, %6 : vector<1x128xf32>
    %13 = arith.subf %11, %12 : vector<1x128xf32>
    %cst_7 = arith.constant 0.000000e+00 : f32
    %14 = vector.broadcast %cst_7 : f32 to vector<1x128xf32>
    %15 = arith.maximumf %13, %14 : vector<1x128xf32>
    %c0_8 = arith.constant 0 : index
    %c0_9 = arith.constant 0 : index
    %16 = vector.load %arg2[%c0_8, %c0_9] : memref<2x128xf32, #tpu.memory_space<vmem>>, vector<2x128xf32>
    %17 = vector.extract_strided_slice %16 {offsets = [0, 0], sizes = [1, 128], strides = [1, 1]} : vector<2x128xf32> to vector<1x128xf32>
    %cst_10 = arith.constant 9.99999974E-6 : f32
    %18 = vector.broadcast %cst_10 : f32 to vector<1x128xf32>
    %19 = arith.addf %15, %18 : vector<1x128xf32>
    %20 = math.rsqrt %19 : vector<1x128xf32>
    %21 = arith.mulf %17, %20 : vector<1x128xf32>
    %22 = vector.broadcast %6 : vector<1x128xf32> to vector<8x128xf32>
    %23 = arith.subf %2, %22 : vector<8x128xf32>
    %24 = vector.broadcast %21 : vector<1x128xf32> to vector<8x128xf32>
    %25 = arith.mulf %23, %24 : vector<8x128xf32>
    %26 = vector.extract_strided_slice %16 {offsets = [1, 0], sizes = [1, 128], strides = [1, 1]} : vector<2x128xf32> to vector<1x128xf32>
    %27 = vector.broadcast %26 : vector<1x128xf32> to vector<8x128xf32>
    %28 = arith.addf %25, %27 : vector<8x128xf32>
    %cst_11 = arith.constant 0.000000e+00 : f32
    %29 = vector.broadcast %cst_11 : f32 to vector<8x128xf32>
    %30 = arith.cmpf ogt, %28, %29 : vector<8x128xf32>
    %cst_12 = arith.constant 2.000000e-01 : f32
    %31 = vector.broadcast %cst_12 : f32 to vector<8x128xf32>
    %32 = arith.mulf %31, %28 : vector<8x128xf32>
    %33 = arith.select %30, %28, %32 : vector<8x128xi1>, vector<8x128xf32>
    %c0_13 = arith.constant 0 : index
    %c0_14 = arith.constant 0 : index
    %34 = vector.load %arg3[%c0_13, %c0_14] : memref<8x128xf32, #tpu.memory_space<vmem>>, vector<8x128xf32>
    tpu.vector_store %arg3[%c0_13, %c0_14], %33 {strides = array<i32>} : memref<8x128xf32, #tpu.memory_space<vmem>>, vector<8x128xf32>,
    return
  }
}

module attributes {stable_mosaic.version = 11 : i64} {
  func.func @_fused_conv_kernel(%arg0: memref<8x384xbf16, #tpu.memory_space<vmem>>, %arg1: memref<384x128xbf16, #tpu.memory_space<vmem>>, %arg2: memref<8x128xf32, #tpu.memory_space<vmem>>) attributes {dimension_semantics = [], scalar_prefetch = 0 : i64, scratch_operands = 0 : i64, tpu.core_type = #tpu.core_type<tc>} {
    %c0 = arith.constant 0 : index
    %c0_0 = arith.constant 0 : index
    %0 = vector.load %arg0[%c0, %c0_0] : memref<8x384xbf16, #tpu.memory_space<vmem>>, vector<8x384xbf16>
    %c0_1 = arith.constant 0 : index
    %c0_2 = arith.constant 0 : index
    %1 = vector.load %arg1[%c0_1, %c0_2] : memref<384x128xbf16, #tpu.memory_space<vmem>>, vector<384x128xbf16>
    %cst = arith.constant dense<0.000000e+00> : vector<8x128xf32>
    %2 = tpu.matmul %0, %1, %cst {dimension_numbers = #tpu.dot_dimension_numbers<[1], [0], [0], [1], [0, 0, 1, 1], [], []>} : vector<8x384xbf16>, vector<384x128xbf16>, vector<8x128xf32> -> vector<8x128xf32>
    %c0_3 = arith.constant 0 : index
    %c0_4 = arith.constant 0 : index
    %3 = vector.load %arg2[%c0_3, %c0_4] : memref<8x128xf32, #tpu.memory_space<vmem>>, vector<8x128xf32>
    tpu.vector_store %arg2[%c0_3, %c0_4], %2 {strides = array<i32>} : memref<8x128xf32, #tpu.memory_space<vmem>>, vector<8x128xf32>,
    return
  }
}

module attributes {stable_mosaic.version = 11 : i64} {
  func.func @_fused_conv_kernel(%arg0: memref<8x384xbf16, #tpu.memory_space<vmem>>, %arg1: memref<384x128xbf16, #tpu.memory_space<vmem>>, %arg2: memref<2x128xf32, #tpu.memory_space<vmem>>, %arg3: memref<2xf32, #tpu.memory_space<smem>>, %arg4: memref<8x128xf32, #tpu.memory_space<vmem>>) attributes {dimension_semantics = [], scalar_prefetch = 0 : i64, scratch_operands = 0 : i64, tpu.core_type = #tpu.core_type<tc>} {
    %c0 = arith.constant 0 : index
    %c0_0 = arith.constant 0 : index
    %0 = vector.load %arg0[%c0, %c0_0] : memref<8x384xbf16, #tpu.memory_space<vmem>>, vector<8x384xbf16>
    %c0_1 = arith.constant 0 : index
    %c0_2 = arith.constant 0 : index
    %1 = vector.load %arg1[%c0_1, %c0_2] : memref<384x128xbf16, #tpu.memory_space<vmem>>, vector<384x128xbf16>
    %cst = arith.constant dense<0.000000e+00> : vector<8x128xf32>
    %2 = tpu.matmul %0, %1, %cst {dimension_numbers = #tpu.dot_dimension_numbers<[1], [0], [0], [1], [0, 0, 1, 1], [], []>} : vector<8x384xbf16>, vector<384x128xbf16>, vector<8x128xf32> -> vector<8x128xf32>
    %cst_3 = arith.constant dense<0.000000e+00> : vector<128xf32>
    %3 = vector.multi_reduction <add>, %2, %cst_3 [0] : vector<8x128xf32> to vector<128xf32>
    %4 = vector.shape_cast %3 : vector<128xf32> to vector<1x128xf32>
    %cst_4 = arith.constant 1.250000e-01 : f32
    %5 = vector.broadcast %cst_4 : f32 to vector<1x128xf32>
    %6 = arith.mulf %4, %5 : vector<1x128xf32>
    %7 = arith.mulf %2, %2 : vector<8x128xf32>
    %cst_5 = arith.constant dense<0.000000e+00> : vector<128xf32>
    %8 = vector.multi_reduction <add>, %7, %cst_5 [0] : vector<8x128xf32> to vector<128xf32>
    %9 = vector.shape_cast %8 : vector<128xf32> to vector<1x128xf32>
    %cst_6 = arith.constant 1.250000e-01 : f32
    %10 = vector.broadcast %cst_6 : f32 to vector<1x128xf32>
    %11 = arith.mulf %9, %10 : vector<1x128xf32>
    %12 = arith.mulf %6, %6 : vector<1x128xf32>
    %13 = arith.subf %11, %12 : vector<1x128xf32>
    %cst_7 = arith.constant 0.000000e+00 : f32
    %14 = vector.broadcast %cst_7 : f32 to vector<1x128xf32>
    %15 = arith.maximumf %13, %14 : vector<1x128xf32>
    %c0_8 = arith.constant 0 : index
    %c0_9 = arith.constant 0 : index
    %16 = vector.load %arg2[%c0_8, %c0_9] : memref<2x128xf32, #tpu.memory_space<vmem>>, vector<2x128xf32>
    %17 = vector.extract_strided_slice %16 {offsets = [0, 0], sizes = [1, 128], strides = [1, 1]} : vector<2x128xf32> to vector<1x128xf32>
    %cst_10 = arith.constant 9.99999974E-6 : f32
    %18 = vector.broadcast %cst_10 : f32 to vector<1x128xf32>
    %19 = arith.addf %15, %18 : vector<1x128xf32>
    %20 = math.rsqrt %19 : vector<1x128xf32>
    %21 = arith.mulf %17, %20 : vector<1x128xf32>
    %22 = vector.broadcast %6 : vector<1x128xf32> to vector<8x128xf32>
    %23 = arith.subf %2, %22 : vector<8x128xf32>
    %24 = vector.broadcast %21 : vector<1x128xf32> to vector<8x128xf32>
    %25 = arith.mulf %23, %24 : vector<8x128xf32>
    %26 = vector.extract_strided_slice %16 {offsets = [1, 0], sizes = [1, 128], strides = [1, 1]} : vector<2x128xf32> to vector<1x128xf32>
    %27 = vector.broadcast %26 : vector<1x128xf32> to vector<8x128xf32>
    %28 = arith.addf %25, %27 : vector<8x128xf32>
    %cst_11 = arith.constant 0.000000e+00 : f32
    %29 = vector.broadcast %cst_11 : f32 to vector<8x128xf32>
    %30 = arith.maximumf %28, %29 : vector<8x128xf32>
    %31 = vector.shape_cast %30 : vector<8x128xf32> to vector<2x4x128xf32>
    %cst_12 = arith.constant dense<0.000000e+00> : vector<2x128xf32>
    %32 = vector.multi_reduction <add>, %31, %cst_12 [1] : vector<2x4x128xf32> to vector<2x128xf32>
    %33 = vector.shape_cast %32 : vector<2x128xf32> to vector<2x1x128xf32>
    %cst_13 = arith.constant 4.000000e+00 : f32
    %34 = vector.broadcast %cst_13 : f32 to vector<2x1x128xf32>
    %35 = arith.divf %33, %34 : vector<2x1x128xf32>
    %cst_14 = arith.constant dense<0xFF800000> : vector<2x128xf32>
    %36 = vector.multi_reduction <maximumf>, %31, %cst_14 [1] : vector<2x4x128xf32> to vector<2x128xf32>
    %37 = vector.shape_cast %36 : vector<2x128xf32> to vector<2x1x128xf32>
    %c0_15 = arith.constant 0 : index
    %38 = memref.load %arg3[%c0_15] : memref<2xf32, #tpu.memory_space<smem>>
    %c1 = arith.constant 1 : index
    %39 = memref.load %arg3[%c1] : memref<2xf32, #tpu.memory_space<smem>>
    %40 = vector.broadcast %38 : f32 to vector<2x1x128xf32>
    %41 = arith.mulf %40, %35 : vector<2x1x128xf32>
    %cst_16 = arith.constant 0.000000e+00 : f32
    %42 = vector.broadcast %cst_16 : f32 to vector<2x1x128xf32>
    %43 = arith.maximumf %41, %42 : vector<2x1x128xf32>
    %44 = vector.broadcast %39 : f32 to vector<2x1x128xf32>
    %45 = arith.mulf %44, %43 : vector<2x1x128xf32>
    %46 = vector.broadcast %38 : f32 to vector<2x1x128xf32>
    %47 = arith.mulf %46, %37 : vector<2x1x128xf32>
    %cst_17 = arith.constant 0.000000e+00 : f32
    %48 = vector.broadcast %cst_17 : f32 to vector<2x1x128xf32>
    %49 = arith.maximumf %47, %48 : vector<2x1x128xf32>
    %50 = vector.broadcast %39 : f32 to vector<2x1x128xf32>
    %51 = arith.mulf %50, %49 : vector<2x1x128xf32>
    %52 = arith.addf %45, %51 : vector<2x1x128xf32>
    %53 = arith.negf %52 : vector<2x1x128xf32>
    %54 = math.exp %53 : vector<2x1x128xf32>
    %cst_18 = arith.constant 1.000000e+00 : f32
    %55 = vector.broadcast %cst_18 : f32 to vector<2x1x128xf32>
    %56 = arith.addf %55, %54 : vector<2x1x128xf32>
    %57 = arith.divf %55, %56 : vector<2x1x128xf32>
    %58 = vector.broadcast %57 : vector<2x1x128xf32> to vector<2x4x128xf32>
    %59 = arith.mulf %31, %58 : vector<2x4x128xf32>
    %60 = vector.shape_cast %59 : vector<2x4x128xf32> to vector<8x128xf32>
    %c0_19 = arith.constant 0 : index
    %c0_20 = arith.constant 0 : index
    %61 = vector.load %arg4[%c0_19, %c0_20] : memref<8x128xf32, #tpu.memory_space<vmem>>, vector<8x128xf32>
    tpu.vector_store %arg4[%c0_19, %c0_20], %60 {strides = array<i32>} : memref<8x128xf32, #tpu.memory_space<vmem>>, vector<8x128xf32>,
    return
  }
}

module attributes {stable_mosaic.version = 11 : i64} {
  func.func @_fused_conv_kernel(%arg0: memref<32x1024xbf16, #tpu.memory_space<vmem>>, %arg1: memref<1024x128xbf16, #tpu.memory_space<vmem>>, %arg2: memref<2x128xf32, #tpu.memory_space<vmem>>, %arg3: memref<2xf32, #tpu.memory_space<smem>>, %arg4: memref<32x128xf32, #tpu.memory_space<vmem>>) attributes {dimension_semantics = [], scalar_prefetch = 0 : i64, scratch_operands = 0 : i64, tpu.core_type = #tpu.core_type<tc>} {
    %c0 = arith.constant 0 : index
    %c0_0 = arith.constant 0 : index
    %0 = vector.load %arg0[%c0, %c0_0] : memref<32x1024xbf16, #tpu.memory_space<vmem>>, vector<32x1024xbf16>
    %c0_1 = arith.constant 0 : index
    %c0_2 = arith.constant 0 : index
    %1 = vector.load %arg1[%c0_1, %c0_2] : memref<1024x128xbf16, #tpu.memory_space<vmem>>, vector<1024x128xbf16>
    %cst = arith.constant dense<0.000000e+00> : vector<32x128xf32>
    %2 = tpu.matmul %0, %1, %cst {dimension_numbers = #tpu.dot_dimension_numbers<[1], [0], [0], [1], [0, 0, 1, 1], [], []>} : vector<32x1024xbf16>, vector<1024x128xbf16>, vector<32x128xf32> -> vector<32x128xf32>
    %cst_3 = arith.constant dense<0.000000e+00> : vector<128xf32>
    %3 = vector.multi_reduction <add>, %2, %cst_3 [0] : vector<32x128xf32> to vector<128xf32>
    %4 = vector.shape_cast %3 : vector<128xf32> to vector<1x128xf32>
    %cst_4 = arith.constant 3.125000e-02 : f32
    %5 = vector.broadcast %cst_4 : f32 to vector<1x128xf32>
    %6 = arith.mulf %4, %5 : vector<1x128xf32>
    %7 = arith.mulf %2, %2 : vector<32x128xf32>
    %cst_5 = arith.constant dense<0.000000e+00> : vector<128xf32>
    %8 = vector.multi_reduction <add>, %7, %cst_5 [0] : vector<32x128xf32> to vector<128xf32>
    %9 = vector.shape_cast %8 : vector<128xf32> to vector<1x128xf32>
    %cst_6 = arith.constant 3.125000e-02 : f32
    %10 = vector.broadcast %cst_6 : f32 to vector<1x128xf32>
    %11 = arith.mulf %9, %10 : vector<1x128xf32>
    %12 = arith.mulf %6, %6 : vector<1x128xf32>
    %13 = arith.subf %11, %12 : vector<1x128xf32>
    %cst_7 = arith.constant 0.000000e+00 : f32
    %14 = vector.broadcast %cst_7 : f32 to vector<1x128xf32>
    %15 = arith.maximumf %13, %14 : vector<1x128xf32>
    %c0_8 = arith.constant 0 : index
    %c0_9 = arith.constant 0 : index
    %16 = vector.load %arg2[%c0_8, %c0_9] : memref<2x128xf32, #tpu.memory_space<vmem>>, vector<2x128xf32>
    %17 = vector.extract_strided_slice %16 {offsets = [0, 0], sizes = [1, 128], strides = [1, 1]} : vector<2x128xf32> to vector<1x128xf32>
    %cst_10 = arith.constant 9.99999974E-6 : f32
    %18 = vector.broadcast %cst_10 : f32 to vector<1x128xf32>
    %19 = arith.addf %15, %18 : vector<1x128xf32>
    %20 = math.rsqrt %19 : vector<1x128xf32>
    %21 = arith.mulf %17, %20 : vector<1x128xf32>
    %22 = vector.broadcast %6 : vector<1x128xf32> to vector<32x128xf32>
    %23 = arith.subf %2, %22 : vector<32x128xf32>
    %24 = vector.broadcast %21 : vector<1x128xf32> to vector<32x128xf32>
    %25 = arith.mulf %23, %24 : vector<32x128xf32>
    %26 = vector.extract_strided_slice %16 {offsets = [1, 0], sizes = [1, 128], strides = [1, 1]} : vector<2x128xf32> to vector<1x128xf32>
    %27 = vector.broadcast %26 : vector<1x128xf32> to vector<32x128xf32>
    %28 = arith.addf %25, %27 : vector<32x128xf32>
    %cst_11 = arith.constant 0.000000e+00 : f32
    %29 = vector.broadcast %cst_11 : f32 to vector<32x128xf32>
    %30 = arith.maximumf %28, %29 : vector<32x128xf32>
    %31 = vector.shape_cast %30 : vector<32x128xf32> to vector<2x16x128xf32>
    %cst_12 = arith.constant dense<0.000000e+00> : vector<2x128xf32>
    %32 = vector.multi_reduction <add>, %31, %cst_12 [1] : vector<2x16x128xf32> to vector<2x128xf32>
    %33 = vector.shape_cast %32 : vector<2x128xf32> to vector<2x1x128xf32>
    %cst_13 = arith.constant 1.600000e+01 : f32
    %34 = vector.broadcast %cst_13 : f32 to vector<2x1x128xf32>
    %35 = arith.divf %33, %34 : vector<2x1x128xf32>
    %cst_14 = arith.constant dense<0xFF800000> : vector<2x128xf32>
    %36 = vector.multi_reduction <maximumf>, %31, %cst_14 [1] : vector<2x16x128xf32> to vector<2x128xf32>
    %37 = vector.shape_cast %36 : vector<2x128xf32> to vector<2x1x128xf32>
    %c0_15 = arith.constant 0 : index
    %38 = memref.load %arg3[%c0_15] : memref<2xf32, #tpu.memory_space<smem>>
    %c1 = arith.constant 1 : index
    %39 = memref.load %arg3[%c1] : memref<2xf32, #tpu.memory_space<smem>>
    %40 = vector.broadcast %38 : f32 to vector<2x1x128xf32>
    %41 = arith.mulf %40, %35 : vector<2x1x128xf32>
    %cst_16 = arith.constant 0.000000e+00 : f32
    %42 = vector.broadcast %cst_16 : f32 to vector<2x1x128xf32>
    %43 = arith.maximumf %41, %42 : vector<2x1x128xf32>
    %44 = vector.broadcast %39 : f32 to vector<2x1x128xf32>
    %45 = arith.mulf %44, %43 : vector<2x1x128xf32>
    %46 = vector.broadcast %38 : f32 to vector<2x1x128xf32>
    %47 = arith.mulf %46, %37 : vector<2x1x128xf32>
    %cst_17 = arith.constant 0.000000e+00 : f32
    %48 = vector.broadcast %cst_17 : f32 to vector<2x1x128xf32>
    %49 = arith.maximumf %47, %48 : vector<2x1x128xf32>
    %50 = vector.broadcast %39 : f32 to vector<2x1x128xf32>
    %51 = arith.mulf %50, %49 : vector<2x1x128xf32>
    %52 = arith.addf %45, %51 : vector<2x1x128xf32>
    %53 = arith.negf %52 : vector<2x1x128xf32>
    %54 = math.exp %53 : vector<2x1x128xf32>
    %cst_18 = arith.constant 1.000000e+00 : f32
    %55 = vector.broadcast %cst_18 : f32 to vector<2x1x128xf32>
    %56 = arith.addf %55, %54 : vector<2x1x128xf32>
    %57 = arith.divf %55, %56 : vector<2x1x128xf32>
    %58 = vector.broadcast %57 : vector<2x1x128xf32> to vector<2x16x128xf32>
    %59 = arith.mulf %31, %58 : vector<2x16x128xf32>
    %60 = vector.shape_cast %59 : vector<2x16x128xf32> to vector<32x128xf32>
    %c0_19 = arith.constant 0 : index
    %c0_20 = arith.constant 0 : index
    %61 = vector.load %arg4[%c0_19, %c0_20] : memref<32x128xf32, #tpu.memory_space<vmem>>, vector<32x128xf32>
    tpu.vector_store %arg4[%c0_19, %c0_20], %60 {strides = array<i32>} : memref<32x128xf32, #tpu.memory_space<vmem>>, vector<32x128xf32>,
    return
  }
}

module attributes {stable_mosaic.version = 11 : i64} {
  func.func @_fused_conv_kernel(%arg0: memref<128x512xbf16, #tpu.memory_space<vmem>>, %arg1: memref<512x128xbf16, #tpu.memory_space<vmem>>, %arg2: memref<2x128xf32, #tpu.memory_space<vmem>>, %arg3: memref<2xf32, #tpu.memory_space<smem>>, %arg4: memref<128x128xf32, #tpu.memory_space<vmem>>) attributes {dimension_semantics = [], scalar_prefetch = 0 : i64, scratch_operands = 0 : i64, tpu.core_type = #tpu.core_type<tc>} {
    %c0 = arith.constant 0 : index
    %c0_0 = arith.constant 0 : index
    %0 = vector.load %arg0[%c0, %c0_0] : memref<128x512xbf16, #tpu.memory_space<vmem>>, vector<128x512xbf16>
    %c0_1 = arith.constant 0 : index
    %c0_2 = arith.constant 0 : index
    %1 = vector.load %arg1[%c0_1, %c0_2] : memref<512x128xbf16, #tpu.memory_space<vmem>>, vector<512x128xbf16>
    %cst = arith.constant dense<0.000000e+00> : vector<128x128xf32>
    %2 = tpu.matmul %0, %1, %cst {dimension_numbers = #tpu.dot_dimension_numbers<[1], [0], [0], [1], [0, 0, 1, 1], [], []>} : vector<128x512xbf16>, vector<512x128xbf16>, vector<128x128xf32> -> vector<128x128xf32>
    %cst_3 = arith.constant dense<0.000000e+00> : vector<128xf32>
    %3 = vector.multi_reduction <add>, %2, %cst_3 [0] : vector<128x128xf32> to vector<128xf32>
    %4 = vector.shape_cast %3 : vector<128xf32> to vector<1x128xf32>
    %cst_4 = arith.constant 7.812500e-03 : f32
    %5 = vector.broadcast %cst_4 : f32 to vector<1x128xf32>
    %6 = arith.mulf %4, %5 : vector<1x128xf32>
    %7 = arith.mulf %2, %2 : vector<128x128xf32>
    %cst_5 = arith.constant dense<0.000000e+00> : vector<128xf32>
    %8 = vector.multi_reduction <add>, %7, %cst_5 [0] : vector<128x128xf32> to vector<128xf32>
    %9 = vector.shape_cast %8 : vector<128xf32> to vector<1x128xf32>
    %cst_6 = arith.constant 7.812500e-03 : f32
    %10 = vector.broadcast %cst_6 : f32 to vector<1x128xf32>
    %11 = arith.mulf %9, %10 : vector<1x128xf32>
    %12 = arith.mulf %6, %6 : vector<1x128xf32>
    %13 = arith.subf %11, %12 : vector<1x128xf32>
    %cst_7 = arith.constant 0.000000e+00 : f32
    %14 = vector.broadcast %cst_7 : f32 to vector<1x128xf32>
    %15 = arith.maximumf %13, %14 : vector<1x128xf32>
    %c0_8 = arith.constant 0 : index
    %c0_9 = arith.constant 0 : index
    %16 = vector.load %arg2[%c0_8, %c0_9] : memref<2x128xf32, #tpu.memory_space<vmem>>, vector<2x128xf32>
    %17 = vector.extract_strided_slice %16 {offsets = [0, 0], sizes = [1, 128], strides = [1, 1]} : vector<2x128xf32> to vector<1x128xf32>
    %cst_10 = arith.constant 9.99999974E-6 : f32
    %18 = vector.broadcast %cst_10 : f32 to vector<1x128xf32>
    %19 = arith.addf %15, %18 : vector<1x128xf32>
    %20 = math.rsqrt %19 : vector<1x128xf32>
    %21 = arith.mulf %17, %20 : vector<1x128xf32>
    %22 = vector.broadcast %6 : vector<1x128xf32> to vector<128x128xf32>
    %23 = arith.subf %2, %22 : vector<128x128xf32>
    %24 = vector.broadcast %21 : vector<1x128xf32> to vector<128x128xf32>
    %25 = arith.mulf %23, %24 : vector<128x128xf32>
    %26 = vector.extract_strided_slice %16 {offsets = [1, 0], sizes = [1, 128], strides = [1, 1]} : vector<2x128xf32> to vector<1x128xf32>
    %27 = vector.broadcast %26 : vector<1x128xf32> to vector<128x128xf32>
    %28 = arith.addf %25, %27 : vector<128x128xf32>
    %cst_11 = arith.constant 0.000000e+00 : f32
    %29 = vector.broadcast %cst_11 : f32 to vector<128x128xf32>
    %30 = arith.maximumf %28, %29 : vector<128x128xf32>
    %31 = vector.shape_cast %30 : vector<128x128xf32> to vector<2x64x128xf32>
    %cst_12 = arith.constant dense<0.000000e+00> : vector<2x128xf32>
    %32 = vector.multi_reduction <add>, %31, %cst_12 [1] : vector<2x64x128xf32> to vector<2x128xf32>
    %33 = vector.shape_cast %32 : vector<2x128xf32> to vector<2x1x128xf32>
    %cst_13 = arith.constant 6.400000e+01 : f32
    %34 = vector.broadcast %cst_13 : f32 to vector<2x1x128xf32>
    %35 = arith.divf %33, %34 : vector<2x1x128xf32>
    %cst_14 = arith.constant dense<0xFF800000> : vector<2x128xf32>
    %36 = vector.multi_reduction <maximumf>, %31, %cst_14 [1] : vector<2x64x128xf32> to vector<2x128xf32>
    %37 = vector.shape_cast %36 : vector<2x128xf32> to vector<2x1x128xf32>
    %c0_15 = arith.constant 0 : index
    %38 = memref.load %arg3[%c0_15] : memref<2xf32, #tpu.memory_space<smem>>
    %c1 = arith.constant 1 : index
    %39 = memref.load %arg3[%c1] : memref<2xf32, #tpu.memory_space<smem>>
    %40 = vector.broadcast %38 : f32 to vector<2x1x128xf32>
    %41 = arith.mulf %40, %35 : vector<2x1x128xf32>
    %cst_16 = arith.constant 0.000000e+00 : f32
    %42 = vector.broadcast %cst_16 : f32 to vector<2x1x128xf32>
    %43 = arith.maximumf %41, %42 : vector<2x1x128xf32>
    %44 = vector.broadcast %39 : f32 to vector<2x1x128xf32>
    %45 = arith.mulf %44, %43 : vector<2x1x128xf32>
    %46 = vector.broadcast %38 : f32 to vector<2x1x128xf32>
    %47 = arith.mulf %46, %37 : vector<2x1x128xf32>
    %cst_17 = arith.constant 0.000000e+00 : f32
    %48 = vector.broadcast %cst_17 : f32 to vector<2x1x128xf32>
    %49 = arith.maximumf %47, %48 : vector<2x1x128xf32>
    %50 = vector.broadcast %39 : f32 to vector<2x1x128xf32>
    %51 = arith.mulf %50, %49 : vector<2x1x128xf32>
    %52 = arith.addf %45, %51 : vector<2x1x128xf32>
    %53 = arith.negf %52 : vector<2x1x128xf32>
    %54 = math.exp %53 : vector<2x1x128xf32>
    %cst_18 = arith.constant 1.000000e+00 : f32
    %55 = vector.broadcast %cst_18 : f32 to vector<2x1x128xf32>
    %56 = arith.addf %55, %54 : vector<2x1x128xf32>
    %57 = arith.divf %55, %56 : vector<2x1x128xf32>
    %58 = vector.broadcast %57 : vector<2x1x128xf32> to vector<2x64x128xf32>
    %59 = arith.mulf %31, %58 : vector<2x64x128xf32>
    %60 = vector.shape_cast %59 : vector<2x64x128xf32> to vector<128x128xf32>
    %c0_19 = arith.constant 0 : index
    %c0_20 = arith.constant 0 : index
    %61 = vector.load %arg4[%c0_19, %c0_20] : memref<128x128xf32, #tpu.memory_space<vmem>>, vector<128x128xf32>
    tpu.vector_store %arg4[%c0_19, %c0_20], %60 {strides = array<i32>} : memref<128x128xf32, #tpu.memory_space<vmem>>, vector<128x128xf32>,
    return
  }
}

module attributes {stable_mosaic.version = 11 : i64} {
  func.func @_fused_conv_kernel(%arg0: memref<128x256xbf16, #tpu.memory_space<vmem>>, %arg1: memref<256x128xbf16, #tpu.memory_space<vmem>>, %arg2: memref<2x128xf32, #tpu.memory_space<vmem>>, %arg3: memref<128x128xf32, #tpu.memory_space<vmem>>) attributes {dimension_semantics = [], scalar_prefetch = 0 : i64, scratch_operands = 0 : i64, tpu.core_type = #tpu.core_type<tc>} {
    %c0 = arith.constant 0 : index
    %c0_0 = arith.constant 0 : index
    %0 = vector.load %arg0[%c0, %c0_0] : memref<128x256xbf16, #tpu.memory_space<vmem>>, vector<128x256xbf16>
    %c0_1 = arith.constant 0 : index
    %c0_2 = arith.constant 0 : index
    %1 = vector.load %arg1[%c0_1, %c0_2] : memref<256x128xbf16, #tpu.memory_space<vmem>>, vector<256x128xbf16>
    %cst = arith.constant dense<0.000000e+00> : vector<128x128xf32>
    %2 = tpu.matmul %0, %1, %cst {dimension_numbers = #tpu.dot_dimension_numbers<[1], [0], [0], [1], [0, 0, 1, 1], [], []>} : vector<128x256xbf16>, vector<256x128xbf16>, vector<128x128xf32> -> vector<128x128xf32>
    %cst_3 = arith.constant dense<0.000000e+00> : vector<128xf32>
    %3 = vector.multi_reduction <add>, %2, %cst_3 [0] : vector<128x128xf32> to vector<128xf32>
    %4 = vector.shape_cast %3 : vector<128xf32> to vector<1x128xf32>
    %cst_4 = arith.constant 7.812500e-03 : f32
    %5 = vector.broadcast %cst_4 : f32 to vector<1x128xf32>
    %6 = arith.mulf %4, %5 : vector<1x128xf32>
    %7 = arith.mulf %2, %2 : vector<128x128xf32>
    %cst_5 = arith.constant dense<0.000000e+00> : vector<128xf32>
    %8 = vector.multi_reduction <add>, %7, %cst_5 [0] : vector<128x128xf32> to vector<128xf32>
    %9 = vector.shape_cast %8 : vector<128xf32> to vector<1x128xf32>
    %cst_6 = arith.constant 7.812500e-03 : f32
    %10 = vector.broadcast %cst_6 : f32 to vector<1x128xf32>
    %11 = arith.mulf %9, %10 : vector<1x128xf32>
    %12 = arith.mulf %6, %6 : vector<1x128xf32>
    %13 = arith.subf %11, %12 : vector<1x128xf32>
    %cst_7 = arith.constant 0.000000e+00 : f32
    %14 = vector.broadcast %cst_7 : f32 to vector<1x128xf32>
    %15 = arith.maximumf %13, %14 : vector<1x128xf32>
    %c0_8 = arith.constant 0 : index
    %c0_9 = arith.constant 0 : index
    %16 = vector.load %arg2[%c0_8, %c0_9] : memref<2x128xf32, #tpu.memory_space<vmem>>, vector<2x128xf32>
    %17 = vector.extract_strided_slice %16 {offsets = [0, 0], sizes = [1, 128], strides = [1, 1]} : vector<2x128xf32> to vector<1x128xf32>
    %cst_10 = arith.constant 9.99999974E-6 : f32
    %18 = vector.broadcast %cst_10 : f32 to vector<1x128xf32>
    %19 = arith.addf %15, %18 : vector<1x128xf32>
    %20 = math.rsqrt %19 : vector<1x128xf32>
    %21 = arith.mulf %17, %20 : vector<1x128xf32>
    %22 = vector.broadcast %6 : vector<1x128xf32> to vector<128x128xf32>
    %23 = arith.subf %2, %22 : vector<128x128xf32>
    %24 = vector.broadcast %21 : vector<1x128xf32> to vector<128x128xf32>
    %25 = arith.mulf %23, %24 : vector<128x128xf32>
    %26 = vector.extract_strided_slice %16 {offsets = [1, 0], sizes = [1, 128], strides = [1, 1]} : vector<2x128xf32> to vector<1x128xf32>
    %27 = vector.broadcast %26 : vector<1x128xf32> to vector<128x128xf32>
    %28 = arith.addf %25, %27 : vector<128x128xf32>
    %cst_11 = arith.constant 0.000000e+00 : f32
    %29 = vector.broadcast %cst_11 : f32 to vector<128x128xf32>
    %30 = arith.maximumf %28, %29 : vector<128x128xf32>
    %c0_12 = arith.constant 0 : index
    %c0_13 = arith.constant 0 : index
    %31 = vector.load %arg3[%c0_12, %c0_13] : memref<128x128xf32, #tpu.memory_space<vmem>>, vector<128x128xf32>
    tpu.vector_store %arg3[%c0_12, %c0_13], %30 {strides = array<i32>} : memref<128x128xf32, #tpu.memory_space<vmem>>, vector<128x128xf32>,
    return
  }
}

module attributes {stable_mosaic.version = 11 : i64} {
  func.func @_fused_conv_kernel(%arg0: memref<512x256xbf16, #tpu.memory_space<vmem>>, %arg1: memref<256x128xbf16, #tpu.memory_space<vmem>>, %arg2: memref<512x128xf32, #tpu.memory_space<vmem>>) attributes {dimension_semantics = [], scalar_prefetch = 0 : i64, scratch_operands = 0 : i64, tpu.core_type = #tpu.core_type<tc>} {
    %c0 = arith.constant 0 : index
    %c0_0 = arith.constant 0 : index
    %0 = vector.load %arg0[%c0, %c0_0] : memref<512x256xbf16, #tpu.memory_space<vmem>>, vector<512x256xbf16>
    %c0_1 = arith.constant 0 : index
    %c0_2 = arith.constant 0 : index
    %1 = vector.load %arg1[%c0_1, %c0_2] : memref<256x128xbf16, #tpu.memory_space<vmem>>, vector<256x128xbf16>
    %cst = arith.constant dense<0.000000e+00> : vector<512x128xf32>
    %2 = tpu.matmul %0, %1, %cst {dimension_numbers = #tpu.dot_dimension_numbers<[1], [0], [0], [1], [0, 0, 1, 1], [], []>} : vector<512x256xbf16>, vector<256x128xbf16>, vector<512x128xf32> -> vector<512x128xf32>
    %3 = arith.negf %2 : vector<512x128xf32>
    %4 = math.exp %3 : vector<512x128xf32>
    %cst_3 = arith.constant 1.000000e+00 : f32
    %5 = vector.broadcast %cst_3 : f32 to vector<512x128xf32>
    %6 = arith.addf %5, %4 : vector<512x128xf32>
    %7 = arith.divf %5, %6 : vector<512x128xf32>
    %c0_4 = arith.constant 0 : index
    %c0_5 = arith.constant 0 : index
    %8 = vector.load %arg2[%c0_4, %c0_5] : memref<512x128xf32, #tpu.memory_space<vmem>>, vector<512x128xf32>
    tpu.vector_store %arg2[%c0_4, %c0_5], %7 {strides = array<i32>} : memref<512x128xf32, #tpu.memory_space<vmem>>, vector<512x128xf32>,
    return
  }
}

</mosaic_0001>

<llo_original>
// kernel: generator_forward.10
$region0: #{generator_forward.10}
  #allocation0 [shape = 'u32[]', space=smem, size = 0x4, offset = 0x4, fixed_abs, tag = 'smem constant byte address 0x4 - core index']
  #allocation1 [shape = 'u32[144,128]{1,0:T(1,128)}', space=vmem, size = 0x12000, scoped, tag = 'internal scratch']
  %s0 = inlined_call_operand.vmem [shape: bf16[128,128], index: 0, kind: input, shape index: {}]
  %s1 = inlined_call_operand.vmem [shape: bf16[128,128], index: 1, kind: input, shape index: {}]
  %s2 = inlined_call_operand.vmem [shape: f32[2,128], index: 2, kind: input, shape index: {}]
  %s3 = inlined_call_operand.vmem [shape: f32[128,128], index: 3, kind: output, shape index: {}]
  %s4 = sld [smem:[#allocation0]]
  $region22: #{generator_forward.10} parent=0
    _
  %s6 = ssub.s32 1, %s4
  %s7 = scalar_select 0, %s6, %s4
  // Predicated region
  $region2: #{generator_forward.10} parent=0 // pred_check
    _
  $region3: #{generator_forward.10} parent=0 // pred_check_branch
    %9 = sbr.rel (0) target = $region5
  $region4: #{generator_forward.10} parent=0 // pred_region
    _
  $region5: #{generator_forward.10} parent=0 // pred_fallthru
    _
  // Predicated region
  $region6: #{generator_forward.10} parent=0 // pred_check
    _
  $region7: #{generator_forward.10} parent=0 // pred_check_branch
    %11 = sbr.rel (0) target = $region9
  $region8: #{generator_forward.10} parent=0 // pred_region
    _
  $region9: #{generator_forward.10} parent=0 // pred_fallthru
    _
  // Predicated region
  $region10: #{generator_forward.10} parent=0 // pred_check
    _
  $region11: #{generator_forward.10} parent=0 // pred_check_branch
    %13 = sbr.rel (0) target = $region13
  $region12: #{generator_forward.10} parent=0 // pred_region
    _
  $region13: #{generator_forward.10} parent=0 // pred_fallthru
    _
  %v15 = vld [vmem:[%s0] sm:$0xf]
  %v16 = vld [vmem:[%s0 + $0x4] sm:$0xf]
  %v17 = vld [vmem:[%s0 + $0x8] sm:$0xf]
  %v18 = vld [vmem:[%s0 + $0xc] sm:$0xf]
  %v19 = vld [vmem:[%s0 + $0x10] sm:$0xf]
  %v20 = vld [vmem:[%s0 + $0x14] sm:$0xf]
  %v21 = vld [vmem:[%s0 + $0x18] sm:$0xf]
  %v22 = vld [vmem:[%s0 + $0x1c] sm:$0xf]
  %v23 = vld [vmem:[%s0 + $0x20] sm:$0xf]
  %v24 = vld [vmem:[%s0 + $0x24] sm:$0xf]
  %v25 = vld [vmem:[%s0 + $0x28] sm:$0xf]
  %v26 = vld [vmem:[%s0 + $0x2c] sm:$0xf]
  %v27 = vld [vmem:[%s0 + $0x30] sm:$0xf]
  %v28 = vld [vmem:[%s0 + $0x34] sm:$0xf]
  %v29 = vld [vmem:[%s0 + $0x38] sm:$0xf]
  %v30 = vld [vmem:[%s0 + $0x3c] sm:$0xf]
  %v31 = vld [vmem:[%s1] sm:$0xf]
  %v32 = vld [vmem:[%s1 + $0x4] sm:$0xf]
  %v33 = vld [vmem:[%s1 + $0x8] sm:$0xf]
  %v34 = vld [vmem:[%s1 + $0xc] sm:$0xf]
  %v35 = vld [vmem:[%s1 + $0x10] sm:$0xf]
  %v36 = vld [vmem:[%s1 + $0x14] sm:$0xf]
  %v37 = vld [vmem:[%s1 + $0x18] sm:$0xf]
  %v38 = vld [vmem:[%s1 + $0x1c] sm:$0xf]
  %v39 = vld [vmem:[%s1 + $0x20] sm:$0xf]
  %v40 = vld [vmem:[%s1 + $0x24] sm:$0xf]
  %v41 = vld [vmem:[%s1 + $0x28] sm:$0xf]
  %v42 = vld [vmem:[%s1 + $0x2c] sm:$0xf]
  %v43 = vld [vmem:[%s1 + $0x30] sm:$0xf]
  %v44 = vld [vmem:[%s1 + $0x34] sm:$0xf]
  %v45 = vld [vmem:[%s1 + $0x38] sm:$0xf]
  %v46 = vld [vmem:[%s1 + $0x3c] sm:$0xf]
  %v63 = vunpack.c.l.b16 %v15
  %v64 = vunpack.c.l.b16 %v16
  %v65 = vunpack.c.l.b16 %v17
  %v66 = vunpack.c.l.b16 %v18
  %v67 = vunpack.c.l.b16 %v19
  %v68 = vunpack.c.l.b16 %v20
  %v69 = vunpack.c.l.b16 %v21
  %v70 = vunpack.c.l.b16 %v22
  %v71 = vunpack.c.l.b16 %v23
  %v72 = vunpack.c.l.b16 %v24
  %v73 = vunpack.c.l.b16 %v25
  %v74 = vunpack.c.l.b16 %v26
  %v75 = vunpack.c.l.b16 %v27
  %v76 = vunpack.c.l.b16 %v28
  %v77 = vunpack.c.l.b16 %v29
  %v78 = vunpack.c.l.b16 %v30
  %v79 = vpack.c.b16 %v64, %v63
  %v80 = vpack.c.b16 %v66, %v65
  %v81 = vpack.c.b16 %v68, %v67
  %v82 = vpack.c.b16 %v70, %v69
  %v83 = vpack.c.b16 %v72, %v71
  %v84 = vpack.c.b16 %v74, %v73
  %v85 = vpack.c.b16 %v76, %v75
  %v86 = vpack.c.b16 %v78, %v77
  %v111 = vunpack.c.l.b16 %v31
  %v112 = vunpack.c.l.b16 %v32
  %v113 = vunpack.c.l.b16 %v33
  %v114 = vunpack.c.l.b16 %v34
  %v115 = vunpack.c.l.b16 %v35
  %v116 = vunpack.c.l.b16 %v36
  %v117 = vunpack.c.l.b16 %v37
  %v118 = vunpack.c.l.b16 %v38
  %v119 = vunpack.c.l.b16 %v39
  %v120 = vunpack.c.l.b16 %v40
  %v121 = vunpack.c.l.b16 %v41
  %v122 = vunpack.c.l.b16 %v42
  %v123 = vunpack.c.l.b16 %v43
  %v124 = vunpack.c.l.b16 %v44
  %v125 = vunpack.c.l.b16 %v45
  %v126 = vunpack.c.l.b16 %v46
  %v127 = vpack.c.b16 %v112, %v111
  %v128 = vpack.c.b16 %v114, %v113
  %v129 = vpack.c.b16 %v116, %v115
  %v130 = vpack.c.b16 %v118, %v117
  %v131 = vpack.c.b16 %v120, %v119
  %v132 = vpack.c.b16 %v122, %v121
  %v133 = vpack.c.b16 %v124, %v123
  %v134 = vpack.c.b16 %v126, %v125
  %143 = vmatprep.subr.bf16.mxu0 0
  %144 = vmatpush1.bf16.msra.mxu0 %v134
  %145 = vmatprep.subr.bf16.mxu0 0
  %146 = vmatpush1.bf16.msra.mxu0 %v133
  %147 = vmatprep.subr.bf16.mxu0 0
  %148 = vmatpush1.bf16.msra.mxu0 %v132
  %149 = vmatprep.subr.bf16.mxu0 0
  %150 = vmatpush1.bf16.msra.mxu0 %v131
  %151 = vmatprep.subr.bf16.mxu0 0
  %152 = vmatpush1.bf16.msra.mxu0 %v130
  %153 = vmatprep.subr.bf16.mxu0 0
  %154 = vmatpush1.bf16.msra.mxu0 %v129
  %155 = vmatprep.subr.bf16.mxu0 0
  %156 = vmatpush1.bf16.msra.mxu0 %v128
  %157 = vmatprep.subr.bf16.mxu0 0
  %158 = vmatpush1.bf16.msra.mxu0 %v127
  %159 = vmatprep.subr.bf16.mxu0 0
  %160 = vmatpush2.bf16.msra.mxu0 0
  %161 = vmatprep.subr.bf16.mxu0 0
  %162 = vmatpush2.bf16.msra.mxu0 0
  %163 = vmatprep.subr.bf16.mxu0 0
  %164 = vmatpush2.bf16.msra.mxu0 0
  %165 = vmatprep.subr.bf16.mxu0 0
  %166 = vmatpush2.bf16.msra.mxu0 0
  %167 = vmatprep.subr.bf16.mxu0 0
  %168 = vmatpush2.bf16.msra.mxu0 0
  %169 = vmatprep.subr.bf16.mxu0 0
  %170 = vmatpush2.bf16.msra.mxu0 0
  %171 = vmatprep.subr.bf16.mxu0 0
  %172 = vmatpush2.bf16.msra.mxu0 0
  %173 = vmatprep.subr.bf16.mxu0 0
  %174 = vmatpush2.bf16.msra.mxu0 0
  %175 = vmatprep.mubr.bf16.mxu0 0
  %176 = vmatmul.mubr.bf16.gmra.mxu0 %v79
  %v177 = vpop.f32.mrf.mxu0
  %v178 = vadd.f32 0.0, %v177
  %v179 = vpop.f32.mrf.mxu0
  %v180 = vpop.f32.mrf.mxu0
  %v181 = vadd.f32 0.0, %v180
  %v182 = vpop.f32.mrf.mxu0
  %183 = vmatprep.mubr.bf16.mxu0 0
  %184 = vmatmul.mubr.bf16.gmra.mxu0 %v80
  %v185 = vpop.f32.mrf.mxu0
  %v186 = vadd.f32 0.0, %v185
  %v187 = vpop.f32.mrf.mxu0
  %v188 = vpop.f32.mrf.mxu0
  %v189 = vadd.f32 0.0, %v188
  %v190 = vpop.f32.mrf.mxu0
  %191 = vmatprep.mubr.bf16.mxu0 0
  %192 = vmatmul.mubr.bf16.gmra.mxu0 %v81
  %v193 = vpop.f32.mrf.mxu0
  %v194 = vadd.f32 0.0, %v193
  %v195 = vpop.f32.mrf.mxu0
  %v196 = vpop.f32.mrf.mxu0
  %v197 = vadd.f32 0.0, %v196
  %v198 = vpop.f32.mrf.mxu0
  %199 = vmatprep.mubr.bf16.mxu0 0
  %200 = vmatmul.mubr.bf16.gmra.mxu0 %v82
  %v201 = vpop.f32.mrf.mxu0
  %v202 = vadd.f32 0.0, %v201
  %v203 = vpop.f32.mrf.mxu0
  %v204 = vpop.f32.mrf.mxu0
  %v205 = vadd.f32 0.0, %v204
  %v206 = vpop.f32.mrf.mxu0
  %207 = vmatprep.mubr.bf16.mxu0 0
  %208 = vmatmul.mubr.bf16.gmra.mxu0 %v83
  %v209 = vpop.f32.mrf.mxu0
  %v210 = vadd.f32 0.0, %v209
  %v211 = vpop.f32.mrf.mxu0
  %v212 = vpop.f32.mrf.mxu0
  %v213 = vadd.f32 0.0, %v212
  %v214 = vpop.f32.mrf.mxu0
  %215 = vmatprep.mubr.bf16.mxu0 0
  %216 = vmatmul.mubr.bf16.gmra.mxu0 %v84
  %v217 = vpop.f32.mrf.mxu0
  %v218 = vadd.f32 0.0, %v217
  %v219 = vpop.f32.mrf.mxu0
  %v220 = vpop.f32.mrf.mxu0
  %v221 = vadd.f32 0.0, %v220
  %v222 = vpop.f32.mrf.mxu0
  %223 = vmatprep.mubr.bf16.mxu0 0
  %224 = vmatmul.mubr.bf16.gmra.mxu0 %v85
  %v225 = vpop.f32.mrf.mxu0
  %v226 = vadd.f32 0.0, %v225
  %v227 = vpop.f32.mrf.mxu0
  %v228 = vpop.f32.mrf.mxu0
  %v229 = vadd.f32 0.0, %v228
  %v230 = vpop.f32.mrf.mxu0
  %231 = vmatprep.mubr.bf16.mxu0 0
  %232 = vmatmul.mubr.bf16.gmra.mxu0 %v86
  %v233 = vpop.f32.mrf.mxu0
  %v234 = vadd.f32 0.0, %v233
  %v235 = vpop.f32.mrf.mxu0
  %v236 = vpop.f32.mrf.mxu0
  %v237 = vadd.f32 0.0, %v236
  %v238 = vpop.f32.mrf.mxu0
  %239 = vdwg.mxu0
  %v240 = vadd.f32 %v178, %v181
  %v241 = vadd.f32 %v240, %v186
  %v242 = vadd.f32 %v241, %v189
  %v243 = vadd.f32 %v242, %v194
  %v244 = vadd.f32 %v243, %v197
  %v245 = vadd.f32 %v244, %v202
  %v246 = vadd.f32 %v245, %v205
  %v247 = vadd.f32 %v246, %v210
  %v248 = vadd.f32 %v247, %v213
  %v249 = vadd.f32 %v248, %v218
  %v250 = vadd.f32 %v249, %v221
  %v251 = vadd.f32 %v250, %v226
  %v252 = vadd.f32 %v251, %v229
  %v253 = vadd.f32 %v252, %v234
  %v254 = vadd.f32 %v253, %v237
  %v255 = vrot.slane %v254, 4
  %v256 = vadd.f32 %v254, %v255
  %v257 = vrot.slane %v256, 2
  %v258 = vadd.f32 %v256, %v257
  %v259 = vrot.slane %v258, 1
  %v260 = vadd.f32 %v258, %v259
  %v261 = vmul.f32 %v260, 0.0078125
  %v262 = vmul.f32 %v178, %v178
  %v263 = vmul.f32 %v181, %v181
  %v264 = vmul.f32 %v186, %v186
  %v265 = vmul.f32 %v189, %v189
  %v266 = vmul.f32 %v194, %v194
  %v267 = vmul.f32 %v197, %v197
  %v268 = vmul.f32 %v202, %v202
  %v269 = vmul.f32 %v205, %v205
  %v270 = vmul.f32 %v210, %v210
  %v271 = vmul.f32 %v213, %v213
  %v272 = vmul.f32 %v218, %v218
  %v273 = vmul.f32 %v221, %v221
  %v274 = vmul.f32 %v226, %v226
  %v275 = vmul.f32 %v229, %v229
  %v276 = vmul.f32 %v234, %v234
  %v277 = vmul.f32 %v237, %v237
  %v278 = vadd.f32 %v262, %v263
  %v279 = vadd.f32 %v278, %v264
  %v280 = vadd.f32 %v279, %v265
  %v281 = vadd.f32 %v280, %v266
  %v282 = vadd.f32 %v281, %v267
  %v283 = vadd.f32 %v282, %v268
  %v284 = vadd.f32 %v283, %v269
  %v285 = vadd.f32 %v284, %v270
  %v286 = vadd.f32 %v285, %v271
  %v287 = vadd.f32 %v286, %v272
  %v288 = vadd.f32 %v287, %v273
  %v289 = vadd.f32 %v288, %v274
  %v290 = vadd.f32 %v289, %v275
  %v291 = vadd.f32 %v290, %v276
  %v292 = vadd.f32 %v291, %v277
  %v293 = vrot.slane %v292, 4
  %v294 = vadd.f32 %v292, %v293
  %v295 = vrot.slane %v294, 2
  %v296 = vadd.f32 %v294, %v295
  %v297 = vrot.slane %v296, 1
  %v298 = vadd.f32 %v296, %v297
  %v299 = vmul.f32 %v298, 0.0078125
  %v300 = vmul.f32 %v261, %v261
  %v301 = vsub.f32 %v299, %v300
  %v302 = vmax.f32 %v301, 0.0
  %v303 = vld [vmem:[%s2] sm:$0x3]
  %v304 = vadd.f32 %v302, 1e-05
  %v305 = vrsqrt.pop %v304
  %v306 = vmul.f32 %v303, %v305
  %v307 = vsub.f32 %v178, %v261
  %v308 = vsub.f32 %v181, %v261
  %v309 = vsub.f32 %v186, %v261
  %v310 = vsub.f32 %v189, %v261
  %v311 = vsub.f32 %v194, %v261
  %v312 = vsub.f32 %v197, %v261
  %v313 = vsub.f32 %v202, %v261
  %v314 = vsub.f32 %v205, %v261
  %v315 = vsub.f32 %v210, %v261
  %v316 = vsub.f32 %v213, %v261
  %v317 = vsub.f32 %v218, %v261
  %v318 = vsub.f32 %v221, %v261
  %v319 = vsub.f32 %v226, %v261
  %v320 = vsub.f32 %v229, %v261
  %v321 = vsub.f32 %v234, %v261
  %v322 = vsub.f32 %v237, %v261
  %v323 = vlaneseq
  %v324 = vshrl.u32 %v323, 7
  %v325 = vsub.s32 0, %v324
  %v326 = vrot.slane %v306, %v325
  %v327 = vmul.f32 %v307, %v326
  %v328 = vmul.f32 %v308, %v326
  %v329 = vmul.f32 %v309, %v326
  %v330 = vmul.f32 %v310, %v326
  %v331 = vmul.f32 %v311, %v326
  %v332 = vmul.f32 %v312, %v326
  %v333 = vmul.f32 %v313, %v326
  %v334 = vmul.f32 %v314, %v326
  %v335 = vmul.f32 %v315, %v326
  %v336 = vmul.f32 %v316, %v326
  %v337 = vmul.f32 %v317, %v326
  %v338 = vmul.f32 %v318, %v326
  %v339 = vmul.f32 %v319, %v326
  %v340 = vmul.f32 %v320, %v326
  %v341 = vmul.f32 %v321, %v326
  %v342 = vmul.f32 %v322, %v326
  %v343 = vlaneseq
  %v344 = vshrl.u32 %v343, 7
  %v345 = vsub.s32 1, %v344
  %v346 = vrot.slane %v303, %v345
  %v347 = vadd.f32 %v327, %v346
  %v348 = vadd.f32 %v328, %v346
  %v349 = vadd.f32 %v329, %v346
  %v350 = vadd.f32 %v330, %v346
  %v351 = vadd.f32 %v331, %v346
  %v352 = vadd.f32 %v332, %v346
  %v353 = vadd.f32 %v333, %v346
  %v354 = vadd.f32 %v334, %v346
  %v355 = vadd.f32 %v335, %v346
  %v356 = vadd.f32 %v336, %v346
  %v357 = vadd.f32 %v337, %v346
  %v358 = vadd.f32 %v338, %v346
  %v359 = vadd.f32 %v339, %v346
  %v360 = vadd.f32 %v340, %v346
  %v361 = vadd.f32 %v341, %v346
  %v362 = vadd.f32 %v342, %v346
  %v363 = vmax.f32 %v347, 0.0
  %v364 = vmax.f32 %v348, 0.0
  %v365 = vmax.f32 %v349, 0.0
  %v366 = vmax.f32 %v350, 0.0
  %v367 = vmax.f32 %v351, 0.0
  %v368 = vmax.f32 %v352, 0.0
  %v369 = vmax.f32 %v353, 0.0
  %v370 = vmax.f32 %v354, 0.0
  %v371 = vmax.f32 %v355, 0.0
  %v372 = vmax.f32 %v356, 0.0
  %v373 = vmax.f32 %v357, 0.0
  %v374 = vmax.f32 %v358, 0.0
  %v375 = vmax.f32 %v359, 0.0
  %v376 = vmax.f32 %v360, 0.0
  %v377 = vmax.f32 %v361, 0.0
  %v378 = vmax.f32 %v362, 0.0
  %379 = vst [vmem:[%s3] sm:$0xff] %v363
  %380 = vst [vmem:[%s3 + $0x8] sm:$0xff] %v364
  %381 = vst [vmem:[%s3 + $0x10] sm:$0xff] %v365
  %382 = vst [vmem:[%s3 + $0x18] sm:$0xff] %v366
  %383 = vst [vmem:[%s3 + $0x20] sm:$0xff] %v367
  %384 = vst [vmem:[%s3 + $0x28] sm:$0xff] %v368
  %385 = vst [vmem:[%s3 + $0x30] sm:$0xff] %v369
  %386 = vst [vmem:[%s3 + $0x38] sm:$0xff] %v370
  %387 = vst [vmem:[%s3 + $0x40] sm:$0xff] %v371
  %388 = vst [vmem:[%s3 + $0x48] sm:$0xff] %v372
  %389 = vst [vmem:[%s3 + $0x50] sm:$0xff] %v373
  %390 = vst [vmem:[%s3 + $0x58] sm:$0xff] %v374
  %391 = vst [vmem:[%s3 + $0x60] sm:$0xff] %v375
  %392 = vst [vmem:[%s3 + $0x68] sm:$0xff] %v376
  %393 = vst [vmem:[%s3 + $0x70] sm:$0xff] %v377
  %394 = vst [vmem:[%s3 + $0x78] sm:$0xff] %v378
  // Predicated region
  $region14: #{generator_forward.10} parent=0 // pred_check
    _
  $region15: #{generator_forward.10} parent=0 // pred_check_branch
    %396 = sbr.rel (0) target = $region17
  $region16: #{generator_forward.10} parent=0 // pred_region
    _
  $region17: #{generator_forward.10} parent=0 // pred_fallthru
    _
  // Predicated region
  $region18: #{generator_forward.10} parent=0 // pred_check
    _
  $region19: #{generator_forward.10} parent=0 // pred_check_branch
    %398 = sbr.rel (0) target = $region21
  $region20: #{generator_forward.10} parent=0 // pred_region
    _
  $region21: #{generator_forward.10} parent=0 // pred_fallthru
    _

// kernel: generator_forward.11
$region0: #{generator_forward.11}
  #allocation0 [shape = 'u32[]', space=smem, size = 0x4, offset = 0x4, fixed_abs, tag = 'smem constant byte address 0x4 - core index']
  #allocation1 [shape = 'u32[144,128]{1,0:T(1,128)}', space=vmem, size = 0x12000, scoped, tag = 'internal scratch']
  %s0 = inlined_call_operand.vmem [shape: bf16[128,128], index: 0, kind: input, shape index: {}]
  %s1 = inlined_call_operand.vmem [shape: bf16[128,128], index: 1, kind: input, shape index: {}]
  %s2 = inlined_call_operand.vmem [shape: f32[2,128], index: 2, kind: input, shape index: {}]
  %s3 = inlined_call_operand.vmem [shape: f32[128,128], index: 3, kind: output, shape index: {}]
  %s4 = sld [smem:[#allocation0]]
  $region22: #{generator_forward.11} parent=0
    _
  %s6 = ssub.s32 1, %s4
  %s7 = scalar_select 0, %s6, %s4
  // Predicated region
  $region2: #{generator_forward.11} parent=0 // pred_check
    _
  $region3: #{generator_forward.11} parent=0 // pred_check_branch
    %9 = sbr.rel (0) target = $region5
  $region4: #{generator_forward.11} parent=0 // pred_region
    _
  $region5: #{generator_forward.11} parent=0 // pred_fallthru
    _
  // Predicated region
  $region6: #{generator_forward.11} parent=0 // pred_check
    _
  $region7: #{generator_forward.11} parent=0 // pred_check_branch
    %11 = sbr.rel (0) target = $region9
  $region8: #{generator_forward.11} parent=0 // pred_region
    _
  $region9: #{generator_forward.11} parent=0 // pred_fallthru
    _
  // Predicated region
  $region10: #{generator_forward.11} parent=0 // pred_check
    _
  $region11: #{generator_forward.11} parent=0 // pred_check_branch
    %13 = sbr.rel (0) target = $region13
  $region12: #{generator_forward.11} parent=0 // pred_region
    _
  $region13: #{generator_forward.11} parent=0 // pred_fallthru
    _
  %v15 = vld [vmem:[%s0] sm:$0xf]
  %v16 = vld [vmem:[%s0 + $0x4] sm:$0xf]
  %v17 = vld [vmem:[%s0 + $0x8] sm:$0xf]
  %v18 = vld [vmem:[%s0 + $0xc] sm:$0xf]
  %v19 = vld [vmem:[%s0 + $0x10] sm:$0xf]
  %v20 = vld [vmem:[%s0 + $0x14] sm:$0xf]
  %v21 = vld [vmem:[%s0 + $0x18] sm:$0xf]
  %v22 = vld [vmem:[%s0 + $0x1c] sm:$0xf]
  %v23 = vld [vmem:[%s0 + $0x20] sm:$0xf]
  %v24 = vld [vmem:[%s0 + $0x24] sm:$0xf]
  %v25 = vld [vmem:[%s0 + $0x28] sm:$0xf]
  %v26 = vld [vmem:[%s0 + $0x2c] sm:$0xf]
  %v27 = vld [vmem:[%s0 + $0x30] sm:$0xf]
  %v28 = vld [vmem:[%s0 + $0x34] sm:$0xf]
  %v29 = vld [vmem:[%s0 + $0x38] sm:$0xf]
  %v30 = vld [vmem:[%s0 + $0x3c] sm:$0xf]
  %v31 = vld [vmem:[%s1] sm:$0xf]
  %v32 = vld [vmem:[%s1 + $0x4] sm:$0xf]
  %v33 = vld [vmem:[%s1 + $0x8] sm:$0xf]
  %v34 = vld [vmem:[%s1 + $0xc] sm:$0xf]
  %v35 = vld [vmem:[%s1 + $0x10] sm:$0xf]
  %v36 = vld [vmem:[%s1 + $0x14] sm:$0xf]
  %v37 = vld [vmem:[%s1 + $0x18] sm:$0xf]
  %v38 = vld [vmem:[%s1 + $0x1c] sm:$0xf]
  %v39 = vld [vmem:[%s1 + $0x20] sm:$0xf]
  %v40 = vld [vmem:[%s1 + $0x24] sm:$0xf]
  %v41 = vld [vmem:[%s1 + $0x28] sm:$0xf]
  %v42 = vld [vmem:[%s1 + $0x2c] sm:$0xf]
  %v43 = vld [vmem:[%s1 + $0x30] sm:$0xf]
  %v44 = vld [vmem:[%s1 + $0x34] sm:$0xf]
  %v45 = vld [vmem:[%s1 + $0x38] sm:$0xf]
  %v46 = vld [vmem:[%s1 + $0x3c] sm:$0xf]
  %v63 = vunpack.c.l.b16 %v15
  %v64 = vunpack.c.l.b16 %v16
  %v65 = vunpack.c.l.b16 %v17
  %v66 = vunpack.c.l.b16 %v18
  %v67 = vunpack.c.l.b16 %v19
  %v68 = vunpack.c.l.b16 %v20
  %v69 = vunpack.c.l.b16 %v21
  %v70 = vunpack.c.l.b16 %v22
  %v71 = vunpack.c.l.b16 %v23
  %v72 = vunpack.c.l.b16 %v24
  %v73 = vunpack.c.l.b16 %v25
  %v74 = vunpack.c.l.b16 %v26
  %v75 = vunpack.c.l.b16 %v27
  %v76 = vunpack.c.l.b16 %v28
  %v77 = vunpack.c.l.b16 %v29
  %v78 = vunpack.c.l.b16 %v30
  %v79 = vpack.c.b16 %v64, %v63
  %v80 = vpack.c.b16 %v66, %v65
  %v81 = vpack.c.b16 %v68, %v67
  %v82 = vpack.c.b16 %v70, %v69
  %v83 = vpack.c.b16 %v72, %v71
  %v84 = vpack.c.b16 %v74, %v73
  %v85 = vpack.c.b16 %v76, %v75
  %v86 = vpack.c.b16 %v78, %v77
  %v111 = vunpack.c.l.b16 %v31
  %v112 = vunpack.c.l.b16 %v32
  %v113 = vunpack.c.l.b16 %v33
  %v114 = vunpack.c.l.b16 %v34
  %v115 = vunpack.c.l.b16 %v35
  %v116 = vunpack.c.l.b16 %v36
  %v117 = vunpack.c.l.b16 %v37
  %v118 = vunpack.c.l.b16 %v38
  %v119 = vunpack.c.l.b16 %v39
  %v120 = vunpack.c.l.b16 %v40
  %v121 = vunpack.c.l.b16 %v41
  %v122 = vunpack.c.l.b16 %v42
  %v123 = vunpack.c.l.b16 %v43
  %v124 = vunpack.c.l.b16 %v44
  %v125 = vunpack.c.l.b16 %v45
  %v126 = vunpack.c.l.b16 %v46
  %v127 = vpack.c.b16 %v112, %v111
  %v128 = vpack.c.b16 %v114, %v113
  %v129 = vpack.c.b16 %v116, %v115
  %v130 = vpack.c.b16 %v118, %v117
  %v131 = vpack.c.b16 %v120, %v119
  %v132 = vpack.c.b16 %v122, %v121
  %v133 = vpack.c.b16 %v124, %v123
  %v134 = vpack.c.b16 %v126, %v125
  %143 = vmatprep.subr.bf16.mxu0 0
  %144 = vmatpush1.bf16.msra.mxu0 %v134
  %145 = vmatprep.subr.bf16.mxu0 0
  %146 = vmatpush1.bf16.msra.mxu0 %v133
  %147 = vmatprep.subr.bf16.mxu0 0
  %148 = vmatpush1.bf16.msra.mxu0 %v132
  %149 = vmatprep.subr.bf16.mxu0 0
  %150 = vmatpush1.bf16.msra.mxu0 %v131
  %151 = vmatprep.subr.bf16.mxu0 0
  %152 = vmatpush1.bf16.msra.mxu0 %v130
  %153 = vmatprep.subr.bf16.mxu0 0
  %154 = vmatpush1.bf16.msra.mxu0 %v129
  %155 = vmatprep.subr.bf16.mxu0 0
  %156 = vmatpush1.bf16.msra.mxu0 %v128
  %157 = vmatprep.subr.bf16.mxu0 0
  %158 = vmatpush1.bf16.msra.mxu0 %v127
  %159 = vmatprep.subr.bf16.mxu0 0
  %160 = vmatpush2.bf16.msra.mxu0 0
  %161 = vmatprep.subr.bf16.mxu0 0
  %162 = vmatpush2.bf16.msra.mxu0 0
  %163 = vmatprep.subr.bf16.mxu0 0
  %164 = vmatpush2.bf16.msra.mxu0 0
  %165 = vmatprep.subr.bf16.mxu0 0
  %166 = vmatpush2.bf16.msra.mxu0 0
  %167 = vmatprep.subr.bf16.mxu0 0
  %168 = vmatpush2.bf16.msra.mxu0 0
  %169 = vmatprep.subr.bf16.mxu0 0
  %170 = vmatpush2.bf16.msra.mxu0 0
  %171 = vmatprep.subr.bf16.mxu0 0
  %172 = vmatpush2.bf16.msra.mxu0 0
  %173 = vmatprep.subr.bf16.mxu0 0
  %174 = vmatpush2.bf16.msra.mxu0 0
  %175 = vmatprep.mubr.bf16.mxu0 0
  %176 = vmatmul.mubr.bf16.gmra.mxu0 %v79
  %v177 = vpop.f32.mrf.mxu0
  %v178 = vadd.f32 0.0, %v177
  %v179 = vpop.f32.mrf.mxu0
  %v180 = vpop.f32.mrf.mxu0
  %v181 = vadd.f32 0.0, %v180
  %v182 = vpop.f32.mrf.mxu0
  %183 = vmatprep.mubr.bf16.mxu0 0
  %184 = vmatmul.mubr.bf16.gmra.mxu0 %v80
  %v185 = vpop.f32.mrf.mxu0
  %v186 = vadd.f32 0.0, %v185
  %v187 = vpop.f32.mrf.mxu0
  %v188 = vpop.f32.mrf.mxu0
  %v189 = vadd.f32 0.0, %v188
  %v190 = vpop.f32.mrf.mxu0
  %191 = vmatprep.mubr.bf16.mxu0 0
  %192 = vmatmul.mubr.bf16.gmra.mxu0 %v81
  %v193 = vpop.f32.mrf.mxu0
  %v194 = vadd.f32 0.0, %v193
  %v195 = vpop.f32.mrf.mxu0
  %v196 = vpop.f32.mrf.mxu0
  %v197 = vadd.f32 0.0, %v196
  %v198 = vpop.f32.mrf.mxu0
  %199 = vmatprep.mubr.bf16.mxu0 0
  %200 = vmatmul.mubr.bf16.gmra.mxu0 %v82
  %v201 = vpop.f32.mrf.mxu0
  %v202 = vadd.f32 0.0, %v201
  %v203 = vpop.f32.mrf.mxu0
  %v204 = vpop.f32.mrf.mxu0
  %v205 = vadd.f32 0.0, %v204
  %v206 = vpop.f32.mrf.mxu0
  %207 = vmatprep.mubr.bf16.mxu0 0
  %208 = vmatmul.mubr.bf16.gmra.mxu0 %v83
  %v209 = vpop.f32.mrf.mxu0
  %v210 = vadd.f32 0.0, %v209
  %v211 = vpop.f32.mrf.mxu0
  %v212 = vpop.f32.mrf.mxu0
  %v213 = vadd.f32 0.0, %v212
  %v214 = vpop.f32.mrf.mxu0
  %215 = vmatprep.mubr.bf16.mxu0 0
  %216 = vmatmul.mubr.bf16.gmra.mxu0 %v84
  %v217 = vpop.f32.mrf.mxu0
  %v218 = vadd.f32 0.0, %v217
  %v219 = vpop.f32.mrf.mxu0
  %v220 = vpop.f32.mrf.mxu0
  %v221 = vadd.f32 0.0, %v220
  %v222 = vpop.f32.mrf.mxu0
  %223 = vmatprep.mubr.bf16.mxu0 0
  %224 = vmatmul.mubr.bf16.gmra.mxu0 %v85
  %v225 = vpop.f32.mrf.mxu0
  %v226 = vadd.f32 0.0, %v225
  %v227 = vpop.f32.mrf.mxu0
  %v228 = vpop.f32.mrf.mxu0
  %v229 = vadd.f32 0.0, %v228
  %v230 = vpop.f32.mrf.mxu0
  %231 = vmatprep.mubr.bf16.mxu0 0
  %232 = vmatmul.mubr.bf16.gmra.mxu0 %v86
  %v233 = vpop.f32.mrf.mxu0
  %v234 = vadd.f32 0.0, %v233
  %v235 = vpop.f32.mrf.mxu0
  %v236 = vpop.f32.mrf.mxu0
  %v237 = vadd.f32 0.0, %v236
  %v238 = vpop.f32.mrf.mxu0
  %239 = vdwg.mxu0
  %v240 = vadd.f32 %v178, %v181
  %v241 = vadd.f32 %v240, %v186
  %v242 = vadd.f32 %v241, %v189
  %v243 = vadd.f32 %v242, %v194
  %v244 = vadd.f32 %v243, %v197
  %v245 = vadd.f32 %v244, %v202
  %v246 = vadd.f32 %v245, %v205
  %v247 = vadd.f32 %v246, %v210
  %v248 = vadd.f32 %v247, %v213
  %v249 = vadd.f32 %v248, %v218
  %v250 = vadd.f32 %v249, %v221
  %v251 = vadd.f32 %v250, %v226
  %v252 = vadd.f32 %v251, %v229
  %v253 = vadd.f32 %v252, %v234
  %v254 = vadd.f32 %v253, %v237
  %v255 = vrot.slane %v254, 4
  %v256 = vadd.f32 %v254, %v255
  %v257 = vrot.slane %v256, 2
  %v258 = vadd.f32 %v256, %v257
  %v259 = vrot.slane %v258, 1
  %v260 = vadd.f32 %v258, %v259
  %v261 = vmul.f32 %v260, 0.0078125
  %v262 = vmul.f32 %v178, %v178
  %v263 = vmul.f32 %v181, %v181
  %v264 = vmul.f32 %v186, %v186
  %v265 = vmul.f32 %v189, %v189
  %v266 = vmul.f32 %v194, %v194
  %v267 = vmul.f32 %v197, %v197
  %v268 = vmul.f32 %v202, %v202
  %v269 = vmul.f32 %v205, %v205
  %v270 = vmul.f32 %v210, %v210
  %v271 = vmul.f32 %v213, %v213
  %v272 = vmul.f32 %v218, %v218
  %v273 = vmul.f32 %v221, %v221
  %v274 = vmul.f32 %v226, %v226
  %v275 = vmul.f32 %v229, %v229
  %v276 = vmul.f32 %v234, %v234
  %v277 = vmul.f32 %v237, %v237
  %v278 = vadd.f32 %v262, %v263
  %v279 = vadd.f32 %v278, %v264
  %v280 = vadd.f32 %v279, %v265
  %v281 = vadd.f32 %v280, %v266
  %v282 = vadd.f32 %v281, %v267
  %v283 = vadd.f32 %v282, %v268
  %v284 = vadd.f32 %v283, %v269
  %v285 = vadd.f32 %v284, %v270
  %v286 = vadd.f32 %v285, %v271
  %v287 = vadd.f32 %v286, %v272
  %v288 = vadd.f32 %v287, %v273
  %v289 = vadd.f32 %v288, %v274
  %v290 = vadd.f32 %v289, %v275
  %v291 = vadd.f32 %v290, %v276
  %v292 = vadd.f32 %v291, %v277
  %v293 = vrot.slane %v292, 4
  %v294 = vadd.f32 %v292, %v293
  %v295 = vrot.slane %v294, 2
  %v296 = vadd.f32 %v294, %v295
  %v297 = vrot.slane %v296, 1
  %v298 = vadd.f32 %v296, %v297
  %v299 = vmul.f32 %v298, 0.0078125
  %v300 = vmul.f32 %v261, %v261
  %v301 = vsub.f32 %v299, %v300
  %v302 = vmax.f32 %v301, 0.0
  %v303 = vld [vmem:[%s2] sm:$0x3]
  %v304 = vadd.f32 %v302, 1e-05
  %v305 = vrsqrt.pop %v304
  %v306 = vmul.f32 %v303, %v305
  %v307 = vsub.f32 %v178, %v261
  %v308 = vsub.f32 %v181, %v261
  %v309 = vsub.f32 %v186, %v261
  %v310 = vsub.f32 %v189, %v261
  %v311 = vsub.f32 %v194, %v261
  %v312 = vsub.f32 %v197, %v261
  %v313 = vsub.f32 %v202, %v261
  %v314 = vsub.f32 %v205, %v261
  %v315 = vsub.f32 %v210, %v261
  %v316 = vsub.f32 %v213, %v261
  %v317 = vsub.f32 %v218, %v261
  %v318 = vsub.f32 %v221, %v261
  %v319 = vsub.f32 %v226, %v261
  %v320 = vsub.f32 %v229, %v261
  %v321 = vsub.f32 %v234, %v261
  %v322 = vsub.f32 %v237, %v261
  %v323 = vlaneseq
  %v324 = vshrl.u32 %v323, 7
  %v325 = vsub.s32 0, %v324
  %v326 = vrot.slane %v306, %v325
  %v327 = vmul.f32 %v307, %v326
  %v328 = vmul.f32 %v308, %v326
  %v329 = vmul.f32 %v309, %v326
  %v330 = vmul.f32 %v310, %v326
  %v331 = vmul.f32 %v311, %v326
  %v332 = vmul.f32 %v312, %v326
  %v333 = vmul.f32 %v313, %v326
  %v334 = vmul.f32 %v314, %v326
  %v335 = vmul.f32 %v315, %v326
  %v336 = vmul.f32 %v316, %v326
  %v337 = vmul.f32 %v317, %v326
  %v338 = vmul.f32 %v318, %v326
  %v339 = vmul.f32 %v319, %v326
  %v340 = vmul.f32 %v320, %v326
  %v341 = vmul.f32 %v321, %v326
  %v342 = vmul.f32 %v322, %v326
  %v343 = vlaneseq
  %v344 = vshrl.u32 %v343, 7
  %v345 = vsub.s32 1, %v344
  %v346 = vrot.slane %v303, %v345
  %v347 = vadd.f32 %v327, %v346
  %v348 = vadd.f32 %v328, %v346
  %v349 = vadd.f32 %v329, %v346
  %v350 = vadd.f32 %v330, %v346
  %v351 = vadd.f32 %v331, %v346
  %v352 = vadd.f32 %v332, %v346
  %v353 = vadd.f32 %v333, %v346
  %v354 = vadd.f32 %v334, %v346
  %v355 = vadd.f32 %v335, %v346
  %v356 = vadd.f32 %v336, %v346
  %v357 = vadd.f32 %v337, %v346
  %v358 = vadd.f32 %v338, %v346
  %v359 = vadd.f32 %v339, %v346
  %v360 = vadd.f32 %v340, %v346
  %v361 = vadd.f32 %v341, %v346
  %v362 = vadd.f32 %v342, %v346
  %vm363 = vcmp.gt.f32.partialorder %v347, 0.0
  %vm364 = vcmp.gt.f32.partialorder %v348, 0.0
  %vm365 = vcmp.gt.f32.partialorder %v349, 0.0
  %vm366 = vcmp.gt.f32.partialorder %v350, 0.0
  %vm367 = vcmp.gt.f32.partialorder %v351, 0.0
  %vm368 = vcmp.gt.f32.partialorder %v352, 0.0
  %vm369 = vcmp.gt.f32.partialorder %v353, 0.0
  %vm370 = vcmp.gt.f32.partialorder %v354, 0.0
  %vm371 = vcmp.gt.f32.partialorder %v355, 0.0
  %vm372 = vcmp.gt.f32.partialorder %v356, 0.0
  %vm373 = vcmp.gt.f32.partialorder %v357, 0.0
  %vm374 = vcmp.gt.f32.partialorder %v358, 0.0
  %vm375 = vcmp.gt.f32.partialorder %v359, 0.0
  %vm376 = vcmp.gt.f32.partialorder %v360, 0.0
  %vm377 = vcmp.gt.f32.partialorder %v361, 0.0
  %vm378 = vcmp.gt.f32.partialorder %v362, 0.0
  %v379 = vmul.f32 %v347, 0.2
  %v380 = vmul.f32 %v348, 0.2
  %v381 = vmul.f32 %v349, 0.2
  %v382 = vmul.f32 %v350, 0.2
  %v383 = vmul.f32 %v351, 0.2
  %v384 = vmul.f32 %v352, 0.2
  %v385 = vmul.f32 %v353, 0.2
  %v386 = vmul.f32 %v354, 0.2
  %v387 = vmul.f32 %v355, 0.2
  %v388 = vmul.f32 %v356, 0.2
  %v389 = vmul.f32 %v357, 0.2
  %v390 = vmul.f32 %v358, 0.2
  %v391 = vmul.f32 %v359, 0.2
  %v392 = vmul.f32 %v360, 0.2
  %v393 = vmul.f32 %v361, 0.2
  %v394 = vmul.f32 %v362, 0.2
  %v395 = vsel %vm363, %v347, %v379
  %v396 = vsel %vm364, %v348, %v380
  %v397 = vsel %vm365, %v349, %v381
  %v398 = vsel %vm366, %v350, %v382
  %v399 = vsel %vm367, %v351, %v383
  %v400 = vsel %vm368, %v352, %v384
  %v401 = vsel %vm369, %v353, %v385
  %v402 = vsel %vm370, %v354, %v386
  %v403 = vsel %vm371, %v355, %v387
  %v404 = vsel %vm372, %v356, %v388
  %v405 = vsel %vm373, %v357, %v389
  %v406 = vsel %vm374, %v358, %v390
  %v407 = vsel %vm375, %v359, %v391
  %v408 = vsel %vm376, %v360, %v392
  %v409 = vsel %vm377, %v361, %v393
  %v410 = vsel %vm378, %v362, %v394
  %411 = vst [vmem:[%s3] sm:$0xff] %v395
  %412 = vst [vmem:[%s3 + $0x8] sm:$0xff] %v396
  %413 = vst [vmem:[%s3 + $0x10] sm:$0xff] %v397
  %414 = vst [vmem:[%s3 + $0x18] sm:$0xff] %v398
  %415 = vst [vmem:[%s3 + $0x20] sm:$0xff] %v399
  %416 = vst [vmem:[%s3 + $0x28] sm:$0xff] %v400
  %417 = vst [vmem:[%s3 + $0x30] sm:$0xff] %v401
  %418 = vst [vmem:[%s3 + $0x38] sm:$0xff] %v402
  %419 = vst [vmem:[%s3 + $0x40] sm:$0xff] %v403
  %420 = vst [vmem:[%s3 + $0x48] sm:$0xff] %v404
  %421 = vst [vmem:[%s3 + $0x50] sm:$0xff] %v405
  %422 = vst [vmem:[%s3 + $0x58] sm:$0xff] %v406
  %423 = vst [vmem:[%s3 + $0x60] sm:$0xff] %v407
  %424 = vst [vmem:[%s3 + $0x68] sm:$0xff] %v408
  %425 = vst [vmem:[%s3 + $0x70] sm:$0xff] %v409
  %426 = vst [vmem:[%s3 + $0x78] sm:$0xff] %v410
  // Predicated region
  $region14: #{generator_forward.11} parent=0 // pred_check
    _
  $region15: #{generator_forward.11} parent=0 // pred_check_branch
    %428 = sbr.rel (0) target = $region17
  $region16: #{generator_forward.11} parent=0 // pred_region
    _
  $region17: #{generator_forward.11} parent=0 // pred_fallthru
    _
  // Predicated region
  $region18: #{generator_forward.11} parent=0 // pred_check
    _
  $region19: #{generator_forward.11} parent=0 // pred_check_branch
    %430 = sbr.rel (0) target = $region21
  $region20: #{generator_forward.11} parent=0 // pred_region
    _
  $region21: #{generator_forward.11} parent=0 // pred_fallthru
    _

// kernel: generator_forward.12
$region0: #{generator_forward.12}
  #allocation0 [shape = 'u32[]', space=smem, size = 0x4, offset = 0x4, fixed_abs, tag = 'smem constant byte address 0x4 - core index']
  #allocation1 [shape = 'u32[144,128]{1,0:T(1,128)}', space=vmem, size = 0x12000, scoped, tag = 'internal scratch']
  %s0 = inlined_call_operand.vmem [shape: bf16[32,128], index: 0, kind: input, shape index: {}]
  %s1 = inlined_call_operand.vmem [shape: bf16[128,128], index: 1, kind: input, shape index: {}]
  %s2 = inlined_call_operand.vmem [shape: f32[2,128], index: 2, kind: input, shape index: {}]
  %s3 = inlined_call_operand.vmem [shape: f32[32,128], index: 3, kind: output, shape index: {}]
  %s4 = sld [smem:[#allocation0]]
  $region22: #{generator_forward.12} parent=0
    _
  %s6 = ssub.s32 1, %s4
  %s7 = scalar_select 0, %s6, %s4
  // Predicated region
  $region2: #{generator_forward.12} parent=0 // pred_check
    _
  $region3: #{generator_forward.12} parent=0 // pred_check_branch
    %9 = sbr.rel (0) target = $region5
  $region4: #{generator_forward.12} parent=0 // pred_region
    _
  $region5: #{generator_forward.12} parent=0 // pred_fallthru
    _
  // Predicated region
  $region6: #{generator_forward.12} parent=0 // pred_check
    _
  $region7: #{generator_forward.12} parent=0 // pred_check_branch
    %11 = sbr.rel (0) target = $region9
  $region8: #{generator_forward.12} parent=0 // pred_region
    _
  $region9: #{generator_forward.12} parent=0 // pred_fallthru
    _
  // Predicated region
  $region10: #{generator_forward.12} parent=0 // pred_check
    _
  $region11: #{generator_forward.12} parent=0 // pred_check_branch
    %13 = sbr.rel (0) target = $region13
  $region12: #{generator_forward.12} parent=0 // pred_region
    _
  $region13: #{generator_forward.12} parent=0 // pred_fallthru
    _
  %v15 = vld [vmem:[%s0] sm:$0xf]
  %v16 = vld [vmem:[%s0 + $0x4] sm:$0xf]
  %v17 = vld [vmem:[%s0 + $0x8] sm:$0xf]
  %v18 = vld [vmem:[%s0 + $0xc] sm:$0xf]
  %v19 = vld [vmem:[%s1] sm:$0xf]
  %v20 = vld [vmem:[%s1 + $0x4] sm:$0xf]
  %v21 = vld [vmem:[%s1 + $0x8] sm:$0xf]
  %v22 = vld [vmem:[%s1 + $0xc] sm:$0xf]
  %v23 = vld [vmem:[%s1 + $0x10] sm:$0xf]
  %v24 = vld [vmem:[%s1 + $0x14] sm:$0xf]
  %v25 = vld [vmem:[%s1 + $0x18] sm:$0xf]
  %v26 = vld [vmem:[%s1 + $0x1c] sm:$0xf]
  %v27 = vld [vmem:[%s1 + $0x20] sm:$0xf]
  %v28 = vld [vmem:[%s1 + $0x24] sm:$0xf]
  %v29 = vld [vmem:[%s1 + $0x28] sm:$0xf]
  %v30 = vld [vmem:[%s1 + $0x2c] sm:$0xf]
  %v31 = vld [vmem:[%s1 + $0x30] sm:$0xf]
  %v32 = vld [vmem:[%s1 + $0x34] sm:$0xf]
  %v33 = vld [vmem:[%s1 + $0x38] sm:$0xf]
  %v34 = vld [vmem:[%s1 + $0x3c] sm:$0xf]
  %v39 = vunpack.c.l.b16 %v15
  %v40 = vunpack.c.l.b16 %v16
  %v41 = vunpack.c.l.b16 %v17
  %v42 = vunpack.c.l.b16 %v18
  %v43 = vpack.c.b16 %v40, %v39
  %v44 = vpack.c.b16 %v42, %v41
  %v63 = vunpack.c.l.b16 %v19
  %v64 = vunpack.c.l.b16 %v20
  %v65 = vunpack.c.l.b16 %v21
  %v66 = vunpack.c.l.b16 %v22
  %v67 = vunpack.c.l.b16 %v23
  %v68 = vunpack.c.l.b16 %v24
  %v69 = vunpack.c.l.b16 %v25
  %v70 = vunpack.c.l.b16 %v26
  %v71 = vunpack.c.l.b16 %v27
  %v72 = vunpack.c.l.b16 %v28
  %v73 = vunpack.c.l.b16 %v29
  %v74 = vunpack.c.l.b16 %v30
  %v75 = vunpack.c.l.b16 %v31
  %v76 = vunpack.c.l.b16 %v32
  %v77 = vunpack.c.l.b16 %v33
  %v78 = vunpack.c.l.b16 %v34
  %v79 = vpack.c.b16 %v64, %v63
  %v80 = vpack.c.b16 %v66, %v65
  %v81 = vpack.c.b16 %v68, %v67
  %v82 = vpack.c.b16 %v70, %v69
  %v83 = vpack.c.b16 %v72, %v71
  %v84 = vpack.c.b16 %v74, %v73
  %v85 = vpack.c.b16 %v76, %v75
  %v86 = vpack.c.b16 %v78, %v77
  %95 = vmatprep.subr.bf16.mxu0 0
  %96 = vmatpush1.bf16.msra.mxu0 %v86
  %97 = vmatprep.subr.bf16.mxu0 0
  %98 = vmatpush1.bf16.msra.mxu0 %v85
  %99 = vmatprep.subr.bf16.mxu0 0
  %100 = vmatpush1.bf16.msra.mxu0 %v84
  %101 = vmatprep.subr.bf16.mxu0 0
  %102 = vmatpush1.bf16.msra.mxu0 %v83
  %103 = vmatprep.subr.bf16.mxu0 0
  %104 = vmatpush1.bf16.msra.mxu0 %v82
  %105 = vmatprep.subr.bf16.mxu0 0
  %106 = vmatpush1.bf16.msra.mxu0 %v81
  %107 = vmatprep.subr.bf16.mxu0 0
  %108 = vmatpush1.bf16.msra.mxu0 %v80
  %109 = vmatprep.subr.bf16.mxu0 0
  %110 = vmatpush1.bf16.msra.mxu0 %v79
  %111 = vmatprep.subr.bf16.mxu0 0
  %112 = vmatpush2.bf16.msra.mxu0 0
  %113 = vmatprep.subr.bf16.mxu0 0
  %114 = vmatpush2.bf16.msra.mxu0 0
  %115 = vmatprep.subr.bf16.mxu0 0
  %116 = vmatpush2.bf16.msra.mxu0 0
  %117 = vmatprep.subr.bf16.mxu0 0
  %118 = vmatpush2.bf16.msra.mxu0 0
  %119 = vmatprep.subr.bf16.mxu0 0
  %120 = vmatpush2.bf16.msra.mxu0 0
  %121 = vmatprep.subr.bf16.mxu0 0
  %122 = vmatpush2.bf16.msra.mxu0 0
  %123 = vmatprep.subr.bf16.mxu0 0
  %124 = vmatpush2.bf16.msra.mxu0 0
  %125 = vmatprep.subr.bf16.mxu0 0
  %126 = vmatpush2.bf16.msra.mxu0 0
  %127 = vmatprep.mubr.bf16.mxu0 0
  %128 = vmatmul.mubr.bf16.gmra.mxu0 %v43
  %v129 = vpop.f32.mrf.mxu0
  %v130 = vadd.f32 0.0, %v129
  %v131 = vpop.f32.mrf.mxu0
  %v132 = vpop.f32.mrf.mxu0
  %v133 = vadd.f32 0.0, %v132
  %v134 = vpop.f32.mrf.mxu0
  %135 = vmatprep.mubr.bf16.mxu0 0
  %136 = vmatmul.mubr.bf16.gmra.mxu0 %v44
  %v137 = vpop.f32.mrf.mxu0
  %v138 = vadd.f32 0.0, %v137
  %v139 = vpop.f32.mrf.mxu0
  %v140 = vpop.f32.mrf.mxu0
  %v141 = vadd.f32 0.0, %v140
  %v142 = vpop.f32.mrf.mxu0
  %143 = vdwg.mxu0
  %v144 = vadd.f32 %v130, %v133
  %v145 = vadd.f32 %v144, %v138
  %v146 = vadd.f32 %v145, %v141
  %v147 = vrot.slane %v146, 4
  %v148 = vadd.f32 %v146, %v147
  %v149 = vrot.slane %v148, 2
  %v150 = vadd.f32 %v148, %v149
  %v151 = vrot.slane %v150, 1
  %v152 = vadd.f32 %v150, %v151
  %v153 = vmul.f32 %v152, 0.03125
  %v154 = vmul.f32 %v130, %v130
  %v155 = vmul.f32 %v133, %v133
  %v156 = vmul.f32 %v138, %v138
  %v157 = vmul.f32 %v141, %v141
  %v158 = vadd.f32 %v154, %v155
  %v159 = vadd.f32 %v158, %v156
  %v160 = vadd.f32 %v159, %v157
  %v161 = vrot.slane %v160, 4
  %v162 = vadd.f32 %v160, %v161
  %v163 = vrot.slane %v162, 2
  %v164 = vadd.f32 %v162, %v163
  %v165 = vrot.slane %v164, 1
  %v166 = vadd.f32 %v164, %v165
  %v167 = vmul.f32 %v166, 0.03125
  %v168 = vmul.f32 %v153, %v153
  %v169 = vsub.f32 %v167, %v168
  %v170 = vmax.f32 %v169, 0.0
  %v171 = vld [vmem:[%s2] sm:$0x3]
  %v172 = vadd.f32 %v170, 1e-05
  %v173 = vrsqrt.pop %v172
  %v174 = vmul.f32 %v171, %v173
  %v175 = vsub.f32 %v130, %v153
  %v176 = vsub.f32 %v133, %v153
  %v177 = vsub.f32 %v138, %v153
  %v178 = vsub.f32 %v141, %v153
  %v179 = vlaneseq
  %v180 = vshrl.u32 %v179, 7
  %v181 = vsub.s32 0, %v180
  %v182 = vrot.slane %v174, %v181
  %v183 = vmul.f32 %v175, %v182
  %v184 = vmul.f32 %v176, %v182
  %v185 = vmul.f32 %v177, %v182
  %v186 = vmul.f32 %v178, %v182
  %v187 = vlaneseq
  %v188 = vshrl.u32 %v187, 7
  %v189 = vsub.s32 1, %v188
  %v190 = vrot.slane %v171, %v189
  %v191 = vadd.f32 %v183, %v190
  %v192 = vadd.f32 %v184, %v190
  %v193 = vadd.f32 %v185, %v190
  %v194 = vadd.f32 %v186, %v190
  %vm195 = vcmp.gt.f32.partialorder %v191, 0.0
  %vm196 = vcmp.gt.f32.partialorder %v192, 0.0
  %vm197 = vcmp.gt.f32.partialorder %v193, 0.0
  %vm198 = vcmp.gt.f32.partialorder %v194, 0.0
  %v199 = vmul.f32 %v191, 0.2
  %v200 = vmul.f32 %v192, 0.2
  %v201 = vmul.f32 %v193, 0.2
  %v202 = vmul.f32 %v194, 0.2
  %v203 = vsel %vm195, %v191, %v199
  %v204 = vsel %vm196, %v192, %v200
  %v205 = vsel %vm197, %v193, %v201
  %v206 = vsel %vm198, %v194, %v202
  %207 = vst [vmem:[%s3] sm:$0xff] %v203
  %208 = vst [vmem:[%s3 + $0x8] sm:$0xff] %v204
  %209 = vst [vmem:[%s3 + $0x10] sm:$0xff] %v205
  %210 = vst [vmem:[%s3 + $0x18] sm:$0xff] %v206
  // Predicated region
  $region14: #{generator_forward.12} parent=0 // pred_check
    _
  $region15: #{generator_forward.12} parent=0 // pred_check_branch
    %212 = sbr.rel (0) target = $region17
  $region16: #{generator_forward.12} parent=0 // pred_region
    _
  $region17: #{generator_forward.12} parent=0 // pred_fallthru
    _
  // Predicated region
  $region18: #{generator_forward.12} parent=0 // pred_check
    _
  $region19: #{generator_forward.12} parent=0 // pred_check_branch
    %214 = sbr.rel (0) target = $region21
  $region20: #{generator_forward.12} parent=0 // pred_region
    _
  $region21: #{generator_forward.12} parent=0 // pred_fallthru
    _

// kernel: generator_forward.13
$region0: #{generator_forward.13}
  #allocation0 [shape = 'u32[]', space=smem, size = 0x4, offset = 0x4, fixed_abs, tag = 'smem constant byte address 0x4 - core index']
  #allocation1 [shape = 'u32[144,128]{1,0:T(1,128)}', space=vmem, size = 0x12000, scoped, tag = 'internal scratch']
  %s0 = inlined_call_operand.vmem [shape: bf16[8,256], index: 0, kind: input, shape index: {}]
  %s1 = inlined_call_operand.vmem [shape: bf16[256,128], index: 1, kind: input, shape index: {}]
  %s2 = inlined_call_operand.vmem [shape: f32[2,128], index: 2, kind: input, shape index: {}]
  %s3 = inlined_call_operand.vmem [shape: f32[8,128], index: 3, kind: output, shape index: {}]
  %s4 = sld [smem:[#allocation0]]
  $region22: #{generator_forward.13} parent=0
    _
  %s6 = ssub.s32 1, %s4
  %s7 = scalar_select 0, %s6, %s4
  // Predicated region
  $region2: #{generator_forward.13} parent=0 // pred_check
    _
  $region3: #{generator_forward.13} parent=0 // pred_check_branch
    %9 = sbr.rel (0) target = $region5
  $region4: #{generator_forward.13} parent=0 // pred_region
    _
  $region5: #{generator_forward.13} parent=0 // pred_fallthru
    _
  // Predicated region
  $region6: #{generator_forward.13} parent=0 // pred_check
    _
  $region7: #{generator_forward.13} parent=0 // pred_check_branch
    %11 = sbr.rel (0) target = $region9
  $region8: #{generator_forward.13} parent=0 // pred_region
    _
  $region9: #{generator_forward.13} parent=0 // pred_fallthru
    _
  // Predicated region
  $region10: #{generator_forward.13} parent=0 // pred_check
    _
  $region11: #{generator_forward.13} parent=0 // pred_check_branch
    %13 = sbr.rel (0) target = $region13
  $region12: #{generator_forward.13} parent=0 // pred_region
    _
  $region13: #{generator_forward.13} parent=0 // pred_fallthru
    _
  %v15 = vld [vmem:[%s0] sm:$0xff]
  %v16 = vld [vmem:[%s1] sm:$0xf]
  %v17 = vld [vmem:[%s1 + $0x4] sm:$0xf]
  %v18 = vld [vmem:[%s1 + $0x8] sm:$0xf]
  %v19 = vld [vmem:[%s1 + $0xc] sm:$0xf]
  %v20 = vld [vmem:[%s1 + $0x10] sm:$0xf]
  %v21 = vld [vmem:[%s1 + $0x14] sm:$0xf]
  %v22 = vld [vmem:[%s1 + $0x18] sm:$0xf]
  %v23 = vld [vmem:[%s1 + $0x1c] sm:$0xf]
  %v24 = vld [vmem:[%s1 + $0x20] sm:$0xf]
  %v25 = vld [vmem:[%s1 + $0x24] sm:$0xf]
  %v26 = vld [vmem:[%s1 + $0x28] sm:$0xf]
  %v27 = vld [vmem:[%s1 + $0x2c] sm:$0xf]
  %v28 = vld [vmem:[%s1 + $0x30] sm:$0xf]
  %v29 = vld [vmem:[%s1 + $0x34] sm:$0xf]
  %v30 = vld [vmem:[%s1 + $0x38] sm:$0xf]
  %v31 = vld [vmem:[%s1 + $0x3c] sm:$0xf]
  %v32 = vld [vmem:[%s1 + $0x40] sm:$0xf]
  %v33 = vld [vmem:[%s1 + $0x44] sm:$0xf]
  %v34 = vld [vmem:[%s1 + $0x48] sm:$0xf]
  %v35 = vld [vmem:[%s1 + $0x4c] sm:$0xf]
  %v36 = vld [vmem:[%s1 + $0x50] sm:$0xf]
  %v37 = vld [vmem:[%s1 + $0x54] sm:$0xf]
  %v38 = vld [vmem:[%s1 + $0x58] sm:$0xf]
  %v39 = vld [vmem:[%s1 + $0x5c] sm:$0xf]
  %v40 = vld [vmem:[%s1 + $0x60] sm:$0xf]
  %v41 = vld [vmem:[%s1 + $0x64] sm:$0xf]
  %v42 = vld [vmem:[%s1 + $0x68] sm:$0xf]
  %v43 = vld [vmem:[%s1 + $0x6c] sm:$0xf]
  %v44 = vld [vmem:[%s1 + $0x70] sm:$0xf]
  %v45 = vld [vmem:[%s1 + $0x74] sm:$0xf]
  %v46 = vld [vmem:[%s1 + $0x78] sm:$0xf]
  %v47 = vld [vmem:[%s1 + $0x7c] sm:$0xf]
  %v49 = vunpack.c.l.b16 %v15
  %v50 = vunpack.c.h.b16 %v15
  %v51 = vpack.c.b16 %v49, %v49
  %v52 = vpack.c.b16 %v50, %v50
  %v87 = vunpack.c.l.b16 %v16
  %v88 = vunpack.c.l.b16 %v17
  %v89 = vunpack.c.l.b16 %v18
  %v90 = vunpack.c.l.b16 %v19
  %v91 = vunpack.c.l.b16 %v20
  %v92 = vunpack.c.l.b16 %v21
  %v93 = vunpack.c.l.b16 %v22
  %v94 = vunpack.c.l.b16 %v23
  %v95 = vunpack.c.l.b16 %v24
  %v96 = vunpack.c.l.b16 %v25
  %v97 = vunpack.c.l.b16 %v26
  %v98 = vunpack.c.l.b16 %v27
  %v99 = vunpack.c.l.b16 %v28
  %v100 = vunpack.c.l.b16 %v29
  %v101 = vunpack.c.l.b16 %v30
  %v102 = vunpack.c.l.b16 %v31
  %v103 = vunpack.c.l.b16 %v32
  %v104 = vunpack.c.l.b16 %v33
  %v105 = vunpack.c.l.b16 %v34
  %v106 = vunpack.c.l.b16 %v35
  %v107 = vunpack.c.l.b16 %v36
  %v108 = vunpack.c.l.b16 %v37
  %v109 = vunpack.c.l.b16 %v38
  %v110 = vunpack.c.l.b16 %v39
  %v111 = vunpack.c.l.b16 %v40
  %v112 = vunpack.c.l.b16 %v41
  %v113 = vunpack.c.l.b16 %v42
  %v114 = vunpack.c.l.b16 %v43
  %v115 = vunpack.c.l.b16 %v44
  %v116 = vunpack.c.l.b16 %v45
  %v117 = vunpack.c.l.b16 %v46
  %v118 = vunpack.c.l.b16 %v47
  %v119 = vpack.c.b16 %v88, %v87
  %v120 = vpack.c.b16 %v90, %v89
  %v121 = vpack.c.b16 %v92, %v91
  %v122 = vpack.c.b16 %v94, %v93
  %v123 = vpack.c.b16 %v96, %v95
  %v124 = vpack.c.b16 %v98, %v97
  %v125 = vpack.c.b16 %v100, %v99
  %v126 = vpack.c.b16 %v102, %v101
  %v127 = vpack.c.b16 %v104, %v103
  %v128 = vpack.c.b16 %v106, %v105
  %v129 = vpack.c.b16 %v108, %v107
  %v130 = vpack.c.b16 %v110, %v109
  %v131 = vpack.c.b16 %v112, %v111
  %v132 = vpack.c.b16 %v114, %v113
  %v133 = vpack.c.b16 %v116, %v115
  %v134 = vpack.c.b16 %v118, %v117
  %151 = vmatprep.subr.bf16.mxu0 0
  %152 = vmatpush1.bf16.msra.mxu0 %v126
  %153 = vmatprep.subr.bf16.mxu0 0
  %154 = vmatpush1.bf16.msra.mxu0 %v125
  %155 = vmatprep.subr.bf16.mxu0 0
  %156 = vmatpush1.bf16.msra.mxu0 %v124
  %157 = vmatprep.subr.bf16.mxu0 0
  %158 = vmatpush1.bf16.msra.mxu0 %v123
  %159 = vmatprep.subr.bf16.mxu0 0
  %160 = vmatpush1.bf16.msra.mxu0 %v122
  %161 = vmatprep.subr.bf16.mxu0 0
  %162 = vmatpush1.bf16.msra.mxu0 %v121
  %163 = vmatprep.subr.bf16.mxu0 0
  %164 = vmatpush1.bf16.msra.mxu0 %v120
  %165 = vmatprep.subr.bf16.mxu0 0
  %166 = vmatpush1.bf16.msra.mxu0 %v119
  %167 = vmatprep.subr.bf16.mxu0 0
  %168 = vmatpush2.bf16.msra.mxu0 %v134
  %169 = vmatprep.subr.bf16.mxu0 0
  %170 = vmatpush2.bf16.msra.mxu0 %v133
  %171 = vmatprep.subr.bf16.mxu0 0
  %172 = vmatpush2.bf16.msra.mxu0 %v132
  %173 = vmatprep.subr.bf16.mxu0 0
  %174 = vmatpush2.bf16.msra.mxu0 %v131
  %175 = vmatprep.subr.bf16.mxu0 0
  %176 = vmatpush2.bf16.msra.mxu0 %v130
  %177 = vmatprep.subr.bf16.mxu0 0
  %178 = vmatpush2.bf16.msra.mxu0 %v129
  %179 = vmatprep.subr.bf16.mxu0 0
  %180 = vmatpush2.bf16.msra.mxu0 %v128
  %181 = vmatprep.subr.bf16.mxu0 0
  %182 = vmatpush2.bf16.msra.mxu0 %v127
  %183 = vmatprep.mubr.bf16.mxu0 %v52
  %184 = vmatmul.mubr.bf16.gmra.mxu0 %v51
  %v185 = vpop.f32.mrf.mxu0
  %v186 = vadd.f32 0.0, %v185
  %v187 = vpop.f32.mrf.mxu0
  %v188 = vpop.f32.mrf.mxu0
  %v189 = vpop.f32.mrf.mxu0
  %190 = vdwg.mxu0
  %v191 = vrot.slane %v186, 4
  %v192 = vadd.f32 %v186, %v191
  %v193 = vrot.slane %v192, 2
  %v194 = vadd.f32 %v192, %v193
  %v195 = vrot.slane %v194, 1
  %v196 = vadd.f32 %v194, %v195
  %v197 = vmul.f32 %v196, 0.125
  %v198 = vmul.f32 %v186, %v186
  %v199 = vrot.slane %v198, 4
  %v200 = vadd.f32 %v198, %v199
  %v201 = vrot.slane %v200, 2
  %v202 = vadd.f32 %v200, %v201
  %v203 = vrot.slane %v202, 1
  %v204 = vadd.f32 %v202, %v203
  %v205 = vmul.f32 %v204, 0.125
  %v206 = vmul.f32 %v197, %v197
  %v207 = vsub.f32 %v205, %v206
  %v208 = vmax.f32 %v207, 0.0
  %v209 = vld [vmem:[%s2] sm:$0x3]
  %v210 = vadd.f32 %v208, 1e-05
  %v211 = vrsqrt.pop %v210
  %v212 = vmul.f32 %v209, %v211
  %v213 = vsub.f32 %v186, %v197
  %v214 = vlaneseq
  %v215 = vshrl.u32 %v214, 7
  %v216 = vsub.s32 0, %v215
  %v217 = vrot.slane %v212, %v216
  %v218 = vmul.f32 %v213, %v217
  %v219 = vlaneseq
  %v220 = vshrl.u32 %v219, 7
  %v221 = vsub.s32 1, %v220
  %v222 = vrot.slane %v209, %v221
  %v223 = vadd.f32 %v218, %v222
  %vm224 = vcmp.gt.f32.partialorder %v223, 0.0
  %v225 = vmul.f32 %v223, 0.2
  %v226 = vsel %vm224, %v223, %v225
  %227 = vst [vmem:[%s3] sm:$0xff] %v226
  // Predicated region
  $region14: #{generator_forward.13} parent=0 // pred_check
    _
  $region15: #{generator_forward.13} parent=0 // pred_check_branch
    %229 = sbr.rel (0) target = $region17
  $region16: #{generator_forward.13} parent=0 // pred_region
    _
  $region17: #{generator_forward.13} parent=0 // pred_fallthru
    _
  // Predicated region
  $region18: #{generator_forward.13} parent=0 // pred_check
    _
  $region19: #{generator_forward.13} parent=0 // pred_check_branch
    %231 = sbr.rel (0) target = $region21
  $region20: #{generator_forward.13} parent=0 // pred_region
    _
  $region21: #{generator_forward.13} parent=0 // pred_fallthru
    _

// kernel: generator_forward.14
$region0: #{generator_forward.14}
  #allocation0 [shape = 'u32[]', space=smem, size = 0x4, offset = 0x4, fixed_abs, tag = 'smem constant byte address 0x4 - core index']
  #allocation1 [shape = 'u32[144,128]{1,0:T(1,128)}', space=vmem, size = 0x12000, scoped, tag = 'internal scratch']
  %s0 = inlined_call_operand.vmem [shape: bf16[8,384], index: 0, kind: input, shape index: {}]
  %s1 = inlined_call_operand.vmem [shape: bf16[384,128], index: 1, kind: input, shape index: {}]
  %s2 = inlined_call_operand.vmem [shape: f32[8,128], index: 2, kind: output, shape index: {}]
  %s3 = sld [smem:[#allocation0]]
  $region18: #{generator_forward.14} parent=0
    _
  %s5 = ssub.s32 1, %s3
  %s6 = scalar_select 0, %s5, %s3
  // Predicated region
  $region2: #{generator_forward.14} parent=0 // pred_check
    _
  $region3: #{generator_forward.14} parent=0 // pred_check_branch
    %8 = sbr.rel (0) target = $region5
  $region4: #{generator_forward.14} parent=0 // pred_region
    _
  $region5: #{generator_forward.14} parent=0 // pred_fallthru
    _
  // Predicated region
  $region6: #{generator_forward.14} parent=0 // pred_check
    _
  $region7: #{generator_forward.14} parent=0 // pred_check_branch
    %10 = sbr.rel (0) target = $region9
  $region8: #{generator_forward.14} parent=0 // pred_region
    _
  $region9: #{generator_forward.14} parent=0 // pred_fallthru
    _
  %v12 = vld [vmem:[%s0] sm:$0xff]
  %v13 = vld [vmem:[%s0 + $0x8] sm:$0xf]
  %v14 = vld [vmem:[%s1] sm:$0xf]
  %v15 = vld [vmem:[%s1 + $0x4] sm:$0xf]
  %v16 = vld [vmem:[%s1 + $0x8] sm:$0xf]
  %v17 = vld [vmem:[%s1 + $0xc] sm:$0xf]
  %v18 = vld [vmem:[%s1 + $0x10] sm:$0xf]
  %v19 = vld [vmem:[%s1 + $0x14] sm:$0xf]
  %v20 = vld [vmem:[%s1 + $0x18] sm:$0xf]
  %v21 = vld [vmem:[%s1 + $0x1c] sm:$0xf]
  %v22 = vld [vmem:[%s1 + $0x20] sm:$0xf]
  %v23 = vld [vmem:[%s1 + $0x24] sm:$0xf]
  %v24 = vld [vmem:[%s1 + $0x28] sm:$0xf]
  %v25 = vld [vmem:[%s1 + $0x2c] sm:$0xf]
  %v26 = vld [vmem:[%s1 + $0x30] sm:$0xf]
  %v27 = vld [vmem:[%s1 + $0x34] sm:$0xf]
  %v28 = vld [vmem:[%s1 + $0x38] sm:$0xf]
  %v29 = vld [vmem:[%s1 + $0x3c] sm:$0xf]
  %v30 = vld [vmem:[%s1 + $0x40] sm:$0xf]
  %v31 = vld [vmem:[%s1 + $0x44] sm:$0xf]
  %v32 = vld [vmem:[%s1 + $0x48] sm:$0xf]
  %v33 = vld [vmem:[%s1 + $0x4c] sm:$0xf]
  %v34 = vld [vmem:[%s1 + $0x50] sm:$0xf]
  %v35 = vld [vmem:[%s1 + $0x54] sm:$0xf]
  %v36 = vld [vmem:[%s1 + $0x58] sm:$0xf]
  %v37 = vld [vmem:[%s1 + $0x5c] sm:$0xf]
  %v38 = vld [vmem:[%s1 + $0x60] sm:$0xf]
  %v39 = vld [vmem:[%s1 + $0x64] sm:$0xf]
  %v40 = vld [vmem:[%s1 + $0x68] sm:$0xf]
  %v41 = vld [vmem:[%s1 + $0x6c] sm:$0xf]
  %v42 = vld [vmem:[%s1 + $0x70] sm:$0xf]
  %v43 = vld [vmem:[%s1 + $0x74] sm:$0xf]
  %v44 = vld [vmem:[%s1 + $0x78] sm:$0xf]
  %v45 = vld [vmem:[%s1 + $0x7c] sm:$0xf]
  %v46 = vld [vmem:[%s1 + $0x80] sm:$0xf]
  %v47 = vld [vmem:[%s1 + $0x84] sm:$0xf]
  %v48 = vld [vmem:[%s1 + $0x88] sm:$0xf]
  %v49 = vld [vmem:[%s1 + $0x8c] sm:$0xf]
  %v50 = vld [vmem:[%s1 + $0x90] sm:$0xf]
  %v51 = vld [vmem:[%s1 + $0x94] sm:$0xf]
  %v52 = vld [vmem:[%s1 + $0x98] sm:$0xf]
  %v53 = vld [vmem:[%s1 + $0x9c] sm:$0xf]
  %v54 = vld [vmem:[%s1 + $0xa0] sm:$0xf]
  %v55 = vld [vmem:[%s1 + $0xa4] sm:$0xf]
  %v56 = vld [vmem:[%s1 + $0xa8] sm:$0xf]
  %v57 = vld [vmem:[%s1 + $0xac] sm:$0xf]
  %v58 = vld [vmem:[%s1 + $0xb0] sm:$0xf]
  %v59 = vld [vmem:[%s1 + $0xb4] sm:$0xf]
  %v60 = vld [vmem:[%s1 + $0xb8] sm:$0xf]
  %v61 = vld [vmem:[%s1 + $0xbc] sm:$0xf]
  %v64 = vunpack.c.l.b16 %v12
  %v65 = vunpack.c.h.b16 %v12
  %v66 = vunpack.c.l.b16 %v13
  %v67 = vpack.c.b16 %v64, %v64
  %v68 = vpack.c.b16 %v65, %v65
  %v69 = vpack.c.b16 %v66, %v66
  %v121 = vunpack.c.l.b16 %v14
  %v122 = vunpack.c.l.b16 %v15
  %v123 = vunpack.c.l.b16 %v16
  %v124 = vunpack.c.l.b16 %v17
  %v125 = vunpack.c.l.b16 %v18
  %v126 = vunpack.c.l.b16 %v19
  %v127 = vunpack.c.l.b16 %v20
  %v128 = vunpack.c.l.b16 %v21
  %v129 = vunpack.c.l.b16 %v22
  %v130 = vunpack.c.l.b16 %v23
  %v131 = vunpack.c.l.b16 %v24
  %v132 = vunpack.c.l.b16 %v25
  %v133 = vunpack.c.l.b16 %v26
  %v134 = vunpack.c.l.b16 %v27
  %v135 = vunpack.c.l.b16 %v28
  %v136 = vunpack.c.l.b16 %v29
  %v137 = vunpack.c.l.b16 %v30
  %v138 = vunpack.c.l.b16 %v31
  %v139 = vunpack.c.l.b16 %v32
  %v140 = vunpack.c.l.b16 %v33
  %v141 = vunpack.c.l.b16 %v34
  %v142 = vunpack.c.l.b16 %v35
  %v143 = vunpack.c.l.b16 %v36
  %v144 = vunpack.c.l.b16 %v37
  %v145 = vunpack.c.l.b16 %v38
  %v146 = vunpack.c.l.b16 %v39
  %v147 = vunpack.c.l.b16 %v40
  %v148 = vunpack.c.l.b16 %v41
  %v149 = vunpack.c.l.b16 %v42
  %v150 = vunpack.c.l.b16 %v43
  %v151 = vunpack.c.l.b16 %v44
  %v152 = vunpack.c.l.b16 %v45
  %v153 = vunpack.c.l.b16 %v46
  %v154 = vunpack.c.l.b16 %v47
  %v155 = vunpack.c.l.b16 %v48
  %v156 = vunpack.c.l.b16 %v49
  %v157 = vunpack.c.l.b16 %v50
  %v158 = vunpack.c.l.b16 %v51
  %v159 = vunpack.c.l.b16 %v52
  %v160 = vunpack.c.l.b16 %v53
  %v161 = vunpack.c.l.b16 %v54
  %v162 = vunpack.c.l.b16 %v55
  %v163 = vunpack.c.l.b16 %v56
  %v164 = vunpack.c.l.b16 %v57
  %v165 = vunpack.c.l.b16 %v58
  %v166 = vunpack.c.l.b16 %v59
  %v167 = vunpack.c.l.b16 %v60
  %v168 = vunpack.c.l.b16 %v61
  %v169 = vpack.c.b16 %v122, %v121
  %v170 = vpack.c.b16 %v124, %v123
  %v171 = vpack.c.b16 %v126, %v125
  %v172 = vpack.c.b16 %v128, %v127
  %v173 = vpack.c.b16 %v130, %v129
  %v174 = vpack.c.b16 %v132, %v131
  %v175 = vpack.c.b16 %v134, %v133
  %v176 = vpack.c.b16 %v136, %v135
  %v177 = vpack.c.b16 %v138, %v137
  %v178 = vpack.c.b16 %v140, %v139
  %v179 = vpack.c.b16 %v142, %v141
  %v180 = vpack.c.b16 %v144, %v143
  %v181 = vpack.c.b16 %v146, %v145
  %v182 = vpack.c.b16 %v148, %v147
  %v183 = vpack.c.b16 %v150, %v149
  %v184 = vpack.c.b16 %v152, %v151
  %v185 = vpack.c.b16 %v154, %v153
  %v186 = vpack.c.b16 %v156, %v155
  %v187 = vpack.c.b16 %v158, %v157
  %v188 = vpack.c.b16 %v160, %v159
  %v189 = vpack.c.b16 %v162, %v161
  %v190 = vpack.c.b16 %v164, %v163
  %v191 = vpack.c.b16 %v166, %v165
  %v192 = vpack.c.b16 %v168, %v167
  %217 = vmatprep.subr.bf16.mxu0 0
  %218 = vmatpush1.bf16.msra.mxu0 %v176
  %219 = vmatprep.subr.bf16.mxu0 0
  %220 = vmatpush1.bf16.msra.mxu0 %v175
  %221 = vmatprep.subr.bf16.mxu0 0
  %222 = vmatpush1.bf16.msra.mxu0 %v174
  %223 = vmatprep.subr.bf16.mxu0 0
  %224 = vmatpush1.bf16.msra.mxu0 %v173
  %225 = vmatprep.subr.bf16.mxu0 0
  %226 = vmatpush1.bf16.msra.mxu0 %v172
  %227 = vmatprep.subr.bf16.mxu0 0
  %228 = vmatpush1.bf16.msra.mxu0 %v171
  %229 = vmatprep.subr.bf16.mxu0 0
  %230 = vmatpush1.bf16.msra.mxu0 %v170
  %231 = vmatprep.subr.bf16.mxu0 0
  %232 = vmatpush1.bf16.msra.mxu0 %v169
  %233 = vmatprep.subr.bf16.mxu0 0
  %234 = vmatpush2.bf16.msra.mxu0 %v184
  %235 = vmatprep.subr.bf16.mxu0 0
  %236 = vmatpush2.bf16.msra.mxu0 %v183
  %237 = vmatprep.subr.bf16.mxu0 0
  %238 = vmatpush2.bf16.msra.mxu0 %v182
  %239 = vmatprep.subr.bf16.mxu0 0
  %240 = vmatpush2.bf16.msra.mxu0 %v181
  %241 = vmatprep.subr.bf16.mxu0 0
  %242 = vmatpush2.bf16.msra.mxu0 %v180
  %243 = vmatprep.subr.bf16.mxu0 0
  %244 = vmatpush2.bf16.msra.mxu0 %v179
  %245 = vmatprep.subr.bf16.mxu0 0
  %246 = vmatpush2.bf16.msra.mxu0 %v178
  %247 = vmatprep.subr.bf16.mxu0 0
  %248 = vmatpush2.bf16.msra.mxu0 %v177
  %249 = vmatprep.mubr.bf16.mxu0 %v68
  %250 = vmatmul.mubr.bf16.gmra.mxu0 %v67
  %v251 = vpop.f32.mrf.mxu0
  %v252 = vadd.f32 0.0, %v251
  %v253 = vpop.f32.mrf.mxu0
  %v254 = vpop.f32.mrf.mxu0
  %v255 = vpop.f32.mrf.mxu0
  %256 = vdwg.mxu0
  %257 = vmatprep.subr.bf16.mxu0 0
  %258 = vmatpush1.bf16.msra.mxu0 %v192
  %259 = vmatprep.subr.bf16.mxu0 0
  %260 = vmatpush1.bf16.msra.mxu0 %v191
  %261 = vmatprep.subr.bf16.mxu0 0
  %262 = vmatpush1.bf16.msra.mxu0 %v190
  %263 = vmatprep.subr.bf16.mxu0 0
  %264 = vmatpush1.bf16.msra.mxu0 %v189
  %265 = vmatprep.subr.bf16.mxu0 0
  %266 = vmatpush1.bf16.msra.mxu0 %v188
  %267 = vmatprep.subr.bf16.mxu0 0
  %268 = vmatpush1.bf16.msra.mxu0 %v187
  %269 = vmatprep.subr.bf16.mxu0 0
  %270 = vmatpush1.bf16.msra.mxu0 %v186
  %271 = vmatprep.subr.bf16.mxu0 0
  %272 = vmatpush1.bf16.msra.mxu0 %v185
  %273 = vmatprep.subr.bf16.mxu0 0
  %274 = vmatpush2.bf16.msra.mxu0 0
  %275 = vmatprep.subr.bf16.mxu0 0
  %276 = vmatpush2.bf16.msra.mxu0 0
  %277 = vmatprep.subr.bf16.mxu0 0
  %278 = vmatpush2.bf16.msra.mxu0 0
  %279 = vmatprep.subr.bf16.mxu0 0
  %280 = vmatpush2.bf16.msra.mxu0 0
  %281 = vmatprep.subr.bf16.mxu0 0
  %282 = vmatpush2.bf16.msra.mxu0 0
  %283 = vmatprep.subr.bf16.mxu0 0
  %284 = vmatpush2.bf16.msra.mxu0 0
  %285 = vmatprep.subr.bf16.mxu0 0
  %286 = vmatpush2.bf16.msra.mxu0 0
  %287 = vmatprep.subr.bf16.mxu0 0
  %288 = vmatpush2.bf16.msra.mxu0 0
  %289 = vmatprep.mubr.bf16.mxu0 0
  %290 = vmatmul.mubr.bf16.gmra.mxu0 %v69
  %v291 = vpop.f32.mrf.mxu0
  %v292 = vadd.f32 %v252, %v291
  %v293 = vpop.f32.mrf.mxu0
  %v294 = vpop.f32.mrf.mxu0
  %v295 = vpop.f32.mrf.mxu0
  %296 = vdwg.mxu0
  %297 = vst [vmem:[%s2] sm:$0xff] %v292
  // Predicated region
  $region10: #{generator_forward.14} parent=0 // pred_check
    _
  $region11: #{generator_forward.14} parent=0 // pred_check_branch
    %299 = sbr.rel (0) target = $region13
  $region12: #{generator_forward.14} parent=0 // pred_region
    _
  $region13: #{generator_forward.14} parent=0 // pred_fallthru
    _
  // Predicated region
  $region14: #{generator_forward.14} parent=0 // pred_check
    _
  $region15: #{generator_forward.14} parent=0 // pred_check_branch
    %301 = sbr.rel (0) target = $region17
  $region16: #{generator_forward.14} parent=0 // pred_region
    _
  $region17: #{generator_forward.14} parent=0 // pred_fallthru
    _

// kernel: generator_forward.15
$region0: #{generator_forward.15}
  #allocation0 [shape = 'u32[]', space=smem, size = 0x4, offset = 0x4, fixed_abs, tag = 'smem constant byte address 0x4 - core index']
  #allocation1 [shape = 'u32[144,128]{1,0:T(1,128)}', space=vmem, size = 0x12000, scoped, tag = 'internal scratch']
  %s0 = inlined_call_operand.vmem [shape: bf16[8,384], index: 0, kind: input, shape index: {}]
  %s1 = inlined_call_operand.vmem [shape: bf16[384,128], index: 1, kind: input, shape index: {}]
  %s2 = inlined_call_operand.vmem [shape: f32[2,128], index: 2, kind: input, shape index: {}]
  %s3 = inlined_call_operand.vmem [shape: f32[2], index: 3, kind: input, shape index: {}]
  %s4 = inlined_call_operand.vmem [shape: f32[8,128], index: 4, kind: output, shape index: {}]
  %s5 = sld [smem:[#allocation0]]
  $region30: #{generator_forward.15} parent=0
    _
  %s7 = ssub.s32 1, %s5
  %s8 = scalar_select 0, %s7, %s5
  $region1: #{generator_forward.15} parent=0
    #allocation2 [shape = 'u8[512]{0}', space=smem, size = 0x200, scoped, tag = 'input window, operand 3, single buffered']
    #allocation3 [shape = 's32[1]{0}', space=sflag, size = 0x4, scoped, tag = 'scoped memory for generator_forward.15']
    %9 = vsyncpa [#allocation3], 0
    // Predicated region
    $region2: #{generator_forward.15} parent=1 // pred_check
      _
    $region3: #{generator_forward.15} parent=1 // pred_check_branch
      %11 = sbr.rel (0) target = $region5
    $region4: #{generator_forward.15} parent=1 // pred_region
      _
    $region5: #{generator_forward.15} parent=1 // pred_fallthru
      _
    // Predicated region
    $region6: #{generator_forward.15} parent=1 // pred_check
      _
    $region7: #{generator_forward.15} parent=1 // pred_check_branch
      %13 = sbr.rel (0) target = $region9
    $region8: #{generator_forward.15} parent=1 // pred_region
      _
    $region9: #{generator_forward.15} parent=1 // pred_fallthru
      _
    // Predicated region
    $region10: #{generator_forward.15} parent=1 // pred_check
      _
    $region11: #{generator_forward.15} parent=1 // pred_check_branch
      %15 = sbr.rel (0) target = $region13
    $region12: #{generator_forward.15} parent=1 // pred_region
      _
    $region13: #{generator_forward.15} parent=1 // pred_fallthru
      _
    // Predicated region
    $region14: #{generator_forward.15} parent=1 // pred_check
      _
    $region15: #{generator_forward.15} parent=1 // pred_check_branch
      %17 = sbr.rel (0) target = $region17
    $region16: #{generator_forward.15} parent=1 // pred_region
      %s19 = ssub.s32 16, 16
      %20 = vsyncadd [#allocation3], %s19
      %s22 = sshll.u32 %s3, 4
      %s23 = int_to_ptr.vmem [resolvable:$true] %s22
      %25 = dma.vmem_to_smem %s23, 16, [#allocation2], [#allocation3]
    $region17: #{generator_forward.15} parent=1 // pred_fallthru
      _
    // Predicated region
    $region18: #{generator_forward.15} parent=1 // pred_check
      _
    $region19: #{generator_forward.15} parent=1 // pred_check_branch
      %27 = sbr.rel (0) target = $region21
    $region20: #{generator_forward.15} parent=1 // pred_region
      %28 = dma.done [#allocation3], 16
    $region21: #{generator_forward.15} parent=1 // pred_fallthru
      _
    %29 = sfence
    %v31 = vld [vmem:[%s0] sm:$0xff]
    %v32 = vld [vmem:[%s0 + $0x8] sm:$0xf]
    %v33 = vld [vmem:[%s1] sm:$0xf]
    %v34 = vld [vmem:[%s1 + $0x4] sm:$0xf]
    %v35 = vld [vmem:[%s1 + $0x8] sm:$0xf]
    %v36 = vld [vmem:[%s1 + $0xc] sm:$0xf]
    %v37 = vld [vmem:[%s1 + $0x10] sm:$0xf]
    %v38 = vld [vmem:[%s1 + $0x14] sm:$0xf]
    %v39 = vld [vmem:[%s1 + $0x18] sm:$0xf]
    %v40 = vld [vmem:[%s1 + $0x1c] sm:$0xf]
    %v41 = vld [vmem:[%s1 + $0x20] sm:$0xf]
    %v42 = vld [vmem:[%s1 + $0x24] sm:$0xf]
    %v43 = vld [vmem:[%s1 + $0x28] sm:$0xf]
    %v44 = vld [vmem:[%s1 + $0x2c] sm:$0xf]
    %v45 = vld [vmem:[%s1 + $0x30] sm:$0xf]
    %v46 = vld [vmem:[%s1 + $0x34] sm:$0xf]
    %v47 = vld [vmem:[%s1 + $0x38] sm:$0xf]
    %v48 = vld [vmem:[%s1 + $0x3c] sm:$0xf]
    %v49 = vld [vmem:[%s1 + $0x40] sm:$0xf]
    %v50 = vld [vmem:[%s1 + $0x44] sm:$0xf]
    %v51 = vld [vmem:[%s1 + $0x48] sm:$0xf]
    %v52 = vld [vmem:[%s1 + $0x4c] sm:$0xf]
    %v53 = vld [vmem:[%s1 + $0x50] sm:$0xf]
    %v54 = vld [vmem:[%s1 + $0x54] sm:$0xf]
    %v55 = vld [vmem:[%s1 + $0x58] sm:$0xf]
    %v56 = vld [vmem:[%s1 + $0x5c] sm:$0xf]
    %v57 = vld [vmem:[%s1 + $0x60] sm:$0xf]
    %v58 = vld [vmem:[%s1 + $0x64] sm:$0xf]
    %v59 = vld [vmem:[%s1 + $0x68] sm:$0xf]
    %v60 = vld [vmem:[%s1 + $0x6c] sm:$0xf]
    %v61 = vld [vmem:[%s1 + $0x70] sm:$0xf]
    %v62 = vld [vmem:[%s1 + $0x74] sm:$0xf]
    %v63 = vld [vmem:[%s1 + $0x78] sm:$0xf]
    %v64 = vld [vmem:[%s1 + $0x7c] sm:$0xf]
    %v65 = vld [vmem:[%s1 + $0x80] sm:$0xf]
    %v66 = vld [vmem:[%s1 + $0x84] sm:$0xf]
    %v67 = vld [vmem:[%s1 + $0x88] sm:$0xf]
    %v68 = vld [vmem:[%s1 + $0x8c] sm:$0xf]
    %v69 = vld [vmem:[%s1 + $0x90] sm:$0xf]
    %v70 = vld [vmem:[%s1 + $0x94] sm:$0xf]
    %v71 = vld [vmem:[%s1 + $0x98] sm:$0xf]
    %v72 = vld [vmem:[%s1 + $0x9c] sm:$0xf]
    %v73 = vld [vmem:[%s1 + $0xa0] sm:$0xf]
    %v74 = vld [vmem:[%s1 + $0xa4] sm:$0xf]
    %v75 = vld [vmem:[%s1 + $0xa8] sm:$0xf]
    %v76 = vld [vmem:[%s1 + $0xac] sm:$0xf]
    %v77 = vld [vmem:[%s1 + $0xb0] sm:$0xf]
    %v78 = vld [vmem:[%s1 + $0xb4] sm:$0xf]
    %v79 = vld [vmem:[%s1 + $0xb8] sm:$0xf]
    %v80 = vld [vmem:[%s1 + $0xbc] sm:$0xf]
    %v83 = vunpack.c.l.b16 %v31
    %v84 = vunpack.c.h.b16 %v31
    %v85 = vunpack.c.l.b16 %v32
    %v86 = vpack.c.b16 %v83, %v83
    %v87 = vpack.c.b16 %v84, %v84
    %v88 = vpack.c.b16 %v85, %v85
    %v140 = vunpack.c.l.b16 %v33
    %v141 = vunpack.c.l.b16 %v34
    %v142 = vunpack.c.l.b16 %v35
    %v143 = vunpack.c.l.b16 %v36
    %v144 = vunpack.c.l.b16 %v37
    %v145 = vunpack.c.l.b16 %v38
    %v146 = vunpack.c.l.b16 %v39
    %v147 = vunpack.c.l.b16 %v40
    %v148 = vunpack.c.l.b16 %v41
    %v149 = vunpack.c.l.b16 %v42
    %v150 = vunpack.c.l.b16 %v43
    %v151 = vunpack.c.l.b16 %v44
    %v152 = vunpack.c.l.b16 %v45
    %v153 = vunpack.c.l.b16 %v46
    %v154 = vunpack.c.l.b16 %v47
    %v155 = vunpack.c.l.b16 %v48
    %v156 = vunpack.c.l.b16 %v49
    %v157 = vunpack.c.l.b16 %v50
    %v158 = vunpack.c.l.b16 %v51
    %v159 = vunpack.c.l.b16 %v52
    %v160 = vunpack.c.l.b16 %v53
    %v161 = vunpack.c.l.b16 %v54
    %v162 = vunpack.c.l.b16 %v55
    %v163 = vunpack.c.l.b16 %v56
    %v164 = vunpack.c.l.b16 %v57
    %v165 = vunpack.c.l.b16 %v58
    %v166 = vunpack.c.l.b16 %v59
    %v167 = vunpack.c.l.b16 %v60
    %v168 = vunpack.c.l.b16 %v61
    %v169 = vunpack.c.l.b16 %v62
    %v170 = vunpack.c.l.b16 %v63
    %v171 = vunpack.c.l.b16 %v64
    %v172 = vunpack.c.l.b16 %v65
    %v173 = vunpack.c.l.b16 %v66
    %v174 = vunpack.c.l.b16 %v67
    %v175 = vunpack.c.l.b16 %v68
    %v176 = vunpack.c.l.b16 %v69
    %v177 = vunpack.c.l.b16 %v70
    %v178 = vunpack.c.l.b16 %v71
    %v179 = vunpack.c.l.b16 %v72
    %v180 = vunpack.c.l.b16 %v73
    %v181 = vunpack.c.l.b16 %v74
    %v182 = vunpack.c.l.b16 %v75
    %v183 = vunpack.c.l.b16 %v76
    %v184 = vunpack.c.l.b16 %v77
    %v185 = vunpack.c.l.b16 %v78
    %v186 = vunpack.c.l.b16 %v79
    %v187 = vunpack.c.l.b16 %v80
    %v188 = vpack.c.b16 %v141, %v140
    %v189 = vpack.c.b16 %v143, %v142
    %v190 = vpack.c.b16 %v145, %v144
    %v191 = vpack.c.b16 %v147, %v146
    %v192 = vpack.c.b16 %v149, %v148
    %v193 = vpack.c.b16 %v151, %v150
    %v194 = vpack.c.b16 %v153, %v152
    %v195 = vpack.c.b16 %v155, %v154
    %v196 = vpack.c.b16 %v157, %v156
    %v197 = vpack.c.b16 %v159, %v158
    %v198 = vpack.c.b16 %v161, %v160
    %v199 = vpack.c.b16 %v163, %v162
    %v200 = vpack.c.b16 %v165, %v164
    %v201 = vpack.c.b16 %v167, %v166
    %v202 = vpack.c.b16 %v169, %v168
    %v203 = vpack.c.b16 %v171, %v170
    %v204 = vpack.c.b16 %v173, %v172
    %v205 = vpack.c.b16 %v175, %v174
    %v206 = vpack.c.b16 %v177, %v176
    %v207 = vpack.c.b16 %v179, %v178
    %v208 = vpack.c.b16 %v181, %v180
    %v209 = vpack.c.b16 %v183, %v182
    %v210 = vpack.c.b16 %v185, %v184
    %v211 = vpack.c.b16 %v187, %v186
    %236 = vmatprep.subr.bf16.mxu0 0
    %237 = vmatpush1.bf16.msra.mxu0 %v195
    %238 = vmatprep.subr.bf16.mxu0 0
    %239 = vmatpush1.bf16.msra.mxu0 %v194
    %240 = vmatprep.subr.bf16.mxu0 0
    %241 = vmatpush1.bf16.msra.mxu0 %v193
    %242 = vmatprep.subr.bf16.mxu0 0
    %243 = vmatpush1.bf16.msra.mxu0 %v192
    %244 = vmatprep.subr.bf16.mxu0 0
    %245 = vmatpush1.bf16.msra.mxu0 %v191
    %246 = vmatprep.subr.bf16.mxu0 0
    %247 = vmatpush1.bf16.msra.mxu0 %v190
    %248 = vmatprep.subr.bf16.mxu0 0
    %249 = vmatpush1.bf16.msra.mxu0 %v189
    %250 = vmatprep.subr.bf16.mxu0 0
    %251 = vmatpush1.bf16.msra.mxu0 %v188
    %252 = vmatprep.subr.bf16.mxu0 0
    %253 = vmatpush2.bf16.msra.mxu0 %v203
    %254 = vmatprep.subr.bf16.mxu0 0
    %255 = vmatpush2.bf16.msra.mxu0 %v202
    %256 = vmatprep.subr.bf16.mxu0 0
    %257 = vmatpush2.bf16.msra.mxu0 %v201
    %258 = vmatprep.subr.bf16.mxu0 0
    %259 = vmatpush2.bf16.msra.mxu0 %v200
    %260 = vmatprep.subr.bf16.mxu0 0
    %261 = vmatpush2.bf16.msra.mxu0 %v199
    %262 = vmatprep.subr.bf16.mxu0 0
    %263 = vmatpush2.bf16.msra.mxu0 %v198
    %264 = vmatprep.subr.bf16.mxu0 0
    %265 = vmatpush2.bf16.msra.mxu0 %v197
    %266 = vmatprep.subr.bf16.mxu0 0
    %267 = vmatpush2.bf16.msra.mxu0 %v196
    %268 = vmatprep.mubr.bf16.mxu0 %v87
    %269 = vmatmul.mubr.bf16.gmra.mxu0 %v86
    %v270 = vpop.f32.mrf.mxu0
    %v271 = vadd.f32 0.0, %v270
    %v272 = vpop.f32.mrf.mxu0
    %v273 = vpop.f32.mrf.mxu0
    %v274 = vpop.f32.mrf.mxu0
    %275 = vdwg.mxu0
    %276 = vmatprep.subr.bf16.mxu0 0
    %277 = vmatpush1.bf16.msra.mxu0 %v211
    %278 = vmatprep.subr.bf16.mxu0 0
    %279 = vmatpush1.bf16.msra.mxu0 %v210
    %280 = vmatprep.subr.bf16.mxu0 0
    %281 = vmatpush1.bf16.msra.mxu0 %v209
    %282 = vmatprep.subr.bf16.mxu0 0
    %283 = vmatpush1.bf16.msra.mxu0 %v208
    %284 = vmatprep.subr.bf16.mxu0 0
    %285 = vmatpush1.bf16.msra.mxu0 %v207
    %286 = vmatprep.subr.bf16.mxu0 0
    %287 = vmatpush1.bf16.msra.mxu0 %v206
    %288 = vmatprep.subr.bf16.mxu0 0
    %289 = vmatpush1.bf16.msra.mxu0 %v205
    %290 = vmatprep.subr.bf16.mxu0 0
    %291 = vmatpush1.bf16.msra.mxu0 %v204
    %292 = vmatprep.subr.bf16.mxu0 0
    %293 = vmatpush2.bf16.msra.mxu0 0
    %294 = vmatprep.subr.bf16.mxu0 0
    %295 = vmatpush2.bf16.msra.mxu0 0
    %296 = vmatprep.subr.bf16.mxu0 0
    %297 = vmatpush2.bf16.msra.mxu0 0
    %298 = vmatprep.subr.bf16.mxu0 0
    %299 = vmatpush2.bf16.msra.mxu0 0
    %300 = vmatprep.subr.bf16.mxu0 0
    %301 = vmatpush2.bf16.msra.mxu0 0
    %302 = vmatprep.subr.bf16.mxu0 0
    %303 = vmatpush2.bf16.msra.mxu0 0
    %304 = vmatprep.subr.bf16.mxu0 0
    %305 = vmatpush2.bf16.msra.mxu0 0
    %306 = vmatprep.subr.bf16.mxu0 0
    %307 = vmatpush2.bf16.msra.mxu0 0
    %308 = vmatprep.mubr.bf16.mxu0 0
    %309 = vmatmul.mubr.bf16.gmra.mxu0 %v88
    %v310 = vpop.f32.mrf.mxu0
    %v311 = vadd.f32 %v271, %v310
    %v312 = vpop.f32.mrf.mxu0
    %v313 = vpop.f32.mrf.mxu0
    %v314 = vpop.f32.mrf.mxu0
    %315 = vdwg.mxu0
    %v316 = vrot.slane %v311, 4
    %v317 = vadd.f32 %v311, %v316
    %v318 = vrot.slane %v317, 2
    %v319 = vadd.f32 %v317, %v318
    %v320 = vrot.slane %v319, 1
    %v321 = vadd.f32 %v319, %v320
    %v322 = vmul.f32 %v321, 0.125
    %v323 = vmul.f32 %v311, %v311
    %v324 = vrot.slane %v323, 4
    %v325 = vadd.f32 %v323, %v324
    %v326 = vrot.slane %v325, 2
    %v327 = vadd.f32 %v325, %v326
    %v328 = vrot.slane %v327, 1
    %v329 = vadd.f32 %v327, %v328
    %v330 = vmul.f32 %v329, 0.125
    %v331 = vmul.f32 %v322, %v322
    %v332 = vsub.f32 %v330, %v331
    %v333 = vmax.f32 %v332, 0.0
    %v334 = vld [vmem:[%s2] sm:$0x3]
    %v335 = vadd.f32 %v333, 1e-05
    %v336 = vrsqrt.pop %v335
    %v337 = vmul.f32 %v334, %v336
    %v338 = vsub.f32 %v311, %v322
    %v339 = vlaneseq
    %v340 = vshrl.u32 %v339, 7
    %v341 = vsub.s32 0, %v340
    %v342 = vrot.slane %v337, %v341
    %v343 = vmul.f32 %v338, %v342
    %v344 = vlaneseq
    %v345 = vshrl.u32 %v344, 7
    %v346 = vsub.s32 1, %v345
    %v347 = vrot.slane %v334, %v346
    %v348 = vadd.f32 %v343, %v347
    %v349 = vmax.f32 %v348, 0.0
    %v351 = vcombine.high %v349, %v349
    %vm353 = vcmask 1043456
    %v354 = vsel %vm353, %v349, 0.0
    %v355 = vrot.slane %v354, 4
    %v356 = vadd.f32 %v354, %v355
    %v357 = vrot.slane %v356, 2
    %v358 = vadd.f32 %v356, %v357
    %v359 = vrot.slane %v358, 1
    %v360 = vadd.f32 %v358, %v359
    %v361 = vsel %vm353, %v351, 0.0
    %v362 = vrot.slane %v361, 4
    %v363 = vadd.f32 %v361, %v362
    %v364 = vrot.slane %v363, 2
    %v365 = vadd.f32 %v363, %v364
    %v366 = vrot.slane %v365, 1
    %v367 = vadd.f32 %v365, %v366
    %v368 = vrcp.pop 4.0
    %v369 = vmul.f32 %v360, %v368
    %v370 = vmul.f32 %v367, %v368
    %v371 = vsel %vm353, %v349, -inf
    %v372 = vrot.slane %v371, 4
    %v373 = vmax.f32 %v371, %v372
    %v374 = vrot.slane %v373, 2
    %v375 = vmax.f32 %v373, %v374
    %v376 = vrot.slane %v375, 1
    %v377 = vmax.f32 %v375, %v376
    %v378 = vsel %vm353, %v351, -inf
    %v379 = vrot.slane %v378, 4
    %v380 = vmax.f32 %v378, %v379
    %v381 = vrot.slane %v380, 2
    %v382 = vmax.f32 %v380, %v381
    %v383 = vrot.slane %v382, 1
    %v384 = vmax.f32 %v382, %v383
    %s385 = sld [smem:[#allocation2]]
    %s386 = sld [smem:[#allocation2 + $0x1]]
    %v387 = vstv %s385
    %v388 = vmul.f32 %v387, %v369
    %v389 = vmul.f32 %v387, %v370
    %v390 = vmax.f32 %v388, 0.0
    %v391 = vmax.f32 %v389, 0.0
    %v392 = vstv %s386
    %v393 = vmul.f32 %v392, %v390
    %v394 = vmul.f32 %v392, %v391
    %v395 = vmul.f32 %v387, %v377
    %v396 = vmul.f32 %v387, %v384
    %v397 = vmax.f32 %v395, 0.0
    %v398 = vmax.f32 %v396, 0.0
    %v399 = vmul.f32 %v392, %v397
    %v400 = vmul.f32 %v392, %v398
    %v401 = vadd.f32 %v393, %v399
    %v402 = vadd.f32 %v394, %v400
    %v403 = vxor.u32 %v401, 2147483648
    %v404 = vxor.u32 %v402, 2147483648
    %v405 = vmul.f32 %v403, 1.442695
    %v406 = vpow.pop %v405
    %v407 = vmul.f32 %v404, 1.442695
    %v408 = vpow.pop %v407
    %v409 = vadd.f32 %v406, 1.0
    %v410 = vadd.f32 %v408, 1.0
    %v411 = vrcp.pop %v409
    %v412 = vmul.f32 1.0, %v411
    %v413 = vrcp.pop %v410
    %v414 = vmul.f32 1.0, %v413
    %v415 = vmul.f32 %v349, %v412
    %v416 = vmul.f32 %v351, %v414
    %v419 = vcombine.low %v415, %v416
    %421 = vst [vmem:[%s4] sm:$0xff] %v419
    // Predicated region
    $region22: #{generator_forward.15} parent=1 // pred_check
      _
    $region23: #{generator_forward.15} parent=1 // pred_check_branch
      %423 = sbr.rel (0) target = $region25
    $region24: #{generator_forward.15} parent=1 // pred_region
      _
    $region25: #{generator_forward.15} parent=1 // pred_fallthru
      _
    // Predicated region
    $region26: #{generator_forward.15} parent=1 // pred_check
      _
    $region27: #{generator_forward.15} parent=1 // pred_check_branch
      %425 = sbr.rel (0) target = $region29
    $region28: #{generator_forward.15} parent=1 // pred_region
      _
    $region29: #{generator_forward.15} parent=1 // pred_fallthru
      _
    %426 = vsyncpa [#allocation3], 1

// kernel: generator_forward.16
$region0: #{generator_forward.16}
  #allocation0 [shape = 'u32[]', space=smem, size = 0x4, offset = 0x4, fixed_abs, tag = 'smem constant byte address 0x4 - core index']
  #allocation1 [shape = 'u32[144,128]{1,0:T(1,128)}', space=vmem, size = 0x12000, scoped, tag = 'internal scratch']
  %s0 = inlined_call_operand.vmem [shape: bf16[32,1024], index: 0, kind: input, shape index: {}]
  %s1 = inlined_call_operand.vmem [shape: bf16[1024,128], index: 1, kind: input, shape index: {}]
  %s2 = inlined_call_operand.vmem [shape: f32[2,128], index: 2, kind: input, shape index: {}]
  %s3 = inlined_call_operand.vmem [shape: f32[2], index: 3, kind: input, shape index: {}]
  %s4 = inlined_call_operand.vmem [shape: f32[32,128], index: 4, kind: output, shape index: {}]
  %s5 = sld [smem:[#allocation0]]
  $region30: #{generator_forward.16} parent=0
    _
  %s7 = ssub.s32 1, %s5
  %s8 = scalar_select 0, %s7, %s5
  $region1: #{generator_forward.16} parent=0
    #allocation2 [shape = 'u8[512]{0}', space=smem, size = 0x200, scoped, tag = 'input window, operand 3, single buffered']
    #allocation3 [shape = 's32[1]{0}', space=sflag, size = 0x4, scoped, tag = 'scoped memory for generator_forward.16']
    %9 = vsyncpa [#allocation3], 0
    // Predicated region
    $region2: #{generator_forward.16} parent=1 // pred_check
      _
    $region3: #{generator_forward.16} parent=1 // pred_check_branch
      %11 = sbr.rel (0) target = $region5
    $region4: #{generator_forward.16} parent=1 // pred_region
      _
    $region5: #{generator_forward.16} parent=1 // pred_fallthru
      _
    // Predicated region
    $region6: #{generator_forward.16} parent=1 // pred_check
      _
    $region7: #{generator_forward.16} parent=1 // pred_check_branch
      %13 = sbr.rel (0) target = $region9
    $region8: #{generator_forward.16} parent=1 // pred_region
      _
    $region9: #{generator_forward.16} parent=1 // pred_fallthru
      _
    // Predicated region
    $region10: #{generator_forward.16} parent=1 // pred_check
      _
    $region11: #{generator_forward.16} parent=1 // pred_check_branch
      %15 = sbr.rel (0) target = $region13
    $region12: #{generator_forward.16} parent=1 // pred_region
      _
    $region13: #{generator_forward.16} parent=1 // pred_fallthru
      _
    // Predicated region
    $region14: #{generator_forward.16} parent=1 // pred_check
      _
    $region15: #{generator_forward.16} parent=1 // pred_check_branch
      %17 = sbr.rel (0) target = $region17
    $region16: #{generator_forward.16} parent=1 // pred_region
      %s19 = ssub.s32 16, 16
      %20 = vsyncadd [#allocation3], %s19
      %s22 = sshll.u32 %s3, 4
      %s23 = int_to_ptr.vmem [resolvable:$true] %s22
      %25 = dma.vmem_to_smem %s23, 16, [#allocation2], [#allocation3]
    $region17: #{generator_forward.16} parent=1 // pred_fallthru
      _
    // Predicated region
    $region18: #{generator_forward.16} parent=1 // pred_check
      _
    $region19: #{generator_forward.16} parent=1 // pred_check_branch
      %27 = sbr.rel (0) target = $region21
    $region20: #{generator_forward.16} parent=1 // pred_region
      %28 = dma.done [#allocation3], 16
    $region21: #{generator_forward.16} parent=1 // pred_fallthru
      _
    %29 = sfence
    %v31 = vld [vmem:[%s0] sm:$0xff]
    %v32 = vld [vmem:[%s0 + $0x8] sm:$0xff]
    %v33 = vld [vmem:[%s0 + $0x10] sm:$0xff]
    %v34 = vld [vmem:[%s0 + $0x18] sm:$0xff]
    %v35 = vld [vmem:[%s0 + $0x20] sm:$0xff]
    %v36 = vld [vmem:[%s0 + $0x28] sm:$0xff]
    %v37 = vld [vmem:[%s0 + $0x30] sm:$0xff]
    %v38 = vld [vmem:[%s0 + $0x38] sm:$0xff]
    %v39 = vld [vmem:[%s0 + $0x40] sm:$0xff]
    %v40 = vld [vmem:[%s0 + $0x48] sm:$0xff]
    %v41 = vld [vmem:[%s0 + $0x50] sm:$0xff]
    %v42 = vld [vmem:[%s0 + $0x58] sm:$0xff]
    %v43 = vld [vmem:[%s0 + $0x60] sm:$0xff]
    %v44 = vld [vmem:[%s0 + $0x68] sm:$0xff]
    %v45 = vld [vmem:[%s0 + $0x70] sm:$0xff]
    %v46 = vld [vmem:[%s0 + $0x78] sm:$0xff]
    %v47 = vld [vmem:[%s1] sm:$0xf]
    %v48 = vld [vmem:[%s1 + $0x4] sm:$0xf]
    %v49 = vld [vmem:[%s1 + $0x8] sm:$0xf]
    %v50 = vld [vmem:[%s1 + $0xc] sm:$0xf]
    %v51 = vld [vmem:[%s1 + $0x10] sm:$0xf]
    %v52 = vld [vmem:[%s1 + $0x14] sm:$0xf]
    %v53 = vld [vmem:[%s1 + $0x18] sm:$0xf]
    %v54 = vld [vmem:[%s1 + $0x1c] sm:$0xf]
    %v55 = vld [vmem:[%s1 + $0x20] sm:$0xf]
    %v56 = vld [vmem:[%s1 + $0x24] sm:$0xf]
    %v57 = vld [vmem:[%s1 + $0x28] sm:$0xf]
    %v58 = vld [vmem:[%s1 + $0x2c] sm:$0xf]
    %v59 = vld [vmem:[%s1 + $0x30] sm:$0xf]
    %v60 = vld [vmem:[%s1 + $0x34] sm:$0xf]
    %v61 = vld [vmem:[%s1 + $0x38] sm:$0xf]
    %v62 = vld [vmem:[%s1 + $0x3c] sm:$0xf]
    %v63 = vld [vmem:[%s1 + $0x40] sm:$0xf]
    %v64 = vld [vmem:[%s1 + $0x44] sm:$0xf]
    %v65 = vld [vmem:[%s1 + $0x48] sm:$0xf]
    %v66 = vld [vmem:[%s1 + $0x4c] sm:$0xf]
    %v67 = vld [vmem:[%s1 + $0x50] sm:$0xf]
    %v68 = vld [vmem:[%s1 + $0x54] sm:$0xf]
    %v69 = vld [vmem:[%s1 + $0x58] sm:$0xf]
    %v70 = vld [vmem:[%s1 + $0x5c] sm:$0xf]
    %v71 = vld [vmem:[%s1 + $0x60] sm:$0xf]
    %v72 = vld [vmem:[%s1 + $0x64] sm:$0xf]
    %v73 = vld [vmem:[%s1 + $0x68] sm:$0xf]
    %v74 = vld [vmem:[%s1 + $0x6c] sm:$0xf]
    %v75 = vld [vmem:[%s1 + $0x70] sm:$0xf]
    %v76 = vld [vmem:[%s1 + $0x74] sm:$0xf]
    %v77 = vld [vmem:[%s1 + $0x78] sm:$0xf]
    %v78 = vld [vmem:[%s1 + $0x7c] sm:$0xf]
    %v79 = vld [vmem:[%s1 + $0x80] sm:$0xf]
    %v80 = vld [vmem:[%s1 + $0x84] sm:$0xf]
    %v81 = vld [vmem:[%s1 + $0x88] sm:$0xf]
    %v82 = vld [vmem:[%s1 + $0x8c] sm:$0xf]
    %v83 = vld [vmem:[%s1 + $0x90] sm:$0xf]
    %v84 = vld [vmem:[%s1 + $0x94] sm:$0xf]
    %v85 = vld [vmem:[%s1 + $0x98] sm:$0xf]
    %v86 = vld [vmem:[%s1 + $0x9c] sm:$0xf]
    %v87 = vld [vmem:[%s1 + $0xa0] sm:$0xf]
    %v88 = vld [vmem:[%s1 + $0xa4] sm:$0xf]
    %v89 = vld [vmem:[%s1 + $0xa8] sm:$0xf]
    %v90 = vld [vmem:[%s1 + $0xac] sm:$0xf]
    %v91 = vld [vmem:[%s1 + $0xb0] sm:$0xf]
    %v92 = vld [vmem:[%s1 + $0xb4] sm:$0xf]
    %v93 = vld [vmem:[%s1 + $0xb8] sm:$0xf]
    %v94 = vld [vmem:[%s1 + $0xbc] sm:$0xf]
    %v95 = vld [vmem:[%s1 + $0xc0] sm:$0xf]
    %v96 = vld [vmem:[%s1 + $0xc4] sm:$0xf]
    %v97 = vld [vmem:[%s1 + $0xc8] sm:$0xf]
    %v98 = vld [vmem:[%s1 + $0xcc] sm:$0xf]
    %v99 = vld [vmem:[%s1 + $0xd0] sm:$0xf]
    %v100 = vld [vmem:[%s1 + $0xd4] sm:$0xf]
    %v101 = vld [vmem:[%s1 + $0xd8] sm:$0xf]
    %v102 = vld [vmem:[%s1 + $0xdc] sm:$0xf]
    %v103 = vld [vmem:[%s1 + $0xe0] sm:$0xf]
    %v104 = vld [vmem:[%s1 + $0xe4] sm:$0xf]
    %v105 = vld [vmem:[%s1 + $0xe8] sm:$0xf]
    %v106 = vld [vmem:[%s1 + $0xec] sm:$0xf]
    %v107 = vld [vmem:[%s1 + $0xf0] sm:$0xf]
    %v108 = vld [vmem:[%s1 + $0xf4] sm:$0xf]
    %v109 = vld [vmem:[%s1 + $0xf8] sm:$0xf]
    %v110 = vld [vmem:[%s1 + $0xfc] sm:$0xf]
    %v111 = vld [vmem:[%s1 + $0x100] sm:$0xf]
    %v112 = vld [vmem:[%s1 + $0x104] sm:$0xf]
    %v113 = vld [vmem:[%s1 + $0x108] sm:$0xf]
    %v114 = vld [vmem:[%s1 + $0x10c] sm:$0xf]
    %v115 = vld [vmem:[%s1 + $0x110] sm:$0xf]
    %v116 = vld [vmem:[%s1 + $0x114] sm:$0xf]
    %v117 = vld [vmem:[%s1 + $0x118] sm:$0xf]
    %v118 = vld [vmem:[%s1 + $0x11c] sm:$0xf]
    %v119 = vld [vmem:[%s1 + $0x120] sm:$0xf]
    %v120 = vld [vmem:[%s1 + $0x124] sm:$0xf]
    %v121 = vld [vmem:[%s1 + $0x128] sm:$0xf]
    %v122 = vld [vmem:[%s1 + $0x12c] sm:$0xf]
    %v123 = vld [vmem:[%s1 + $0x130] sm:$0xf]
    %v124 = vld [vmem:[%s1 + $0x134] sm:$0xf]
    %v125 = vld [vmem:[%s1 + $0x138] sm:$0xf]
    %v126 = vld [vmem:[%s1 + $0x13c] sm:$0xf]
    %v127 = vld [vmem:[%s1 + $0x140] sm:$0xf]
    %v128 = vld [vmem:[%s1 + $0x144] sm:$0xf]
    %v129 = vld [vmem:[%s1 + $0x148] sm:$0xf]
    %v130 = vld [vmem:[%s1 + $0x14c] sm:$0xf]
    %v131 = vld [vmem:[%s1 + $0x150] sm:$0xf]
    %v132 = vld [vmem:[%s1 + $0x154] sm:$0xf]
    %v133 = vld [vmem:[%s1 + $0x158] sm:$0xf]
    %v134 = vld [vmem:[%s1 + $0x15c] sm:$0xf]
    %v135 = vld [vmem:[%s1 + $0x160] sm:$0xf]
    %v136 = vld [vmem:[%s1 + $0x164] sm:$0xf]
    %v137 = vld [vmem:[%s1 + $0x168] sm:$0xf]
    %v138 = vld [vmem:[%s1 + $0x16c] sm:$0xf]
    %v139 = vld [vmem:[%s1 + $0x170] sm:$0xf]
    %v140 = vld [vmem:[%s1 + $0x174] sm:$0xf]
    %v141 = vld [vmem:[%s1 + $0x178] sm:$0xf]
    %v142 = vld [vmem:[%s1 + $0x17c] sm:$0xf]
    %v143 = vld [vmem:[%s1 + $0x180] sm:$0xf]
    %v144 = vld [vmem:[%s1 + $0x184] sm:$0xf]
    %v145 = vld [vmem:[%s1 + $0x188] sm:$0xf]
    %v146 = vld [vmem:[%s1 + $0x18c] sm:$0xf]
    %v147 = vld [vmem:[%s1 + $0x190] sm:$0xf]
    %v148 = vld [vmem:[%s1 + $0x194] sm:$0xf]
    %v149 = vld [vmem:[%s1 + $0x198] sm:$0xf]
    %v150 = vld [vmem:[%s1 + $0x19c] sm:$0xf]
    %v151 = vld [vmem:[%s1 + $0x1a0] sm:$0xf]
    %v152 = vld [vmem:[%s1 + $0x1a4] sm:$0xf]
    %v153 = vld [vmem:[%s1 + $0x1a8] sm:$0xf]
    %v154 = vld [vmem:[%s1 + $0x1ac] sm:$0xf]
    %v155 = vld [vmem:[%s1 + $0x1b0] sm:$0xf]
    %v156 = vld [vmem:[%s1 + $0x1b4] sm:$0xf]
    %v157 = vld [vmem:[%s1 + $0x1b8] sm:$0xf]
    %v158 = vld [vmem:[%s1 + $0x1bc] sm:$0xf]
    %v159 = vld [vmem:[%s1 + $0x1c0] sm:$0xf]
    %v160 = vld [vmem:[%s1 + $0x1c4] sm:$0xf]
    %v161 = vld [vmem:[%s1 + $0x1c8] sm:$0xf]
    %v162 = vld [vmem:[%s1 + $0x1cc] sm:$0xf]
    %v163 = vld [vmem:[%s1 + $0x1d0] sm:$0xf]
    %v164 = vld [vmem:[%s1 + $0x1d4] sm:$0xf]
    %v165 = vld [vmem:[%s1 + $0x1d8] sm:$0xf]
    %v166 = vld [vmem:[%s1 + $0x1dc] sm:$0xf]
    %v167 = vld [vmem:[%s1 + $0x1e0] sm:$0xf]
    %v168 = vld [vmem:[%s1 + $0x1e4] sm:$0xf]
    %v169 = vld [vmem:[%s1 + $0x1e8] sm:$0xf]
    %v170 = vld [vmem:[%s1 + $0x1ec] sm:$0xf]
    %v171 = vld [vmem:[%s1 + $0x1f0] sm:$0xf]
    %v172 = vld [vmem:[%s1 + $0x1f4] sm:$0xf]
    %v173 = vld [vmem:[%s1 + $0x1f8] sm:$0xf]
    %v174 = vld [vmem:[%s1 + $0x1fc] sm:$0xf]
    %v191 = vunpack.c.l.b16 %v31
    %v192 = vunpack.c.h.b16 %v31
    %v193 = vunpack.c.l.b16 %v32
    %v194 = vunpack.c.h.b16 %v32
    %v195 = vunpack.c.l.b16 %v33
    %v196 = vunpack.c.h.b16 %v33
    %v197 = vunpack.c.l.b16 %v34
    %v198 = vunpack.c.h.b16 %v34
    %v199 = vunpack.c.l.b16 %v35
    %v200 = vunpack.c.h.b16 %v35
    %v201 = vunpack.c.l.b16 %v36
    %v202 = vunpack.c.h.b16 %v36
    %v203 = vunpack.c.l.b16 %v37
    %v204 = vunpack.c.h.b16 %v37
    %v205 = vunpack.c.l.b16 %v38
    %v206 = vunpack.c.h.b16 %v38
    %v207 = vunpack.c.l.b16 %v39
    %v208 = vunpack.c.h.b16 %v39
    %v209 = vunpack.c.l.b16 %v40
    %v210 = vunpack.c.h.b16 %v40
    %v211 = vunpack.c.l.b16 %v41
    %v212 = vunpack.c.h.b16 %v41
    %v213 = vunpack.c.l.b16 %v42
    %v214 = vunpack.c.h.b16 %v42
    %v215 = vunpack.c.l.b16 %v43
    %v216 = vunpack.c.h.b16 %v43
    %v217 = vunpack.c.l.b16 %v44
    %v218 = vunpack.c.h.b16 %v44
    %v219 = vunpack.c.l.b16 %v45
    %v220 = vunpack.c.h.b16 %v45
    %v221 = vunpack.c.l.b16 %v46
    %v222 = vunpack.c.h.b16 %v46
    %v223 = vpack.c.b16 %v199, %v191
    %v224 = vpack.c.b16 %v200, %v192
    %v225 = vpack.c.b16 %v201, %v193
    %v226 = vpack.c.b16 %v202, %v194
    %v227 = vpack.c.b16 %v203, %v195
    %v228 = vpack.c.b16 %v204, %v196
    %v229 = vpack.c.b16 %v205, %v197
    %v230 = vpack.c.b16 %v206, %v198
    %v231 = vpack.c.b16 %v215, %v207
    %v232 = vpack.c.b16 %v216, %v208
    %v233 = vpack.c.b16 %v217, %v209
    %v234 = vpack.c.b16 %v218, %v210
    %v235 = vpack.c.b16 %v219, %v211
    %v236 = vpack.c.b16 %v220, %v212
    %v237 = vpack.c.b16 %v221, %v213
    %v238 = vpack.c.b16 %v222, %v214
    %v383 = vunpack.c.l.b16 %v47
    %v384 = vunpack.c.l.b16 %v48
    %v385 = vunpack.c.l.b16 %v49
    %v386 = vunpack.c.l.b16 %v50
    %v387 = vunpack.c.l.b16 %v51
    %v388 = vunpack.c.l.b16 %v52
    %v389 = vunpack.c.l.b16 %v53
    %v390 = vunpack.c.l.b16 %v54
    %v391 = vunpack.c.l.b16 %v55
    %v392 = vunpack.c.l.b16 %v56
    %v393 = vunpack.c.l.b16 %v57
    %v394 = vunpack.c.l.b16 %v58
    %v395 = vunpack.c.l.b16 %v59
    %v396 = vunpack.c.l.b16 %v60
    %v397 = vunpack.c.l.b16 %v61
    %v398 = vunpack.c.l.b16 %v62
    %v399 = vunpack.c.l.b16 %v63
    %v400 = vunpack.c.l.b16 %v64
    %v401 = vunpack.c.l.b16 %v65
    %v402 = vunpack.c.l.b16 %v66
    %v403 = vunpack.c.l.b16 %v67
    %v404 = vunpack.c.l.b16 %v68
    %v405 = vunpack.c.l.b16 %v69
    %v406 = vunpack.c.l.b16 %v70
    %v407 = vunpack.c.l.b16 %v71
    %v408 = vunpack.c.l.b16 %v72
    %v409 = vunpack.c.l.b16 %v73
    %v410 = vunpack.c.l.b16 %v74
    %v411 = vunpack.c.l.b16 %v75
    %v412 = vunpack.c.l.b16 %v76
    %v413 = vunpack.c.l.b16 %v77
    %v414 = vunpack.c.l.b16 %v78
    %v415 = vunpack.c.l.b16 %v79
    %v416 = vunpack.c.l.b16 %v80
    %v417 = vunpack.c.l.b16 %v81
    %v418 = vunpack.c.l.b16 %v82
    %v419 = vunpack.c.l.b16 %v83
    %v420 = vunpack.c.l.b16 %v84
    %v421 = vunpack.c.l.b16 %v85
    %v422 = vunpack.c.l.b16 %v86
    %v423 = vunpack.c.l.b16 %v87
    %v424 = vunpack.c.l.b16 %v88
    %v425 = vunpack.c.l.b16 %v89
    %v426 = vunpack.c.l.b16 %v90
    %v427 = vunpack.c.l.b16 %v91
    %v428 = vunpack.c.l.b16 %v92
    %v429 = vunpack.c.l.b16 %v93
    %v430 = vunpack.c.l.b16 %v94
    %v431 = vunpack.c.l.b16 %v95
    %v432 = vunpack.c.l.b16 %v96
    %v433 = vunpack.c.l.b16 %v97
    %v434 = vunpack.c.l.b16 %v98
    %v435 = vunpack.c.l.b16 %v99
    %v436 = vunpack.c.l.b16 %v100
    %v437 = vunpack.c.l.b16 %v101
    %v438 = vunpack.c.l.b16 %v102
    %v439 = vunpack.c.l.b16 %v103
    %v440 = vunpack.c.l.b16 %v104
    %v441 = vunpack.c.l.b16 %v105
    %v442 = vunpack.c.l.b16 %v106
    %v443 = vunpack.c.l.b16 %v107
    %v444 = vunpack.c.l.b16 %v108
    %v445 = vunpack.c.l.b16 %v109
    %v446 = vunpack.c.l.b16 %v110
    %v447 = vunpack.c.l.b16 %v111
    %v448 = vunpack.c.l.b16 %v112
    %v449 = vunpack.c.l.b16 %v113
    %v450 = vunpack.c.l.b16 %v114
    %v451 = vunpack.c.l.b16 %v115
    %v452 = vunpack.c.l.b16 %v116
    %v453 = vunpack.c.l.b16 %v117
    %v454 = vunpack.c.l.b16 %v118
    %v455 = vunpack.c.l.b16 %v119
    %v456 = vunpack.c.l.b16 %v120
    %v457 = vunpack.c.l.b16 %v121
    %v458 = vunpack.c.l.b16 %v122
    %v459 = vunpack.c.l.b16 %v123
    %v460 = vunpack.c.l.b16 %v124
    %v461 = vunpack.c.l.b16 %v125
    %v462 = vunpack.c.l.b16 %v126
    %v463 = vunpack.c.l.b16 %v127
    %v464 = vunpack.c.l.b16 %v128
    %v465 = vunpack.c.l.b16 %v129
    %v466 = vunpack.c.l.b16 %v130
    %v467 = vunpack.c.l.b16 %v131
    %v468 = vunpack.c.l.b16 %v132
    %v469 = vunpack.c.l.b16 %v133
    %v470 = vunpack.c.l.b16 %v134
    %v471 = vunpack.c.l.b16 %v135
    %v472 = vunpack.c.l.b16 %v136
    %v473 = vunpack.c.l.b16 %v137
    %v474 = vunpack.c.l.b16 %v138
    %v475 = vunpack.c.l.b16 %v139
    %v476 = vunpack.c.l.b16 %v140
    %v477 = vunpack.c.l.b16 %v141
    %v478 = vunpack.c.l.b16 %v142
    %v479 = vunpack.c.l.b16 %v143
    %v480 = vunpack.c.l.b16 %v144
    %v481 = vunpack.c.l.b16 %v145
    %v482 = vunpack.c.l.b16 %v146
    %v483 = vunpack.c.l.b16 %v147
    %v484 = vunpack.c.l.b16 %v148
    %v485 = vunpack.c.l.b16 %v149
    %v486 = vunpack.c.l.b16 %v150
    %v487 = vunpack.c.l.b16 %v151
    %v488 = vunpack.c.l.b16 %v152
    %v489 = vunpack.c.l.b16 %v153
    %v490 = vunpack.c.l.b16 %v154
    %v491 = vunpack.c.l.b16 %v155
    %v492 = vunpack.c.l.b16 %v156
    %v493 = vunpack.c.l.b16 %v157
    %v494 = vunpack.c.l.b16 %v158
    %v495 = vunpack.c.l.b16 %v159
    %v496 = vunpack.c.l.b16 %v160
    %v497 = vunpack.c.l.b16 %v161
    %v498 = vunpack.c.l.b16 %v162
    %v499 = vunpack.c.l.b16 %v163
    %v500 = vunpack.c.l.b16 %v164
    %v501 = vunpack.c.l.b16 %v165
    %v502 = vunpack.c.l.b16 %v166
    %v503 = vunpack.c.l.b16 %v167
    %v504 = vunpack.c.l.b16 %v168
    %v505 = vunpack.c.l.b16 %v169
    %v506 = vunpack.c.l.b16 %v170
    %v507 = vunpack.c.l.b16 %v171
    %v508 = vunpack.c.l.b16 %v172
    %v509 = vunpack.c.l.b16 %v173
    %v510 = vunpack.c.l.b16 %v174
    %v511 = vpack.c.b16 %v384, %v383
    %v512 = vpack.c.b16 %v386, %v385
    %v513 = vpack.c.b16 %v388, %v387
    %v514 = vpack.c.b16 %v390, %v389
    %v515 = vpack.c.b16 %v392, %v391
    %v516 = vpack.c.b16 %v394, %v393
    %v517 = vpack.c.b16 %v396, %v395
    %v518 = vpack.c.b16 %v398, %v397
    %v519 = vpack.c.b16 %v400, %v399
    %v520 = vpack.c.b16 %v402, %v401
    %v521 = vpack.c.b16 %v404, %v403
    %v522 = vpack.c.b16 %v406, %v405
    %v523 = vpack.c.b16 %v408, %v407
    %v524 = vpack.c.b16 %v410, %v409
    %v525 = vpack.c.b16 %v412, %v411
    %v526 = vpack.c.b16 %v414, %v413
    %v527 = vpack.c.b16 %v416, %v415
    %v528 = vpack.c.b16 %v418, %v417
    %v529 = vpack.c.b16 %v420, %v419
    %v530 = vpack.c.b16 %v422, %v421
    %v531 = vpack.c.b16 %v424, %v423
    %v532 = vpack.c.b16 %v426, %v425
    %v533 = vpack.c.b16 %v428, %v427
    %v534 = vpack.c.b16 %v430, %v429
    %v535 = vpack.c.b16 %v432, %v431
    %v536 = vpack.c.b16 %v434, %v433
    %v537 = vpack.c.b16 %v436, %v435
    %v538 = vpack.c.b16 %v438, %v437
    %v539 = vpack.c.b16 %v440, %v439
    %v540 = vpack.c.b16 %v442, %v441
    %v541 = vpack.c.b16 %v444, %v443
    %v542 = vpack.c.b16 %v446, %v445
    %v543 = vpack.c.b16 %v448, %v447
    %v544 = vpack.c.b16 %v450, %v449
    %v545 = vpack.c.b16 %v452, %v451
    %v546 = vpack.c.b16 %v454, %v453
    %v547 = vpack.c.b16 %v456, %v455
    %v548 = vpack.c.b16 %v458, %v457
    %v549 = vpack.c.b16 %v460, %v459
    %v550 = vpack.c.b16 %v462, %v461
    %v551 = vpack.c.b16 %v464, %v463
    %v552 = vpack.c.b16 %v466, %v465
    %v553 = vpack.c.b16 %v468, %v467
    %v554 = vpack.c.b16 %v470, %v469
    %v555 = vpack.c.b16 %v472, %v471
    %v556 = vpack.c.b16 %v474, %v473
    %v557 = vpack.c.b16 %v476, %v475
    %v558 = vpack.c.b16 %v478, %v477
    %v559 = vpack.c.b16 %v480, %v479
    %v560 = vpack.c.b16 %v482, %v481
    %v561 = vpack.c.b16 %v484, %v483
    %v562 = vpack.c.b16 %v486, %v485
    %v563 = vpack.c.b16 %v488, %v487
    %v564 = vpack.c.b16 %v490, %v489
    %v565 = vpack.c.b16 %v492, %v491
    %v566 = vpack.c.b16 %v494, %v493
    %v567 = vpack.c.b16 %v496, %v495
    %v568 = vpack.c.b16 %v498, %v497
    %v569 = vpack.c.b16 %v500, %v499
    %v570 = vpack.c.b16 %v502, %v501
    %v571 = vpack.c.b16 %v504, %v503
    %v572 = vpack.c.b16 %v506, %v505
    %v573 = vpack.c.b16 %v508, %v507
    %v574 = vpack.c.b16 %v510, %v509
    %639 = vmatprep.subr.bf16.mxu0 0
    %640 = vmatpush1.bf16.msra.mxu0 %v518
    %641 = vmatprep.subr.bf16.mxu0 0
    %642 = vmatpush1.bf16.msra.mxu0 %v517
    %643 = vmatprep.subr.bf16.mxu0 0
    %644 = vmatpush1.bf16.msra.mxu0 %v516
    %645 = vmatprep.subr.bf16.mxu0 0
    %646 = vmatpush1.bf16.msra.mxu0 %v515
    %647 = vmatprep.subr.bf16.mxu0 0
    %648 = vmatpush1.bf16.msra.mxu0 %v514
    %649 = vmatprep.subr.bf16.mxu0 0
    %650 = vmatpush1.bf16.msra.mxu0 %v513
    %651 = vmatprep.subr.bf16.mxu0 0
    %652 = vmatpush1.bf16.msra.mxu0 %v512
    %653 = vmatprep.subr.bf16.mxu0 0
    %654 = vmatpush1.bf16.msra.mxu0 %v511
    %655 = vmatprep.subr.bf16.mxu0 0
    %656 = vmatpush2.bf16.msra.mxu0 %v526
    %657 = vmatprep.subr.bf16.mxu0 0
    %658 = vmatpush2.bf16.msra.mxu0 %v525
    %659 = vmatprep.subr.bf16.mxu0 0
    %660 = vmatpush2.bf16.msra.mxu0 %v524
    %661 = vmatprep.subr.bf16.mxu0 0
    %662 = vmatpush2.bf16.msra.mxu0 %v523
    %663 = vmatprep.subr.bf16.mxu0 0
    %664 = vmatpush2.bf16.msra.mxu0 %v522
    %665 = vmatprep.subr.bf16.mxu0 0
    %666 = vmatpush2.bf16.msra.mxu0 %v521
    %667 = vmatprep.subr.bf16.mxu0 0
    %668 = vmatpush2.bf16.msra.mxu0 %v520
    %669 = vmatprep.subr.bf16.mxu0 0
    %670 = vmatpush2.bf16.msra.mxu0 %v519
    %671 = vmatprep.mubr.bf16.mxu0 %v224
    %672 = vmatmul.mubr.bf16.gmra.mxu0 %v223
    %v673 = vpop.f32.mrf.mxu0
    %v674 = vadd.f32 0.0, %v673
    %v675 = vpop.f32.mrf.mxu0
    %v676 = vpop.f32.mrf.mxu0
    %v677 = vadd.f32 0.0, %v676
    %v678 = vpop.f32.mrf.mxu0
    %679 = vmatprep.mubr.bf16.mxu0 %v232
    %680 = vmatmul.mubr.bf16.gmra.mxu0 %v231
    %v681 = vpop.f32.mrf.mxu0
    %v682 = vadd.f32 0.0, %v681
    %v683 = vpop.f32.mrf.mxu0
    %v684 = vpop.f32.mrf.mxu0
    %v685 = vadd.f32 0.0, %v684
    %v686 = vpop.f32.mrf.mxu0
    %687 = vdwg.mxu0
    %688 = vmatprep.subr.bf16.mxu0 0
    %689 = vmatpush1.bf16.msra.mxu0 %v534
    %690 = vmatprep.subr.bf16.mxu0 0
    %691 = vmatpush1.bf16.msra.mxu0 %v533
    %692 = vmatprep.subr.bf16.mxu0 0
    %693 = vmatpush1.bf16.msra.mxu0 %v532
    %694 = vmatprep.subr.bf16.mxu0 0
    %695 = vmatpush1.bf16.msra.mxu0 %v531
    %696 = vmatprep.subr.bf16.mxu0 0
    %697 = vmatpush1.bf16.msra.mxu0 %v530
    %698 = vmatprep.subr.bf16.mxu0 0
    %699 = vmatpush1.bf16.msra.mxu0 %v529
    %700 = vmatprep.subr.bf16.mxu0 0
    %701 = vmatpush1.bf16.msra.mxu0 %v528
    %702 = vmatprep.subr.bf16.mxu0 0
    %703 = vmatpush1.bf16.msra.mxu0 %v527
    %704 = vmatprep.subr.bf16.mxu0 0
    %705 = vmatpush2.bf16.msra.mxu0 %v542
    %706 = vmatprep.subr.bf16.mxu0 0
    %707 = vmatpush2.bf16.msra.mxu0 %v541
    %708 = vmatprep.subr.bf16.mxu0 0
    %709 = vmatpush2.bf16.msra.mxu0 %v540
    %710 = vmatprep.subr.bf16.mxu0 0
    %711 = vmatpush2.bf16.msra.mxu0 %v539
    %712 = vmatprep.subr.bf16.mxu0 0
    %713 = vmatpush2.bf16.msra.mxu0 %v538
    %714 = vmatprep.subr.bf16.mxu0 0
    %715 = vmatpush2.bf16.msra.mxu0 %v537
    %716 = vmatprep.subr.bf16.mxu0 0
    %717 = vmatpush2.bf16.msra.mxu0 %v536
    %718 = vmatprep.subr.bf16.mxu0 0
    %719 = vmatpush2.bf16.msra.mxu0 %v535
    %720 = vmatprep.mubr.bf16.mxu0 %v226
    %721 = vmatmul.mubr.bf16.gmra.mxu0 %v225
    %v722 = vpop.f32.mrf.mxu0
    %v723 = vadd.f32 %v674, %v722
    %v724 = vpop.f32.mrf.mxu0
    %v725 = vpop.f32.mrf.mxu0
    %v726 = vadd.f32 %v677, %v725
    %v727 = vpop.f32.mrf.mxu0
    %728 = vmatprep.mubr.bf16.mxu0 %v234
    %729 = vmatmul.mubr.bf16.gmra.mxu0 %v233
    %v730 = vpop.f32.mrf.mxu0
    %v731 = vadd.f32 %v682, %v730
    %v732 = vpop.f32.mrf.mxu0
    %v733 = vpop.f32.mrf.mxu0
    %v734 = vadd.f32 %v685, %v733
    %v735 = vpop.f32.mrf.mxu0
    %736 = vdwg.mxu0
    %737 = vmatprep.subr.bf16.mxu0 0
    %738 = vmatpush1.bf16.msra.mxu0 %v550
    %739 = vmatprep.subr.bf16.mxu0 0
    %740 = vmatpush1.bf16.msra.mxu0 %v549
    %741 = vmatprep.subr.bf16.mxu0 0
    %742 = vmatpush1.bf16.msra.mxu0 %v548
    %743 = vmatprep.subr.bf16.mxu0 0
    %744 = vmatpush1.bf16.msra.mxu0 %v547
    %745 = vmatprep.subr.bf16.mxu0 0
    %746 = vmatpush1.bf16.msra.mxu0 %v546
    %747 = vmatprep.subr.bf16.mxu0 0
    %748 = vmatpush1.bf16.msra.mxu0 %v545
    %749 = vmatprep.subr.bf16.mxu0 0
    %750 = vmatpush1.bf16.msra.mxu0 %v544
    %751 = vmatprep.subr.bf16.mxu0 0
    %752 = vmatpush1.bf16.msra.mxu0 %v543
    %753 = vmatprep.subr.bf16.mxu0 0
    %754 = vmatpush2.bf16.msra.mxu0 %v558
    %755 = vmatprep.subr.bf16.mxu0 0
    %756 = vmatpush2.bf16.msra.mxu0 %v557
    %757 = vmatprep.subr.bf16.mxu0 0
    %758 = vmatpush2.bf16.msra.mxu0 %v556
    %759 = vmatprep.subr.bf16.mxu0 0
    %760 = vmatpush2.bf16.msra.mxu0 %v555
    %761 = vmatprep.subr.bf16.mxu0 0
    %762 = vmatpush2.bf16.msra.mxu0 %v554
    %763 = vmatprep.subr.bf16.mxu0 0
    %764 = vmatpush2.bf16.msra.mxu0 %v553
    %765 = vmatprep.subr.bf16.mxu0 0
    %766 = vmatpush2.bf16.msra.mxu0 %v552
    %767 = vmatprep.subr.bf16.mxu0 0
    %768 = vmatpush2.bf16.msra.mxu0 %v551
    %769 = vmatprep.mubr.bf16.mxu0 %v228
    %770 = vmatmul.mubr.bf16.gmra.mxu0 %v227
    %v771 = vpop.f32.mrf.mxu0
    %v772 = vadd.f32 %v723, %v771
    %v773 = vpop.f32.mrf.mxu0
    %v774 = vpop.f32.mrf.mxu0
    %v775 = vadd.f32 %v726, %v774
    %v776 = vpop.f32.mrf.mxu0
    %777 = vmatprep.mubr.bf16.mxu0 %v236
    %778 = vmatmul.mubr.bf16.gmra.mxu0 %v235
    %v779 = vpop.f32.mrf.mxu0
    %v780 = vadd.f32 %v731, %v779
    %v781 = vpop.f32.mrf.mxu0
    %v782 = vpop.f32.mrf.mxu0
    %v783 = vadd.f32 %v734, %v782
    %v784 = vpop.f32.mrf.mxu0
    %785 = vdwg.mxu0
    %786 = vmatprep.subr.bf16.mxu0 0
    %787 = vmatpush1.bf16.msra.mxu0 %v566
    %788 = vmatprep.subr.bf16.mxu0 0
    %789 = vmatpush1.bf16.msra.mxu0 %v565
    %790 = vmatprep.subr.bf16.mxu0 0
    %791 = vmatpush1.bf16.msra.mxu0 %v564
    %792 = vmatprep.subr.bf16.mxu0 0
    %793 = vmatpush1.bf16.msra.mxu0 %v563
    %794 = vmatprep.subr.bf16.mxu0 0
    %795 = vmatpush1.bf16.msra.mxu0 %v562
    %796 = vmatprep.subr.bf16.mxu0 0
    %797 = vmatpush1.bf16.msra.mxu0 %v561
    %798 = vmatprep.subr.bf16.mxu0 0
    %799 = vmatpush1.bf16.msra.mxu0 %v560
    %800 = vmatprep.subr.bf16.mxu0 0
    %801 = vmatpush1.bf16.msra.mxu0 %v559
    %802 = vmatprep.subr.bf16.mxu0 0
    %803 = vmatpush2.bf16.msra.mxu0 %v574
    %804 = vmatprep.subr.bf16.mxu0 0
    %805 = vmatpush2.bf16.msra.mxu0 %v573
    %806 = vmatprep.subr.bf16.mxu0 0
    %807 = vmatpush2.bf16.msra.mxu0 %v572
    %808 = vmatprep.subr.bf16.mxu0 0
    %809 = vmatpush2.bf16.msra.mxu0 %v571
    %810 = vmatprep.subr.bf16.mxu0 0
    %811 = vmatpush2.bf16.msra.mxu0 %v570
    %812 = vmatprep.subr.bf16.mxu0 0
    %813 = vmatpush2.bf16.msra.mxu0 %v569
    %814 = vmatprep.subr.bf16.mxu0 0
    %815 = vmatpush2.bf16.msra.mxu0 %v568
    %816 = vmatprep.subr.bf16.mxu0 0
    %817 = vmatpush2.bf16.msra.mxu0 %v567
    %818 = vmatprep.mubr.bf16.mxu0 %v230
    %819 = vmatmul.mubr.bf16.gmra.mxu0 %v229
    %v820 = vpop.f32.mrf.mxu0
    %v821 = vadd.f32 %v772, %v820
    %v822 = vpop.f32.mrf.mxu0
    %v823 = vpop.f32.mrf.mxu0
    %v824 = vadd.f32 %v775, %v823
    %v825 = vpop.f32.mrf.mxu0
    %826 = vmatprep.mubr.bf16.mxu0 %v238
    %827 = vmatmul.mubr.bf16.gmra.mxu0 %v237
    %v828 = vpop.f32.mrf.mxu0
    %v829 = vadd.f32 %v780, %v828
    %v830 = vpop.f32.mrf.mxu0
    %v831 = vpop.f32.mrf.mxu0
    %v832 = vadd.f32 %v783, %v831
    %v833 = vpop.f32.mrf.mxu0
    %834 = vdwg.mxu0
    %v835 = vadd.f32 %v821, %v824
    %v836 = vadd.f32 %v835, %v829
    %v837 = vadd.f32 %v836, %v832
    %v838 = vrot.slane %v837, 4
    %v839 = vadd.f32 %v837, %v838
    %v840 = vrot.slane %v839, 2
    %v841 = vadd.f32 %v839, %v840
    %v842 = vrot.slane %v841, 1
    %v843 = vadd.f32 %v841, %v842
    %v844 = vmul.f32 %v843, 0.03125
    %v845 = vmul.f32 %v821, %v821
    %v846 = vmul.f32 %v824, %v824
    %v847 = vmul.f32 %v829, %v829
    %v848 = vmul.f32 %v832, %v832
    %v849 = vadd.f32 %v845, %v846
    %v850 = vadd.f32 %v849, %v847
    %v851 = vadd.f32 %v850, %v848
    %v852 = vrot.slane %v851, 4
    %v853 = vadd.f32 %v851, %v852
    %v854 = vrot.slane %v853, 2
    %v855 = vadd.f32 %v853, %v854
    %v856 = vrot.slane %v855, 1
    %v857 = vadd.f32 %v855, %v856
    %v858 = vmul.f32 %v857, 0.03125
    %v859 = vmul.f32 %v844, %v844
    %v860 = vsub.f32 %v858, %v859
    %v861 = vmax.f32 %v860, 0.0
    %v862 = vld [vmem:[%s2] sm:$0x3]
    %v863 = vadd.f32 %v861, 1e-05
    %v864 = vrsqrt.pop %v863
    %v865 = vmul.f32 %v862, %v864
    %v866 = vsub.f32 %v821, %v844
    %v867 = vsub.f32 %v824, %v844
    %v868 = vsub.f32 %v829, %v844
    %v869 = vsub.f32 %v832, %v844
    %v870 = vlaneseq
    %v871 = vshrl.u32 %v870, 7
    %v872 = vsub.s32 0, %v871
    %v873 = vrot.slane %v865, %v872
    %v874 = vmul.f32 %v866, %v873
    %v875 = vmul.f32 %v867, %v873
    %v876 = vmul.f32 %v868, %v873
    %v877 = vmul.f32 %v869, %v873
    %v878 = vlaneseq
    %v879 = vshrl.u32 %v878, 7
    %v880 = vsub.s32 1, %v879
    %v881 = vrot.slane %v862, %v880
    %v882 = vadd.f32 %v874, %v881
    %v883 = vadd.f32 %v875, %v881
    %v884 = vadd.f32 %v876, %v881
    %v885 = vadd.f32 %v877, %v881
    %v886 = vmax.f32 %v882, 0.0
    %v887 = vmax.f32 %v883, 0.0
    %v888 = vmax.f32 %v884, 0.0
    %v889 = vmax.f32 %v885, 0.0
    %v890 = vadd.f32 %v886, %v887
    %v891 = vrot.slane %v890, 4
    %v892 = vadd.f32 %v890, %v891
    %v893 = vrot.slane %v892, 2
    %v894 = vadd.f32 %v892, %v893
    %v895 = vrot.slane %v894, 1
    %v896 = vadd.f32 %v894, %v895
    %v897 = vadd.f32 %v888, %v889
    %v898 = vrot.slane %v897, 4
    %v899 = vadd.f32 %v897, %v898
    %v900 = vrot.slane %v899, 2
    %v901 = vadd.f32 %v899, %v900
    %v902 = vrot.slane %v901, 1
    %v903 = vadd.f32 %v901, %v902
    %v904 = vrcp.pop 16.0
    %v905 = vmul.f32 %v896, %v904
    %v906 = vmul.f32 %v903, %v904
    %v907 = vmax.f32 %v886, %v887
    %v908 = vrot.slane %v907, 4
    %v909 = vmax.f32 %v907, %v908
    %v910 = vrot.slane %v909, 2
    %v911 = vmax.f32 %v909, %v910
    %v912 = vrot.slane %v911, 1
    %v913 = vmax.f32 %v911, %v912
    %v914 = vmax.f32 %v888, %v889
    %v915 = vrot.slane %v914, 4
    %v916 = vmax.f32 %v914, %v915
    %v917 = vrot.slane %v916, 2
    %v918 = vmax.f32 %v916, %v917
    %v919 = vrot.slane %v918, 1
    %v920 = vmax.f32 %v918, %v919
    %s921 = sld [smem:[#allocation2]]
    %s922 = sld [smem:[#allocation2 + $0x1]]
    %v923 = vstv %s921
    %v924 = vmul.f32 %v923, %v905
    %v925 = vmul.f32 %v923, %v906
    %v926 = vmax.f32 %v924, 0.0
    %v927 = vmax.f32 %v925, 0.0
    %v928 = vstv %s922
    %v929 = vmul.f32 %v928, %v926
    %v930 = vmul.f32 %v928, %v927
    %v931 = vmul.f32 %v923, %v913
    %v932 = vmul.f32 %v923, %v920
    %v933 = vmax.f32 %v931, 0.0
    %v934 = vmax.f32 %v932, 0.0
    %v935 = vmul.f32 %v928, %v933
    %v936 = vmul.f32 %v928, %v934
    %v937 = vadd.f32 %v929, %v935
    %v938 = vadd.f32 %v930, %v936
    %v939 = vxor.u32 %v937, 2147483648
    %v940 = vxor.u32 %v938, 2147483648
    %v941 = vmul.f32 %v939, 1.442695
    %v942 = vpow.pop %v941
    %v943 = vmul.f32 %v940, 1.442695
    %v944 = vpow.pop %v943
    %v945 = vadd.f32 %v942, 1.0
    %v946 = vadd.f32 %v944, 1.0
    %v947 = vrcp.pop %v945
    %v948 = vmul.f32 1.0, %v947
    %v949 = vrcp.pop %v946
    %v950 = vmul.f32 1.0, %v949
    %v951 = vmul.f32 %v886, %v948
    %v952 = vmul.f32 %v887, %v948
    %v953 = vmul.f32 %v888, %v950
    %v954 = vmul.f32 %v889, %v950
    %955 = vst [vmem:[%s4] sm:$0xff] %v951
    %956 = vst [vmem:[%s4 + $0x8] sm:$0xff] %v952
    %957 = vst [vmem:[%s4 + $0x10] sm:$0xff] %v953
    %958 = vst [vmem:[%s4 + $0x18] sm:$0xff] %v954
    // Predicated region
    $region22: #{generator_forward.16} parent=1 // pred_check
      _
    $region23: #{generator_forward.16} parent=1 // pred_check_branch
      %960 = sbr.rel (0) target = $region25
    $region24: #{generator_forward.16} parent=1 // pred_region
      _
    $region25: #{generator_forward.16} parent=1 // pred_fallthru
      _
    // Predicated region
    $region26: #{generator_forward.16} parent=1 // pred_check
      _
    $region27: #{generator_forward.16} parent=1 // pred_check_branch
      %962 = sbr.rel (0) target = $region29
    $region28: #{generator_forward.16} parent=1 // pred_region
      _
    $region29: #{generator_forward.16} parent=1 // pred_fallthru
      _
    %963 = vsyncpa [#allocation3], 1

// kernel: generator_forward.17
$region0: #{generator_forward.17}
  #allocation0 [shape = 'u32[]', space=smem, size = 0x4, offset = 0x4, fixed_abs, tag = 'smem constant byte address 0x4 - core index']
  #allocation1 [shape = 'u32[144,128]{1,0:T(1,128)}', space=vmem, size = 0x12000, scoped, tag = 'internal scratch']
  %s0 = inlined_call_operand.vmem [shape: bf16[128,512], index: 0, kind: input, shape index: {}]
  %s1 = inlined_call_operand.vmem [shape: bf16[512,128], index: 1, kind: input, shape index: {}]
  %s2 = inlined_call_operand.vmem [shape: f32[2,128], index: 2, kind: input, shape index: {}]
  %s3 = inlined_call_operand.vmem [shape: f32[2], index: 3, kind: input, shape index: {}]
  %s4 = inlined_call_operand.vmem [shape: f32[128,128], index: 4, kind: output, shape index: {}]
  %s5 = sld [smem:[#allocation0]]
  $region30: #{generator_forward.17} parent=0
    _
  %s7 = ssub.s32 1, %s5
  %s8 = scalar_select 0, %s7, %s5
  $region1: #{generator_forward.17} parent=0
    #allocation2 [shape = 'u8[512]{0}', space=smem, size = 0x200, scoped, tag = 'input window, operand 3, single buffered']
    #allocation3 [shape = 's32[1]{0}', space=sflag, size = 0x4, scoped, tag = 'scoped memory for generator_forward.17']
    %9 = vsyncpa [#allocation3], 0
    // Predicated region
    $region2: #{generator_forward.17} parent=1 // pred_check
      _
    $region3: #{generator_forward.17} parent=1 // pred_check_branch
      %11 = sbr.rel (0) target = $region5
    $region4: #{generator_forward.17} parent=1 // pred_region
      _
    $region5: #{generator_forward.17} parent=1 // pred_fallthru
      _
    // Predicated region
    $region6: #{generator_forward.17} parent=1 // pred_check
      _
    $region7: #{generator_forward.17} parent=1 // pred_check_branch
      %13 = sbr.rel (0) target = $region9
    $region8: #{generator_forward.17} parent=1 // pred_region
      _
    $region9: #{generator_forward.17} parent=1 // pred_fallthru
      _
    // Predicated region
    $region10: #{generator_forward.17} parent=1 // pred_check
      _
    $region11: #{generator_forward.17} parent=1 // pred_check_branch
      %15 = sbr.rel (0) target = $region13
    $region12: #{generator_forward.17} parent=1 // pred_region
      _
    $region13: #{generator_forward.17} parent=1 // pred_fallthru
      _
    // Predicated region
    $region14: #{generator_forward.17} parent=1 // pred_check
      _
    $region15: #{generator_forward.17} parent=1 // pred_check_branch
      %17 = sbr.rel (0) target = $region17
    $region16: #{generator_forward.17} parent=1 // pred_region
      %s19 = ssub.s32 16, 16
      %20 = vsyncadd [#allocation3], %s19
      %s22 = sshll.u32 %s3, 4
      %s23 = int_to_ptr.vmem [resolvable:$true] %s22
      %25 = dma.vmem_to_smem %s23, 16, [#allocation2], [#allocation3]
    $region17: #{generator_forward.17} parent=1 // pred_fallthru
      _
    // Predicated region
    $region18: #{generator_forward.17} parent=1 // pred_check
      _
    $region19: #{generator_forward.17} parent=1 // pred_check_branch
      %27 = sbr.rel (0) target = $region21
    $region20: #{generator_forward.17} parent=1 // pred_region
      %28 = dma.done [#allocation3], 16
    $region21: #{generator_forward.17} parent=1 // pred_fallthru
      _
    %29 = sfence
    %v31 = vld [vmem:[%s0] sm:$0xff]
    %v32 = vld [vmem:[%s0 + $0x8] sm:$0xff]
    %v33 = vld [vmem:[%s0 + $0x10] sm:$0xff]
    %v34 = vld [vmem:[%s0 + $0x18] sm:$0xff]
    %v35 = vld [vmem:[%s0 + $0x20] sm:$0xff]
    %v36 = vld [vmem:[%s0 + $0x28] sm:$0xff]
    %v37 = vld [vmem:[%s0 + $0x30] sm:$0xff]
    %v38 = vld [vmem:[%s0 + $0x38] sm:$0xff]
    %v39 = vld [vmem:[%s0 + $0x40] sm:$0xff]
    %v40 = vld [vmem:[%s0 + $0x48] sm:$0xff]
    %v41 = vld [vmem:[%s0 + $0x50] sm:$0xff]
    %v42 = vld [vmem:[%s0 + $0x58] sm:$0xff]
    %v43 = vld [vmem:[%s0 + $0x60] sm:$0xff]
    %v44 = vld [vmem:[%s0 + $0x68] sm:$0xff]
    %v45 = vld [vmem:[%s0 + $0x70] sm:$0xff]
    %v46 = vld [vmem:[%s0 + $0x78] sm:$0xff]
    %v47 = vld [vmem:[%s0 + $0x80] sm:$0xff]
    %v48 = vld [vmem:[%s0 + $0x88] sm:$0xff]
    %v49 = vld [vmem:[%s0 + $0x90] sm:$0xff]
    %v50 = vld [vmem:[%s0 + $0x98] sm:$0xff]
    %v51 = vld [vmem:[%s0 + $0xa0] sm:$0xff]
    %v52 = vld [vmem:[%s0 + $0xa8] sm:$0xff]
    %v53 = vld [vmem:[%s0 + $0xb0] sm:$0xff]
    %v54 = vld [vmem:[%s0 + $0xb8] sm:$0xff]
    %v55 = vld [vmem:[%s0 + $0xc0] sm:$0xff]
    %v56 = vld [vmem:[%s0 + $0xc8] sm:$0xff]
    %v57 = vld [vmem:[%s0 + $0xd0] sm:$0xff]
    %v58 = vld [vmem:[%s0 + $0xd8] sm:$0xff]
    %v59 = vld [vmem:[%s0 + $0xe0] sm:$0xff]
    %v60 = vld [vmem:[%s0 + $0xe8] sm:$0xff]
    %v61 = vld [vmem:[%s0 + $0xf0] sm:$0xff]
    %v62 = vld [vmem:[%s0 + $0xf8] sm:$0xff]
    %v63 = vld [vmem:[%s1] sm:$0xf]
    %v64 = vld [vmem:[%s1 + $0x4] sm:$0xf]
    %v65 = vld [vmem:[%s1 + $0x8] sm:$0xf]
    %v66 = vld [vmem:[%s1 + $0xc] sm:$0xf]
    %v67 = vld [vmem:[%s1 + $0x10] sm:$0xf]
    %v68 = vld [vmem:[%s1 + $0x14] sm:$0xf]
    %v69 = vld [vmem:[%s1 + $0x18] sm:$0xf]
    %v70 = vld [vmem:[%s1 + $0x1c] sm:$0xf]
    %v71 = vld [vmem:[%s1 + $0x20] sm:$0xf]
    %v72 = vld [vmem:[%s1 + $0x24] sm:$0xf]
    %v73 = vld [vmem:[%s1 + $0x28] sm:$0xf]
    %v74 = vld [vmem:[%s1 + $0x2c] sm:$0xf]
    %v75 = vld [vmem:[%s1 + $0x30] sm:$0xf]
    %v76 = vld [vmem:[%s1 + $0x34] sm:$0xf]
    %v77 = vld [vmem:[%s1 + $0x38] sm:$0xf]
    %v78 = vld [vmem:[%s1 + $0x3c] sm:$0xf]
    %v79 = vld [vmem:[%s1 + $0x40] sm:$0xf]
    %v80 = vld [vmem:[%s1 + $0x44] sm:$0xf]
    %v81 = vld [vmem:[%s1 + $0x48] sm:$0xf]
    %v82 = vld [vmem:[%s1 + $0x4c] sm:$0xf]
    %v83 = vld [vmem:[%s1 + $0x50] sm:$0xf]
    %v84 = vld [vmem:[%s1 + $0x54] sm:$0xf]
    %v85 = vld [vmem:[%s1 + $0x58] sm:$0xf]
    %v86 = vld [vmem:[%s1 + $0x5c] sm:$0xf]
    %v87 = vld [vmem:[%s1 + $0x60] sm:$0xf]
    %v88 = vld [vmem:[%s1 + $0x64] sm:$0xf]
    %v89 = vld [vmem:[%s1 + $0x68] sm:$0xf]
    %v90 = vld [vmem:[%s1 + $0x6c] sm:$0xf]
    %v91 = vld [vmem:[%s1 + $0x70] sm:$0xf]
    %v92 = vld [vmem:[%s1 + $0x74] sm:$0xf]
    %v93 = vld [vmem:[%s1 + $0x78] sm:$0xf]
    %v94 = vld [vmem:[%s1 + $0x7c] sm:$0xf]
    %v95 = vld [vmem:[%s1 + $0x80] sm:$0xf]
    %v96 = vld [vmem:[%s1 + $0x84] sm:$0xf]
    %v97 = vld [vmem:[%s1 + $0x88] sm:$0xf]
    %v98 = vld [vmem:[%s1 + $0x8c] sm:$0xf]
    %v99 = vld [vmem:[%s1 + $0x90] sm:$0xf]
    %v100 = vld [vmem:[%s1 + $0x94] sm:$0xf]
    %v101 = vld [vmem:[%s1 + $0x98] sm:$0xf]
    %v102 = vld [vmem:[%s1 + $0x9c] sm:$0xf]
    %v103 = vld [vmem:[%s1 + $0xa0] sm:$0xf]
    %v104 = vld [vmem:[%s1 + $0xa4] sm:$0xf]
    %v105 = vld [vmem:[%s1 + $0xa8] sm:$0xf]
    %v106 = vld [vmem:[%s1 + $0xac] sm:$0xf]
    %v107 = vld [vmem:[%s1 + $0xb0] sm:$0xf]
    %v108 = vld [vmem:[%s1 + $0xb4] sm:$0xf]
    %v109 = vld [vmem:[%s1 + $0xb8] sm:$0xf]
    %v110 = vld [vmem:[%s1 + $0xbc] sm:$0xf]
    %v111 = vld [vmem:[%s1 + $0xc0] sm:$0xf]
    %v112 = vld [vmem:[%s1 + $0xc4] sm:$0xf]
    %v113 = vld [vmem:[%s1 + $0xc8] sm:$0xf]
    %v114 = vld [vmem:[%s1 + $0xcc] sm:$0xf]
    %v115 = vld [vmem:[%s1 + $0xd0] sm:$0xf]
    %v116 = vld [vmem:[%s1 + $0xd4] sm:$0xf]
    %v117 = vld [vmem:[%s1 + $0xd8] sm:$0xf]
    %v118 = vld [vmem:[%s1 + $0xdc] sm:$0xf]
    %v119 = vld [vmem:[%s1 + $0xe0] sm:$0xf]
    %v120 = vld [vmem:[%s1 + $0xe4] sm:$0xf]
    %v121 = vld [vmem:[%s1 + $0xe8] sm:$0xf]
    %v122 = vld [vmem:[%s1 + $0xec] sm:$0xf]
    %v123 = vld [vmem:[%s1 + $0xf0] sm:$0xf]
    %v124 = vld [vmem:[%s1 + $0xf4] sm:$0xf]
    %v125 = vld [vmem:[%s1 + $0xf8] sm:$0xf]
    %v126 = vld [vmem:[%s1 + $0xfc] sm:$0xf]
    %v159 = vunpack.c.l.b16 %v31
    %v160 = vunpack.c.h.b16 %v31
    %v161 = vunpack.c.l.b16 %v32
    %v162 = vunpack.c.h.b16 %v32
    %v163 = vunpack.c.l.b16 %v33
    %v164 = vunpack.c.h.b16 %v33
    %v165 = vunpack.c.l.b16 %v34
    %v166 = vunpack.c.h.b16 %v34
    %v167 = vunpack.c.l.b16 %v35
    %v168 = vunpack.c.h.b16 %v35
    %v169 = vunpack.c.l.b16 %v36
    %v170 = vunpack.c.h.b16 %v36
    %v171 = vunpack.c.l.b16 %v37
    %v172 = vunpack.c.h.b16 %v37
    %v173 = vunpack.c.l.b16 %v38
    %v174 = vunpack.c.h.b16 %v38
    %v175 = vunpack.c.l.b16 %v39
    %v176 = vunpack.c.h.b16 %v39
    %v177 = vunpack.c.l.b16 %v40
    %v178 = vunpack.c.h.b16 %v40
    %v179 = vunpack.c.l.b16 %v41
    %v180 = vunpack.c.h.b16 %v41
    %v181 = vunpack.c.l.b16 %v42
    %v182 = vunpack.c.h.b16 %v42
    %v183 = vunpack.c.l.b16 %v43
    %v184 = vunpack.c.h.b16 %v43
    %v185 = vunpack.c.l.b16 %v44
    %v186 = vunpack.c.h.b16 %v44
    %v187 = vunpack.c.l.b16 %v45
    %v188 = vunpack.c.h.b16 %v45
    %v189 = vunpack.c.l.b16 %v46
    %v190 = vunpack.c.h.b16 %v46
    %v191 = vunpack.c.l.b16 %v47
    %v192 = vunpack.c.h.b16 %v47
    %v193 = vunpack.c.l.b16 %v48
    %v194 = vunpack.c.h.b16 %v48
    %v195 = vunpack.c.l.b16 %v49
    %v196 = vunpack.c.h.b16 %v49
    %v197 = vunpack.c.l.b16 %v50
    %v198 = vunpack.c.h.b16 %v50
    %v199 = vunpack.c.l.b16 %v51
    %v200 = vunpack.c.h.b16 %v51
    %v201 = vunpack.c.l.b16 %v52
    %v202 = vunpack.c.h.b16 %v52
    %v203 = vunpack.c.l.b16 %v53
    %v204 = vunpack.c.h.b16 %v53
    %v205 = vunpack.c.l.b16 %v54
    %v206 = vunpack.c.h.b16 %v54
    %v207 = vunpack.c.l.b16 %v55
    %v208 = vunpack.c.h.b16 %v55
    %v209 = vunpack.c.l.b16 %v56
    %v210 = vunpack.c.h.b16 %v56
    %v211 = vunpack.c.l.b16 %v57
    %v212 = vunpack.c.h.b16 %v57
    %v213 = vunpack.c.l.b16 %v58
    %v214 = vunpack.c.h.b16 %v58
    %v215 = vunpack.c.l.b16 %v59
    %v216 = vunpack.c.h.b16 %v59
    %v217 = vunpack.c.l.b16 %v60
    %v218 = vunpack.c.h.b16 %v60
    %v219 = vunpack.c.l.b16 %v61
    %v220 = vunpack.c.h.b16 %v61
    %v221 = vunpack.c.l.b16 %v62
    %v222 = vunpack.c.h.b16 %v62
    %v223 = vpack.c.b16 %v163, %v159
    %v224 = vpack.c.b16 %v164, %v160
    %v225 = vpack.c.b16 %v165, %v161
    %v226 = vpack.c.b16 %v166, %v162
    %v227 = vpack.c.b16 %v171, %v167
    %v228 = vpack.c.b16 %v172, %v168
    %v229 = vpack.c.b16 %v173, %v169
    %v230 = vpack.c.b16 %v174, %v170
    %v231 = vpack.c.b16 %v179, %v175
    %v232 = vpack.c.b16 %v180, %v176
    %v233 = vpack.c.b16 %v181, %v177
    %v234 = vpack.c.b16 %v182, %v178
    %v235 = vpack.c.b16 %v187, %v183
    %v236 = vpack.c.b16 %v188, %v184
    %v237 = vpack.c.b16 %v189, %v185
    %v238 = vpack.c.b16 %v190, %v186
    %v239 = vpack.c.b16 %v195, %v191
    %v240 = vpack.c.b16 %v196, %v192
    %v241 = vpack.c.b16 %v197, %v193
    %v242 = vpack.c.b16 %v198, %v194
    %v243 = vpack.c.b16 %v203, %v199
    %v244 = vpack.c.b16 %v204, %v200
    %v245 = vpack.c.b16 %v205, %v201
    %v246 = vpack.c.b16 %v206, %v202
    %v247 = vpack.c.b16 %v211, %v207
    %v248 = vpack.c.b16 %v212, %v208
    %v249 = vpack.c.b16 %v213, %v209
    %v250 = vpack.c.b16 %v214, %v210
    %v251 = vpack.c.b16 %v219, %v215
    %v252 = vpack.c.b16 %v220, %v216
    %v253 = vpack.c.b16 %v221, %v217
    %v254 = vpack.c.b16 %v222, %v218
    %v351 = vunpack.c.l.b16 %v63
    %v352 = vunpack.c.l.b16 %v64
    %v353 = vunpack.c.l.b16 %v65
    %v354 = vunpack.c.l.b16 %v66
    %v355 = vunpack.c.l.b16 %v67
    %v356 = vunpack.c.l.b16 %v68
    %v357 = vunpack.c.l.b16 %v69
    %v358 = vunpack.c.l.b16 %v70
    %v359 = vunpack.c.l.b16 %v71
    %v360 = vunpack.c.l.b16 %v72
    %v361 = vunpack.c.l.b16 %v73
    %v362 = vunpack.c.l.b16 %v74
    %v363 = vunpack.c.l.b16 %v75
    %v364 = vunpack.c.l.b16 %v76
    %v365 = vunpack.c.l.b16 %v77
    %v366 = vunpack.c.l.b16 %v78
    %v367 = vunpack.c.l.b16 %v79
    %v368 = vunpack.c.l.b16 %v80
    %v369 = vunpack.c.l.b16 %v81
    %v370 = vunpack.c.l.b16 %v82
    %v371 = vunpack.c.l.b16 %v83
    %v372 = vunpack.c.l.b16 %v84
    %v373 = vunpack.c.l.b16 %v85
    %v374 = vunpack.c.l.b16 %v86
    %v375 = vunpack.c.l.b16 %v87
    %v376 = vunpack.c.l.b16 %v88
    %v377 = vunpack.c.l.b16 %v89
    %v378 = vunpack.c.l.b16 %v90
    %v379 = vunpack.c.l.b16 %v91
    %v380 = vunpack.c.l.b16 %v92
    %v381 = vunpack.c.l.b16 %v93
    %v382 = vunpack.c.l.b16 %v94
    %v383 = vunpack.c.l.b16 %v95
    %v384 = vunpack.c.l.b16 %v96
    %v385 = vunpack.c.l.b16 %v97
    %v386 = vunpack.c.l.b16 %v98
    %v387 = vunpack.c.l.b16 %v99
    %v388 = vunpack.c.l.b16 %v100
    %v389 = vunpack.c.l.b16 %v101
    %v390 = vunpack.c.l.b16 %v102
    %v391 = vunpack.c.l.b16 %v103
    %v392 = vunpack.c.l.b16 %v104
    %v393 = vunpack.c.l.b16 %v105
    %v394 = vunpack.c.l.b16 %v106
    %v395 = vunpack.c.l.b16 %v107
    %v396 = vunpack.c.l.b16 %v108
    %v397 = vunpack.c.l.b16 %v109
    %v398 = vunpack.c.l.b16 %v110
    %v399 = vunpack.c.l.b16 %v111
    %v400 = vunpack.c.l.b16 %v112
    %v401 = vunpack.c.l.b16 %v113
    %v402 = vunpack.c.l.b16 %v114
    %v403 = vunpack.c.l.b16 %v115
    %v404 = vunpack.c.l.b16 %v116
    %v405 = vunpack.c.l.b16 %v117
    %v406 = vunpack.c.l.b16 %v118
    %v407 = vunpack.c.l.b16 %v119
    %v408 = vunpack.c.l.b16 %v120
    %v409 = vunpack.c.l.b16 %v121
    %v410 = vunpack.c.l.b16 %v122
    %v411 = vunpack.c.l.b16 %v123
    %v412 = vunpack.c.l.b16 %v124
    %v413 = vunpack.c.l.b16 %v125
    %v414 = vunpack.c.l.b16 %v126
    %v415 = vpack.c.b16 %v352, %v351
    %v416 = vpack.c.b16 %v354, %v353
    %v417 = vpack.c.b16 %v356, %v355
    %v418 = vpack.c.b16 %v358, %v357
    %v419 = vpack.c.b16 %v360, %v359
    %v420 = vpack.c.b16 %v362, %v361
    %v421 = vpack.c.b16 %v364, %v363
    %v422 = vpack.c.b16 %v366, %v365
    %v423 = vpack.c.b16 %v368, %v367
    %v424 = vpack.c.b16 %v370, %v369
    %v425 = vpack.c.b16 %v372, %v371
    %v426 = vpack.c.b16 %v374, %v373
    %v427 = vpack.c.b16 %v376, %v375
    %v428 = vpack.c.b16 %v378, %v377
    %v429 = vpack.c.b16 %v380, %v379
    %v430 = vpack.c.b16 %v382, %v381
    %v431 = vpack.c.b16 %v384, %v383
    %v432 = vpack.c.b16 %v386, %v385
    %v433 = vpack.c.b16 %v388, %v387
    %v434 = vpack.c.b16 %v390, %v389
    %v435 = vpack.c.b16 %v392, %v391
    %v436 = vpack.c.b16 %v394, %v393
    %v437 = vpack.c.b16 %v396, %v395
    %v438 = vpack.c.b16 %v398, %v397
    %v439 = vpack.c.b16 %v400, %v399
    %v440 = vpack.c.b16 %v402, %v401
    %v441 = vpack.c.b16 %v404, %v403
    %v442 = vpack.c.b16 %v406, %v405
    %v443 = vpack.c.b16 %v408, %v407
    %v444 = vpack.c.b16 %v410, %v409
    %v445 = vpack.c.b16 %v412, %v411
    %v446 = vpack.c.b16 %v414, %v413
    %479 = vmatprep.subr.bf16.mxu0 0
    %480 = vmatpush1.bf16.msra.mxu0 %v422
    %481 = vmatprep.subr.bf16.mxu0 0
    %482 = vmatpush1.bf16.msra.mxu0 %v421
    %483 = vmatprep.subr.bf16.mxu0 0
    %484 = vmatpush1.bf16.msra.mxu0 %v420
    %485 = vmatprep.subr.bf16.mxu0 0
    %486 = vmatpush1.bf16.msra.mxu0 %v419
    %487 = vmatprep.subr.bf16.mxu0 0
    %488 = vmatpush1.bf16.msra.mxu0 %v418
    %489 = vmatprep.subr.bf16.mxu0 0
    %490 = vmatpush1.bf16.msra.mxu0 %v417
    %491 = vmatprep.subr.bf16.mxu0 0
    %492 = vmatpush1.bf16.msra.mxu0 %v416
    %493 = vmatprep.subr.bf16.mxu0 0
    %494 = vmatpush1.bf16.msra.mxu0 %v415
    %495 = vmatprep.subr.bf16.mxu0 0
    %496 = vmatpush2.bf16.msra.mxu0 %v430
    %497 = vmatprep.subr.bf16.mxu0 0
    %498 = vmatpush2.bf16.msra.mxu0 %v429
    %499 = vmatprep.subr.bf16.mxu0 0
    %500 = vmatpush2.bf16.msra.mxu0 %v428
    %501 = vmatprep.subr.bf16.mxu0 0
    %502 = vmatpush2.bf16.msra.mxu0 %v427
    %503 = vmatprep.subr.bf16.mxu0 0
    %504 = vmatpush2.bf16.msra.mxu0 %v426
    %505 = vmatprep.subr.bf16.mxu0 0
    %506 = vmatpush2.bf16.msra.mxu0 %v425
    %507 = vmatprep.subr.bf16.mxu0 0
    %508 = vmatpush2.bf16.msra.mxu0 %v424
    %509 = vmatprep.subr.bf16.mxu0 0
    %510 = vmatpush2.bf16.msra.mxu0 %v423
    %511 = vmatprep.mubr.bf16.mxu0 %v224
    %512 = vmatmul.mubr.bf16.gmra.mxu0 %v223
    %v513 = vpop.f32.mrf.mxu0
    %v514 = vadd.f32 0.0, %v513
    %v515 = vpop.f32.mrf.mxu0
    %v516 = vpop.f32.mrf.mxu0
    %v517 = vadd.f32 0.0, %v516
    %v518 = vpop.f32.mrf.mxu0
    %519 = vmatprep.mubr.bf16.mxu0 %v228
    %520 = vmatmul.mubr.bf16.gmra.mxu0 %v227
    %v521 = vpop.f32.mrf.mxu0
    %v522 = vadd.f32 0.0, %v521
    %v523 = vpop.f32.mrf.mxu0
    %v524 = vpop.f32.mrf.mxu0
    %v525 = vadd.f32 0.0, %v524
    %v526 = vpop.f32.mrf.mxu0
    %527 = vmatprep.mubr.bf16.mxu0 %v232
    %528 = vmatmul.mubr.bf16.gmra.mxu0 %v231
    %v529 = vpop.f32.mrf.mxu0
    %v530 = vadd.f32 0.0, %v529
    %v531 = vpop.f32.mrf.mxu0
    %v532 = vpop.f32.mrf.mxu0
    %v533 = vadd.f32 0.0, %v532
    %v534 = vpop.f32.mrf.mxu0
    %535 = vmatprep.mubr.bf16.mxu0 %v236
    %536 = vmatmul.mubr.bf16.gmra.mxu0 %v235
    %v537 = vpop.f32.mrf.mxu0
    %v538 = vadd.f32 0.0, %v537
    %v539 = vpop.f32.mrf.mxu0
    %v540 = vpop.f32.mrf.mxu0
    %v541 = vadd.f32 0.0, %v540
    %v542 = vpop.f32.mrf.mxu0
    %543 = vmatprep.mubr.bf16.mxu0 %v240
    %544 = vmatmul.mubr.bf16.gmra.mxu0 %v239
    %v545 = vpop.f32.mrf.mxu0
    %v546 = vadd.f32 0.0, %v545
    %v547 = vpop.f32.mrf.mxu0
    %v548 = vpop.f32.mrf.mxu0
    %v549 = vadd.f32 0.0, %v548
    %v550 = vpop.f32.mrf.mxu0
    %551 = vmatprep.mubr.bf16.mxu0 %v244
    %552 = vmatmul.mubr.bf16.gmra.mxu0 %v243
    %v553 = vpop.f32.mrf.mxu0
    %v554 = vadd.f32 0.0, %v553
    %v555 = vpop.f32.mrf.mxu0
    %v556 = vpop.f32.mrf.mxu0
    %v557 = vadd.f32 0.0, %v556
    %v558 = vpop.f32.mrf.mxu0
    %559 = vmatprep.mubr.bf16.mxu0 %v248
    %560 = vmatmul.mubr.bf16.gmra.mxu0 %v247
    %v561 = vpop.f32.mrf.mxu0
    %v562 = vadd.f32 0.0, %v561
    %v563 = vpop.f32.mrf.mxu0
    %v564 = vpop.f32.mrf.mxu0
    %v565 = vadd.f32 0.0, %v564
    %v566 = vpop.f32.mrf.mxu0
    %567 = vmatprep.mubr.bf16.mxu0 %v252
    %568 = vmatmul.mubr.bf16.gmra.mxu0 %v251
    %v569 = vpop.f32.mrf.mxu0
    %v570 = vadd.f32 0.0, %v569
    %v571 = vpop.f32.mrf.mxu0
    %v572 = vpop.f32.mrf.mxu0
    %v573 = vadd.f32 0.0, %v572
    %v574 = vpop.f32.mrf.mxu0
    %575 = vdwg.mxu0
    %576 = vmatprep.subr.bf16.mxu0 0
    %577 = vmatpush1.bf16.msra.mxu0 %v438
    %578 = vmatprep.subr.bf16.mxu0 0
    %579 = vmatpush1.bf16.msra.mxu0 %v437
    %580 = vmatprep.subr.bf16.mxu0 0
    %581 = vmatpush1.bf16.msra.mxu0 %v436
    %582 = vmatprep.subr.bf16.mxu0 0
    %583 = vmatpush1.bf16.msra.mxu0 %v435
    %584 = vmatprep.subr.bf16.mxu0 0
    %585 = vmatpush1.bf16.msra.mxu0 %v434
    %586 = vmatprep.subr.bf16.mxu0 0
    %587 = vmatpush1.bf16.msra.mxu0 %v433
    %588 = vmatprep.subr.bf16.mxu0 0
    %589 = vmatpush1.bf16.msra.mxu0 %v432
    %590 = vmatprep.subr.bf16.mxu0 0
    %591 = vmatpush1.bf16.msra.mxu0 %v431
    %592 = vmatprep.subr.bf16.mxu0 0
    %593 = vmatpush2.bf16.msra.mxu0 %v446
    %594 = vmatprep.subr.bf16.mxu0 0
    %595 = vmatpush2.bf16.msra.mxu0 %v445
    %596 = vmatprep.subr.bf16.mxu0 0
    %597 = vmatpush2.bf16.msra.mxu0 %v444
    %598 = vmatprep.subr.bf16.mxu0 0
    %599 = vmatpush2.bf16.msra.mxu0 %v443
    %600 = vmatprep.subr.bf16.mxu0 0
    %601 = vmatpush2.bf16.msra.mxu0 %v442
    %602 = vmatprep.subr.bf16.mxu0 0
    %603 = vmatpush2.bf16.msra.mxu0 %v441
    %604 = vmatprep.subr.bf16.mxu0 0
    %605 = vmatpush2.bf16.msra.mxu0 %v440
    %606 = vmatprep.subr.bf16.mxu0 0
    %607 = vmatpush2.bf16.msra.mxu0 %v439
    %608 = vmatprep.mubr.bf16.mxu0 %v226
    %609 = vmatmul.mubr.bf16.gmra.mxu0 %v225
    %v610 = vpop.f32.mrf.mxu0
    %v611 = vadd.f32 %v514, %v610
    %v612 = vpop.f32.mrf.mxu0
    %v613 = vpop.f32.mrf.mxu0
    %v614 = vadd.f32 %v517, %v613
    %v615 = vpop.f32.mrf.mxu0
    %616 = vmatprep.mubr.bf16.mxu0 %v230
    %617 = vmatmul.mubr.bf16.gmra.mxu0 %v229
    %v618 = vpop.f32.mrf.mxu0
    %v619 = vadd.f32 %v522, %v618
    %v620 = vpop.f32.mrf.mxu0
    %v621 = vpop.f32.mrf.mxu0
    %v622 = vadd.f32 %v525, %v621
    %v623 = vpop.f32.mrf.mxu0
    %624 = vmatprep.mubr.bf16.mxu0 %v234
    %625 = vmatmul.mubr.bf16.gmra.mxu0 %v233
    %v626 = vpop.f32.mrf.mxu0
    %v627 = vadd.f32 %v530, %v626
    %v628 = vpop.f32.mrf.mxu0
    %v629 = vpop.f32.mrf.mxu0
    %v630 = vadd.f32 %v533, %v629
    %v631 = vpop.f32.mrf.mxu0
    %632 = vmatprep.mubr.bf16.mxu0 %v238
    %633 = vmatmul.mubr.bf16.gmra.mxu0 %v237
    %v634 = vpop.f32.mrf.mxu0
    %v635 = vadd.f32 %v538, %v634
    %v636 = vpop.f32.mrf.mxu0
    %v637 = vpop.f32.mrf.mxu0
    %v638 = vadd.f32 %v541, %v637
    %v639 = vpop.f32.mrf.mxu0
    %640 = vmatprep.mubr.bf16.mxu0 %v242
    %641 = vmatmul.mubr.bf16.gmra.mxu0 %v241
    %v642 = vpop.f32.mrf.mxu0
    %v643 = vadd.f32 %v546, %v642
    %v644 = vpop.f32.mrf.mxu0
    %v645 = vpop.f32.mrf.mxu0
    %v646 = vadd.f32 %v549, %v645
    %v647 = vpop.f32.mrf.mxu0
    %648 = vmatprep.mubr.bf16.mxu0 %v246
    %649 = vmatmul.mubr.bf16.gmra.mxu0 %v245
    %v650 = vpop.f32.mrf.mxu0
    %v651 = vadd.f32 %v554, %v650
    %v652 = vpop.f32.mrf.mxu0
    %v653 = vpop.f32.mrf.mxu0
    %v654 = vadd.f32 %v557, %v653
    %v655 = vpop.f32.mrf.mxu0
    %656 = vmatprep.mubr.bf16.mxu0 %v250
    %657 = vmatmul.mubr.bf16.gmra.mxu0 %v249
    %v658 = vpop.f32.mrf.mxu0
    %v659 = vadd.f32 %v562, %v658
    %v660 = vpop.f32.mrf.mxu0
    %v661 = vpop.f32.mrf.mxu0
    %v662 = vadd.f32 %v565, %v661
    %v663 = vpop.f32.mrf.mxu0
    %664 = vmatprep.mubr.bf16.mxu0 %v254
    %665 = vmatmul.mubr.bf16.gmra.mxu0 %v253
    %v666 = vpop.f32.mrf.mxu0
    %v667 = vadd.f32 %v570, %v666
    %v668 = vpop.f32.mrf.mxu0
    %v669 = vpop.f32.mrf.mxu0
    %v670 = vadd.f32 %v573, %v669
    %v671 = vpop.f32.mrf.mxu0
    %672 = vdwg.mxu0
    %v673 = vadd.f32 %v611, %v614
    %v674 = vadd.f32 %v673, %v619
    %v675 = vadd.f32 %v674, %v622
    %v676 = vadd.f32 %v675, %v627
    %v677 = vadd.f32 %v676, %v630
    %v678 = vadd.f32 %v677, %v635
    %v679 = vadd.f32 %v678, %v638
    %v680 = vadd.f32 %v679, %v643
    %v681 = vadd.f32 %v680, %v646
    %v682 = vadd.f32 %v681, %v651
    %v683 = vadd.f32 %v682, %v654
    %v684 = vadd.f32 %v683, %v659
    %v685 = vadd.f32 %v684, %v662
    %v686 = vadd.f32 %v685, %v667
    %v687 = vadd.f32 %v686, %v670
    %v688 = vrot.slane %v687, 4
    %v689 = vadd.f32 %v687, %v688
    %v690 = vrot.slane %v689, 2
    %v691 = vadd.f32 %v689, %v690
    %v692 = vrot.slane %v691, 1
    %v693 = vadd.f32 %v691, %v692
    %v694 = vmul.f32 %v693, 0.0078125
    %v695 = vmul.f32 %v611, %v611
    %v696 = vmul.f32 %v614, %v614
    %v697 = vmul.f32 %v619, %v619
    %v698 = vmul.f32 %v622, %v622
    %v699 = vmul.f32 %v627, %v627
    %v700 = vmul.f32 %v630, %v630
    %v701 = vmul.f32 %v635, %v635
    %v702 = vmul.f32 %v638, %v638
    %v703 = vmul.f32 %v643, %v643
    %v704 = vmul.f32 %v646, %v646
    %v705 = vmul.f32 %v651, %v651
    %v706 = vmul.f32 %v654, %v654
    %v707 = vmul.f32 %v659, %v659
    %v708 = vmul.f32 %v662, %v662
    %v709 = vmul.f32 %v667, %v667
    %v710 = vmul.f32 %v670, %v670
    %v711 = vadd.f32 %v695, %v696
    %v712 = vadd.f32 %v711, %v697
    %v713 = vadd.f32 %v712, %v698
    %v714 = vadd.f32 %v713, %v699
    %v715 = vadd.f32 %v714, %v700
    %v716 = vadd.f32 %v715, %v701
    %v717 = vadd.f32 %v716, %v702
    %v718 = vadd.f32 %v717, %v703
    %v719 = vadd.f32 %v718, %v704
    %v720 = vadd.f32 %v719, %v705
    %v721 = vadd.f32 %v720, %v706
    %v722 = vadd.f32 %v721, %v707
    %v723 = vadd.f32 %v722, %v708
    %v724 = vadd.f32 %v723, %v709
    %v725 = vadd.f32 %v724, %v710
    %v726 = vrot.slane %v725, 4
    %v727 = vadd.f32 %v725, %v726
    %v728 = vrot.slane %v727, 2
    %v729 = vadd.f32 %v727, %v728
    %v730 = vrot.slane %v729, 1
    %v731 = vadd.f32 %v729, %v730
    %v732 = vmul.f32 %v731, 0.0078125
    %v733 = vmul.f32 %v694, %v694
    %v734 = vsub.f32 %v732, %v733
    %v735 = vmax.f32 %v734, 0.0
    %v736 = vld [vmem:[%s2] sm:$0x3]
    %v737 = vadd.f32 %v735, 1e-05
    %v738 = vrsqrt.pop %v737
    %v739 = vmul.f32 %v736, %v738
    %v740 = vsub.f32 %v611, %v694
    %v741 = vsub.f32 %v614, %v694
    %v742 = vsub.f32 %v619, %v694
    %v743 = vsub.f32 %v622, %v694
    %v744 = vsub.f32 %v627, %v694
    %v745 = vsub.f32 %v630, %v694
    %v746 = vsub.f32 %v635, %v694
    %v747 = vsub.f32 %v638, %v694
    %v748 = vsub.f32 %v643, %v694
    %v749 = vsub.f32 %v646, %v694
    %v750 = vsub.f32 %v651, %v694
    %v751 = vsub.f32 %v654, %v694
    %v752 = vsub.f32 %v659, %v694
    %v753 = vsub.f32 %v662, %v694
    %v754 = vsub.f32 %v667, %v694
    %v755 = vsub.f32 %v670, %v694
    %v756 = vlaneseq
    %v757 = vshrl.u32 %v756, 7
    %v758 = vsub.s32 0, %v757
    %v759 = vrot.slane %v739, %v758
    %v760 = vmul.f32 %v740, %v759
    %v761 = vmul.f32 %v741, %v759
    %v762 = vmul.f32 %v742, %v759
    %v763 = vmul.f32 %v743, %v759
    %v764 = vmul.f32 %v744, %v759
    %v765 = vmul.f32 %v745, %v759
    %v766 = vmul.f32 %v746, %v759
    %v767 = vmul.f32 %v747, %v759
    %v768 = vmul.f32 %v748, %v759
    %v769 = vmul.f32 %v749, %v759
    %v770 = vmul.f32 %v750, %v759
    %v771 = vmul.f32 %v751, %v759
    %v772 = vmul.f32 %v752, %v759
    %v773 = vmul.f32 %v753, %v759
    %v774 = vmul.f32 %v754, %v759
    %v775 = vmul.f32 %v755, %v759
    %v776 = vlaneseq
    %v777 = vshrl.u32 %v776, 7
    %v778 = vsub.s32 1, %v777
    %v779 = vrot.slane %v736, %v778
    %v780 = vadd.f32 %v760, %v779
    %v781 = vadd.f32 %v761, %v779
    %v782 = vadd.f32 %v762, %v779
    %v783 = vadd.f32 %v763, %v779
    %v784 = vadd.f32 %v764, %v779
    %v785 = vadd.f32 %v765, %v779
    %v786 = vadd.f32 %v766, %v779
    %v787 = vadd.f32 %v767, %v779
    %v788 = vadd.f32 %v768, %v779
    %v789 = vadd.f32 %v769, %v779
    %v790 = vadd.f32 %v770, %v779
    %v791 = vadd.f32 %v771, %v779
    %v792 = vadd.f32 %v772, %v779
    %v793 = vadd.f32 %v773, %v779
    %v794 = vadd.f32 %v774, %v779
    %v795 = vadd.f32 %v775, %v779
    %v796 = vmax.f32 %v780, 0.0
    %v797 = vmax.f32 %v781, 0.0
    %v798 = vmax.f32 %v782, 0.0
    %v799 = vmax.f32 %v783, 0.0
    %v800 = vmax.f32 %v784, 0.0
    %v801 = vmax.f32 %v785, 0.0
    %v802 = vmax.f32 %v786, 0.0
    %v803 = vmax.f32 %v787, 0.0
    %v804 = vmax.f32 %v788, 0.0
    %v805 = vmax.f32 %v789, 0.0
    %v806 = vmax.f32 %v790, 0.0
    %v807 = vmax.f32 %v791, 0.0
    %v808 = vmax.f32 %v792, 0.0
    %v809 = vmax.f32 %v793, 0.0
    %v810 = vmax.f32 %v794, 0.0
    %v811 = vmax.f32 %v795, 0.0
    %v812 = vadd.f32 %v796, %v797
    %v813 = vadd.f32 %v812, %v798
    %v814 = vadd.f32 %v813, %v799
    %v815 = vadd.f32 %v814, %v800
    %v816 = vadd.f32 %v815, %v801
    %v817 = vadd.f32 %v816, %v802
    %v818 = vadd.f32 %v817, %v803
    %v819 = vrot.slane %v818, 4
    %v820 = vadd.f32 %v818, %v819
    %v821 = vrot.slane %v820, 2
    %v822 = vadd.f32 %v820, %v821
    %v823 = vrot.slane %v822, 1
    %v824 = vadd.f32 %v822, %v823
    %v825 = vadd.f32 %v804, %v805
    %v826 = vadd.f32 %v825, %v806
    %v827 = vadd.f32 %v826, %v807
    %v828 = vadd.f32 %v827, %v808
    %v829 = vadd.f32 %v828, %v809
    %v830 = vadd.f32 %v829, %v810
    %v831 = vadd.f32 %v830, %v811
    %v832 = vrot.slane %v831, 4
    %v833 = vadd.f32 %v831, %v832
    %v834 = vrot.slane %v833, 2
    %v835 = vadd.f32 %v833, %v834
    %v836 = vrot.slane %v835, 1
    %v837 = vadd.f32 %v835, %v836
    %v838 = vrcp.pop 64.0
    %v839 = vmul.f32 %v824, %v838
    %v840 = vmul.f32 %v837, %v838
    %v841 = vmax.f32 %v796, %v798
    %v842 = vmax.f32 %v797, %v799
    %v843 = vmax.f32 %v841, %v800
    %v844 = vmax.f32 %v842, %v801
    %v845 = vmax.f32 %v843, %v802
    %v846 = vmax.f32 %v844, %v803
    %v847 = vmax.f32 %v845, %v846
    %v848 = vrot.slane %v847, 4
    %v849 = vmax.f32 %v847, %v848
    %v850 = vrot.slane %v849, 2
    %v851 = vmax.f32 %v849, %v850
    %v852 = vrot.slane %v851, 1
    %v853 = vmax.f32 %v851, %v852
    %v854 = vmax.f32 %v804, %v806
    %v855 = vmax.f32 %v805, %v807
    %v856 = vmax.f32 %v854, %v808
    %v857 = vmax.f32 %v855, %v809
    %v858 = vmax.f32 %v856, %v810
    %v859 = vmax.f32 %v857, %v811
    %v860 = vmax.f32 %v858, %v859
    %v861 = vrot.slane %v860, 4
    %v862 = vmax.f32 %v860, %v861
    %v863 = vrot.slane %v862, 2
    %v864 = vmax.f32 %v862, %v863
    %v865 = vrot.slane %v864, 1
    %v866 = vmax.f32 %v864, %v865
    %s867 = sld [smem:[#allocation2]]
    %s868 = sld [smem:[#allocation2 + $0x1]]
    %v869 = vstv %s867
    %v870 = vmul.f32 %v869, %v839
    %v871 = vmul.f32 %v869, %v840
    %v872 = vmax.f32 %v870, 0.0
    %v873 = vmax.f32 %v871, 0.0
    %v874 = vstv %s868
    %v875 = vmul.f32 %v874, %v872
    %v876 = vmul.f32 %v874, %v873
    %v877 = vmul.f32 %v869, %v853
    %v878 = vmul.f32 %v869, %v866
    %v879 = vmax.f32 %v877, 0.0
    %v880 = vmax.f32 %v878, 0.0
    %v881 = vmul.f32 %v874, %v879
    %v882 = vmul.f32 %v874, %v880
    %v883 = vadd.f32 %v875, %v881
    %v884 = vadd.f32 %v876, %v882
    %v885 = vxor.u32 %v883, 2147483648
    %v886 = vxor.u32 %v884, 2147483648
    %v887 = vmul.f32 %v885, 1.442695
    %v888 = vpow.pop %v887
    %v889 = vmul.f32 %v886, 1.442695
    %v890 = vpow.pop %v889
    %v891 = vadd.f32 %v888, 1.0
    %v892 = vadd.f32 %v890, 1.0
    %v893 = vrcp.pop %v891
    %v894 = vmul.f32 1.0, %v893
    %v895 = vrcp.pop %v892
    %v896 = vmul.f32 1.0, %v895
    %v897 = vmul.f32 %v796, %v894
    %v898 = vmul.f32 %v797, %v894
    %v899 = vmul.f32 %v798, %v894
    %v900 = vmul.f32 %v799, %v894
    %v901 = vmul.f32 %v800, %v894
    %v902 = vmul.f32 %v801, %v894
    %v903 = vmul.f32 %v802, %v894
    %v904 = vmul.f32 %v803, %v894
    %v905 = vmul.f32 %v804, %v896
    %v906 = vmul.f32 %v805, %v896
    %v907 = vmul.f32 %v806, %v896
    %v908 = vmul.f32 %v807, %v896
    %v909 = vmul.f32 %v808, %v896
    %v910 = vmul.f32 %v809, %v896
    %v911 = vmul.f32 %v810, %v896
    %v912 = vmul.f32 %v811, %v896
    %913 = vst [vmem:[%s4] sm:$0xff] %v897
    %914 = vst [vmem:[%s4 + $0x8] sm:$0xff] %v898
    %915 = vst [vmem:[%s4 + $0x10] sm:$0xff] %v899
    %916 = vst [vmem:[%s4 + $0x18] sm:$0xff] %v900
    %917 = vst [vmem:[%s4 + $0x20] sm:$0xff] %v901
    %918 = vst [vmem:[%s4 + $0x28] sm:$0xff] %v902
    %919 = vst [vmem:[%s4 + $0x30] sm:$0xff] %v903
    %920 = vst [vmem:[%s4 + $0x38] sm:$0xff] %v904
    %921 = vst [vmem:[%s4 + $0x40] sm:$0xff] %v905
    %922 = vst [vmem:[%s4 + $0x48] sm:$0xff] %v906
    %923 = vst [vmem:[%s4 + $0x50] sm:$0xff] %v907
    %924 = vst [vmem:[%s4 + $0x58] sm:$0xff] %v908
    %925 = vst [vmem:[%s4 + $0x60] sm:$0xff] %v909
    %926 = vst [vmem:[%s4 + $0x68] sm:$0xff] %v910
    %927 = vst [vmem:[%s4 + $0x70] sm:$0xff] %v911
    %928 = vst [vmem:[%s4 + $0x78] sm:$0xff] %v912
    // Predicated region
    $region22: #{generator_forward.17} parent=1 // pred_check
      _
    $region23: #{generator_forward.17} parent=1 // pred_check_branch
      %930 = sbr.rel (0) target = $region25
    $region24: #{generator_forward.17} parent=1 // pred_region
      _
    $region25: #{generator_forward.17} parent=1 // pred_fallthru
      _
    // Predicated region
    $region26: #{generator_forward.17} parent=1 // pred_check
      _
    $region27: #{generator_forward.17} parent=1 // pred_check_branch
      %932 = sbr.rel (0) target = $region29
    $region28: #{generator_forward.17} parent=1 // pred_region
      _
    $region29: #{generator_forward.17} parent=1 // pred_fallthru
      _
    %933 = vsyncpa [#allocation3], 1

// kernel: generator_forward.18
$region0: #{generator_forward.18}
  #allocation0 [shape = 'u32[]', space=smem, size = 0x4, offset = 0x4, fixed_abs, tag = 'smem constant byte address 0x4 - core index']
  #allocation1 [shape = 'u32[144,128]{1,0:T(1,128)}', space=vmem, size = 0x12000, scoped, tag = 'internal scratch']
  %s0 = inlined_call_operand.vmem [shape: bf16[128,256], index: 0, kind: input, shape index: {}]
  %s1 = inlined_call_operand.vmem [shape: bf16[256,128], index: 1, kind: input, shape index: {}]
  %s2 = inlined_call_operand.vmem [shape: f32[2,128], index: 2, kind: input, shape index: {}]
  %s3 = inlined_call_operand.vmem [shape: f32[128,128], index: 3, kind: output, shape index: {}]
  %s4 = sld [smem:[#allocation0]]
  $region22: #{generator_forward.18} parent=0
    _
  %s6 = ssub.s32 1, %s4
  %s7 = scalar_select 0, %s6, %s4
  // Predicated region
  $region2: #{generator_forward.18} parent=0 // pred_check
    _
  $region3: #{generator_forward.18} parent=0 // pred_check_branch
    %9 = sbr.rel (0) target = $region5
  $region4: #{generator_forward.18} parent=0 // pred_region
    _
  $region5: #{generator_forward.18} parent=0 // pred_fallthru
    _
  // Predicated region
  $region6: #{generator_forward.18} parent=0 // pred_check
    _
  $region7: #{generator_forward.18} parent=0 // pred_check_branch
    %11 = sbr.rel (0) target = $region9
  $region8: #{generator_forward.18} parent=0 // pred_region
    _
  $region9: #{generator_forward.18} parent=0 // pred_fallthru
    _
  // Predicated region
  $region10: #{generator_forward.18} parent=0 // pred_check
    _
  $region11: #{generator_forward.18} parent=0 // pred_check_branch
    %13 = sbr.rel (0) target = $region13
  $region12: #{generator_forward.18} parent=0 // pred_region
    _
  $region13: #{generator_forward.18} parent=0 // pred_fallthru
    _
  %v15 = vld [vmem:[%s0] sm:$0xff]
  %v16 = vld [vmem:[%s0 + $0x8] sm:$0xff]
  %v17 = vld [vmem:[%s0 + $0x10] sm:$0xff]
  %v18 = vld [vmem:[%s0 + $0x18] sm:$0xff]
  %v19 = vld [vmem:[%s0 + $0x20] sm:$0xff]
  %v20 = vld [vmem:[%s0 + $0x28] sm:$0xff]
  %v21 = vld [vmem:[%s0 + $0x30] sm:$0xff]
  %v22 = vld [vmem:[%s0 + $0x38] sm:$0xff]
  %v23 = vld [vmem:[%s0 + $0x40] sm:$0xff]
  %v24 = vld [vmem:[%s0 + $0x48] sm:$0xff]
  %v25 = vld [vmem:[%s0 + $0x50] sm:$0xff]
  %v26 = vld [vmem:[%s0 + $0x58] sm:$0xff]
  %v27 = vld [vmem:[%s0 + $0x60] sm:$0xff]
  %v28 = vld [vmem:[%s0 + $0x68] sm:$0xff]
  %v29 = vld [vmem:[%s0 + $0x70] sm:$0xff]
  %v30 = vld [vmem:[%s0 + $0x78] sm:$0xff]
  %v31 = vld [vmem:[%s1] sm:$0xf]
  %v32 = vld [vmem:[%s1 + $0x4] sm:$0xf]
  %v33 = vld [vmem:[%s1 + $0x8] sm:$0xf]
  %v34 = vld [vmem:[%s1 + $0xc] sm:$0xf]
  %v35 = vld [vmem:[%s1 + $0x10] sm:$0xf]
  %v36 = vld [vmem:[%s1 + $0x14] sm:$0xf]
  %v37 = vld [vmem:[%s1 + $0x18] sm:$0xf]
  %v38 = vld [vmem:[%s1 + $0x1c] sm:$0xf]
  %v39 = vld [vmem:[%s1 + $0x20] sm:$0xf]
  %v40 = vld [vmem:[%s1 + $0x24] sm:$0xf]
  %v41 = vld [vmem:[%s1 + $0x28] sm:$0xf]
  %v42 = vld [vmem:[%s1 + $0x2c] sm:$0xf]
  %v43 = vld [vmem:[%s1 + $0x30] sm:$0xf]
  %v44 = vld [vmem:[%s1 + $0x34] sm:$0xf]
  %v45 = vld [vmem:[%s1 + $0x38] sm:$0xf]
  %v46 = vld [vmem:[%s1 + $0x3c] sm:$0xf]
  %v47 = vld [vmem:[%s1 + $0x40] sm:$0xf]
  %v48 = vld [vmem:[%s1 + $0x44] sm:$0xf]
  %v49 = vld [vmem:[%s1 + $0x48] sm:$0xf]
  %v50 = vld [vmem:[%s1 + $0x4c] sm:$0xf]
  %v51 = vld [vmem:[%s1 + $0x50] sm:$0xf]
  %v52 = vld [vmem:[%s1 + $0x54] sm:$0xf]
  %v53 = vld [vmem:[%s1 + $0x58] sm:$0xf]
  %v54 = vld [vmem:[%s1 + $0x5c] sm:$0xf]
  %v55 = vld [vmem:[%s1 + $0x60] sm:$0xf]
  %v56 = vld [vmem:[%s1 + $0x64] sm:$0xf]
  %v57 = vld [vmem:[%s1 + $0x68] sm:$0xf]
  %v58 = vld [vmem:[%s1 + $0x6c] sm:$0xf]
  %v59 = vld [vmem:[%s1 + $0x70] sm:$0xf]
  %v60 = vld [vmem:[%s1 + $0x74] sm:$0xf]
  %v61 = vld [vmem:[%s1 + $0x78] sm:$0xf]
  %v62 = vld [vmem:[%s1 + $0x7c] sm:$0xf]
  %v79 = vunpack.c.l.b16 %v15
  %v80 = vunpack.c.h.b16 %v15
  %v81 = vunpack.c.l.b16 %v16
  %v82 = vunpack.c.h.b16 %v16
  %v83 = vunpack.c.l.b16 %v17
  %v84 = vunpack.c.h.b16 %v17
  %v85 = vunpack.c.l.b16 %v18
  %v86 = vunpack.c.h.b16 %v18
  %v87 = vunpack.c.l.b16 %v19
  %v88 = vunpack.c.h.b16 %v19
  %v89 = vunpack.c.l.b16 %v20
  %v90 = vunpack.c.h.b16 %v20
  %v91 = vunpack.c.l.b16 %v21
  %v92 = vunpack.c.h.b16 %v21
  %v93 = vunpack.c.l.b16 %v22
  %v94 = vunpack.c.h.b16 %v22
  %v95 = vunpack.c.l.b16 %v23
  %v96 = vunpack.c.h.b16 %v23
  %v97 = vunpack.c.l.b16 %v24
  %v98 = vunpack.c.h.b16 %v24
  %v99 = vunpack.c.l.b16 %v25
  %v100 = vunpack.c.h.b16 %v25
  %v101 = vunpack.c.l.b16 %v26
  %v102 = vunpack.c.h.b16 %v26
  %v103 = vunpack.c.l.b16 %v27
  %v104 = vunpack.c.h.b16 %v27
  %v105 = vunpack.c.l.b16 %v28
  %v106 = vunpack.c.h.b16 %v28
  %v107 = vunpack.c.l.b16 %v29
  %v108 = vunpack.c.h.b16 %v29
  %v109 = vunpack.c.l.b16 %v30
  %v110 = vunpack.c.h.b16 %v30
  %v111 = vpack.c.b16 %v81, %v79
  %v112 = vpack.c.b16 %v82, %v80
  %v113 = vpack.c.b16 %v85, %v83
  %v114 = vpack.c.b16 %v86, %v84
  %v115 = vpack.c.b16 %v89, %v87
  %v116 = vpack.c.b16 %v90, %v88
  %v117 = vpack.c.b16 %v93, %v91
  %v118 = vpack.c.b16 %v94, %v92
  %v119 = vpack.c.b16 %v97, %v95
  %v120 = vpack.c.b16 %v98, %v96
  %v121 = vpack.c.b16 %v101, %v99
  %v122 = vpack.c.b16 %v102, %v100
  %v123 = vpack.c.b16 %v105, %v103
  %v124 = vpack.c.b16 %v106, %v104
  %v125 = vpack.c.b16 %v109, %v107
  %v126 = vpack.c.b16 %v110, %v108
  %v175 = vunpack.c.l.b16 %v31
  %v176 = vunpack.c.l.b16 %v32
  %v177 = vunpack.c.l.b16 %v33
  %v178 = vunpack.c.l.b16 %v34
  %v179 = vunpack.c.l.b16 %v35
  %v180 = vunpack.c.l.b16 %v36
  %v181 = vunpack.c.l.b16 %v37
  %v182 = vunpack.c.l.b16 %v38
  %v183 = vunpack.c.l.b16 %v39
  %v184 = vunpack.c.l.b16 %v40
  %v185 = vunpack.c.l.b16 %v41
  %v186 = vunpack.c.l.b16 %v42
  %v187 = vunpack.c.l.b16 %v43
  %v188 = vunpack.c.l.b16 %v44
  %v189 = vunpack.c.l.b16 %v45
  %v190 = vunpack.c.l.b16 %v46
  %v191 = vunpack.c.l.b16 %v47
  %v192 = vunpack.c.l.b16 %v48
  %v193 = vunpack.c.l.b16 %v49
  %v194 = vunpack.c.l.b16 %v50
  %v195 = vunpack.c.l.b16 %v51
  %v196 = vunpack.c.l.b16 %v52
  %v197 = vunpack.c.l.b16 %v53
  %v198 = vunpack.c.l.b16 %v54
  %v199 = vunpack.c.l.b16 %v55
  %v200 = vunpack.c.l.b16 %v56
  %v201 = vunpack.c.l.b16 %v57
  %v202 = vunpack.c.l.b16 %v58
  %v203 = vunpack.c.l.b16 %v59
  %v204 = vunpack.c.l.b16 %v60
  %v205 = vunpack.c.l.b16 %v61
  %v206 = vunpack.c.l.b16 %v62
  %v207 = vpack.c.b16 %v176, %v175
  %v208 = vpack.c.b16 %v178, %v177
  %v209 = vpack.c.b16 %v180, %v179
  %v210 = vpack.c.b16 %v182, %v181
  %v211 = vpack.c.b16 %v184, %v183
  %v212 = vpack.c.b16 %v186, %v185
  %v213 = vpack.c.b16 %v188, %v187
  %v214 = vpack.c.b16 %v190, %v189
  %v215 = vpack.c.b16 %v192, %v191
  %v216 = vpack.c.b16 %v194, %v193
  %v217 = vpack.c.b16 %v196, %v195
  %v218 = vpack.c.b16 %v198, %v197
  %v219 = vpack.c.b16 %v200, %v199
  %v220 = vpack.c.b16 %v202, %v201
  %v221 = vpack.c.b16 %v204, %v203
  %v222 = vpack.c.b16 %v206, %v205
  %239 = vmatprep.subr.bf16.mxu0 0
  %240 = vmatpush1.bf16.msra.mxu0 %v214
  %241 = vmatprep.subr.bf16.mxu0 0
  %242 = vmatpush1.bf16.msra.mxu0 %v213
  %243 = vmatprep.subr.bf16.mxu0 0
  %244 = vmatpush1.bf16.msra.mxu0 %v212
  %245 = vmatprep.subr.bf16.mxu0 0
  %246 = vmatpush1.bf16.msra.mxu0 %v211
  %247 = vmatprep.subr.bf16.mxu0 0
  %248 = vmatpush1.bf16.msra.mxu0 %v210
  %249 = vmatprep.subr.bf16.mxu0 0
  %250 = vmatpush1.bf16.msra.mxu0 %v209
  %251 = vmatprep.subr.bf16.mxu0 0
  %252 = vmatpush1.bf16.msra.mxu0 %v208
  %253 = vmatprep.subr.bf16.mxu0 0
  %254 = vmatpush1.bf16.msra.mxu0 %v207
  %255 = vmatprep.subr.bf16.mxu0 0
  %256 = vmatpush2.bf16.msra.mxu0 %v222
  %257 = vmatprep.subr.bf16.mxu0 0
  %258 = vmatpush2.bf16.msra.mxu0 %v221
  %259 = vmatprep.subr.bf16.mxu0 0
  %260 = vmatpush2.bf16.msra.mxu0 %v220
  %261 = vmatprep.subr.bf16.mxu0 0
  %262 = vmatpush2.bf16.msra.mxu0 %v219
  %263 = vmatprep.subr.bf16.mxu0 0
  %264 = vmatpush2.bf16.msra.mxu0 %v218
  %265 = vmatprep.subr.bf16.mxu0 0
  %266 = vmatpush2.bf16.msra.mxu0 %v217
  %267 = vmatprep.subr.bf16.mxu0 0
  %268 = vmatpush2.bf16.msra.mxu0 %v216
  %269 = vmatprep.subr.bf16.mxu0 0
  %270 = vmatpush2.bf16.msra.mxu0 %v215
  %271 = vmatprep.mubr.bf16.mxu0 %v112
  %272 = vmatmul.mubr.bf16.gmra.mxu0 %v111
  %v273 = vpop.f32.mrf.mxu0
  %v274 = vadd.f32 0.0, %v273
  %v275 = vpop.f32.mrf.mxu0
  %v276 = vpop.f32.mrf.mxu0
  %v277 = vadd.f32 0.0, %v276
  %v278 = vpop.f32.mrf.mxu0
  %279 = vmatprep.mubr.bf16.mxu0 %v114
  %280 = vmatmul.mubr.bf16.gmra.mxu0 %v113
  %v281 = vpop.f32.mrf.mxu0
  %v282 = vadd.f32 0.0, %v281
  %v283 = vpop.f32.mrf.mxu0
  %v284 = vpop.f32.mrf.mxu0
  %v285 = vadd.f32 0.0, %v284
  %v286 = vpop.f32.mrf.mxu0
  %287 = vmatprep.mubr.bf16.mxu0 %v116
  %288 = vmatmul.mubr.bf16.gmra.mxu0 %v115
  %v289 = vpop.f32.mrf.mxu0
  %v290 = vadd.f32 0.0, %v289
  %v291 = vpop.f32.mrf.mxu0
  %v292 = vpop.f32.mrf.mxu0
  %v293 = vadd.f32 0.0, %v292
  %v294 = vpop.f32.mrf.mxu0
  %295 = vmatprep.mubr.bf16.mxu0 %v118
  %296 = vmatmul.mubr.bf16.gmra.mxu0 %v117
  %v297 = vpop.f32.mrf.mxu0
  %v298 = vadd.f32 0.0, %v297
  %v299 = vpop.f32.mrf.mxu0
  %v300 = vpop.f32.mrf.mxu0
  %v301 = vadd.f32 0.0, %v300
  %v302 = vpop.f32.mrf.mxu0
  %303 = vmatprep.mubr.bf16.mxu0 %v120
  %304 = vmatmul.mubr.bf16.gmra.mxu0 %v119
  %v305 = vpop.f32.mrf.mxu0
  %v306 = vadd.f32 0.0, %v305
  %v307 = vpop.f32.mrf.mxu0
  %v308 = vpop.f32.mrf.mxu0
  %v309 = vadd.f32 0.0, %v308
  %v310 = vpop.f32.mrf.mxu0
  %311 = vmatprep.mubr.bf16.mxu0 %v122
  %312 = vmatmul.mubr.bf16.gmra.mxu0 %v121
  %v313 = vpop.f32.mrf.mxu0
  %v314 = vadd.f32 0.0, %v313
  %v315 = vpop.f32.mrf.mxu0
  %v316 = vpop.f32.mrf.mxu0
  %v317 = vadd.f32 0.0, %v316
  %v318 = vpop.f32.mrf.mxu0
  %319 = vmatprep.mubr.bf16.mxu0 %v124
  %320 = vmatmul.mubr.bf16.gmra.mxu0 %v123
  %v321 = vpop.f32.mrf.mxu0
  %v322 = vadd.f32 0.0, %v321
  %v323 = vpop.f32.mrf.mxu0
  %v324 = vpop.f32.mrf.mxu0
  %v325 = vadd.f32 0.0, %v324
  %v326 = vpop.f32.mrf.mxu0
  %327 = vmatprep.mubr.bf16.mxu0 %v126
  %328 = vmatmul.mubr.bf16.gmra.mxu0 %v125
  %v329 = vpop.f32.mrf.mxu0
  %v330 = vadd.f32 0.0, %v329
  %v331 = vpop.f32.mrf.mxu0
  %v332 = vpop.f32.mrf.mxu0
  %v333 = vadd.f32 0.0, %v332
  %v334 = vpop.f32.mrf.mxu0
  %335 = vdwg.mxu0
  %v336 = vadd.f32 %v274, %v277
  %v337 = vadd.f32 %v336, %v282
  %v338 = vadd.f32 %v337, %v285
  %v339 = vadd.f32 %v338, %v290
  %v340 = vadd.f32 %v339, %v293
  %v341 = vadd.f32 %v340, %v298
  %v342 = vadd.f32 %v341, %v301
  %v343 = vadd.f32 %v342, %v306
  %v344 = vadd.f32 %v343, %v309
  %v345 = vadd.f32 %v344, %v314
  %v346 = vadd.f32 %v345, %v317
  %v347 = vadd.f32 %v346, %v322
  %v348 = vadd.f32 %v347, %v325
  %v349 = vadd.f32 %v348, %v330
  %v350 = vadd.f32 %v349, %v333
  %v351 = vrot.slane %v350, 4
  %v352 = vadd.f32 %v350, %v351
  %v353 = vrot.slane %v352, 2
  %v354 = vadd.f32 %v352, %v353
  %v355 = vrot.slane %v354, 1
  %v356 = vadd.f32 %v354, %v355
  %v357 = vmul.f32 %v356, 0.0078125
  %v358 = vmul.f32 %v274, %v274
  %v359 = vmul.f32 %v277, %v277
  %v360 = vmul.f32 %v282, %v282
  %v361 = vmul.f32 %v285, %v285
  %v362 = vmul.f32 %v290, %v290
  %v363 = vmul.f32 %v293, %v293
  %v364 = vmul.f32 %v298, %v298
  %v365 = vmul.f32 %v301, %v301
  %v366 = vmul.f32 %v306, %v306
  %v367 = vmul.f32 %v309, %v309
  %v368 = vmul.f32 %v314, %v314
  %v369 = vmul.f32 %v317, %v317
  %v370 = vmul.f32 %v322, %v322
  %v371 = vmul.f32 %v325, %v325
  %v372 = vmul.f32 %v330, %v330
  %v373 = vmul.f32 %v333, %v333
  %v374 = vadd.f32 %v358, %v359
  %v375 = vadd.f32 %v374, %v360
  %v376 = vadd.f32 %v375, %v361
  %v377 = vadd.f32 %v376, %v362
  %v378 = vadd.f32 %v377, %v363
  %v379 = vadd.f32 %v378, %v364
  %v380 = vadd.f32 %v379, %v365
  %v381 = vadd.f32 %v380, %v366
  %v382 = vadd.f32 %v381, %v367
  %v383 = vadd.f32 %v382, %v368
  %v384 = vadd.f32 %v383, %v369
  %v385 = vadd.f32 %v384, %v370
  %v386 = vadd.f32 %v385, %v371
  %v387 = vadd.f32 %v386, %v372
  %v388 = vadd.f32 %v387, %v373
  %v389 = vrot.slane %v388, 4
  %v390 = vadd.f32 %v388, %v389
  %v391 = vrot.slane %v390, 2
  %v392 = vadd.f32 %v390, %v391
  %v393 = vrot.slane %v392, 1
  %v394 = vadd.f32 %v392, %v393
  %v395 = vmul.f32 %v394, 0.0078125
  %v396 = vmul.f32 %v357, %v357
  %v397 = vsub.f32 %v395, %v396
  %v398 = vmax.f32 %v397, 0.0
  %v399 = vld [vmem:[%s2] sm:$0x3]
  %v400 = vadd.f32 %v398, 1e-05
  %v401 = vrsqrt.pop %v400
  %v402 = vmul.f32 %v399, %v401
  %v403 = vsub.f32 %v274, %v357
  %v404 = vsub.f32 %v277, %v357
  %v405 = vsub.f32 %v282, %v357
  %v406 = vsub.f32 %v285, %v357
  %v407 = vsub.f32 %v290, %v357
  %v408 = vsub.f32 %v293, %v357
  %v409 = vsub.f32 %v298, %v357
  %v410 = vsub.f32 %v301, %v357
  %v411 = vsub.f32 %v306, %v357
  %v412 = vsub.f32 %v309, %v357
  %v413 = vsub.f32 %v314, %v357
  %v414 = vsub.f32 %v317, %v357
  %v415 = vsub.f32 %v322, %v357
  %v416 = vsub.f32 %v325, %v357
  %v417 = vsub.f32 %v330, %v357
  %v418 = vsub.f32 %v333, %v357
  %v419 = vlaneseq
  %v420 = vshrl.u32 %v419, 7
  %v421 = vsub.s32 0, %v420
  %v422 = vrot.slane %v402, %v421
  %v423 = vmul.f32 %v403, %v422
  %v424 = vmul.f32 %v404, %v422
  %v425 = vmul.f32 %v405, %v422
  %v426 = vmul.f32 %v406, %v422
  %v427 = vmul.f32 %v407, %v422
  %v428 = vmul.f32 %v408, %v422
  %v429 = vmul.f32 %v409, %v422
  %v430 = vmul.f32 %v410, %v422
  %v431 = vmul.f32 %v411, %v422
  %v432 = vmul.f32 %v412, %v422
  %v433 = vmul.f32 %v413, %v422
  %v434 = vmul.f32 %v414, %v422
  %v435 = vmul.f32 %v415, %v422
  %v436 = vmul.f32 %v416, %v422
  %v437 = vmul.f32 %v417, %v422
  %v438 = vmul.f32 %v418, %v422
  %v439 = vlaneseq
  %v440 = vshrl.u32 %v439, 7
  %v441 = vsub.s32 1, %v440
  %v442 = vrot.slane %v399, %v441
  %v443 = vadd.f32 %v423, %v442
  %v444 = vadd.f32 %v424, %v442
  %v445 = vadd.f32 %v425, %v442
  %v446 = vadd.f32 %v426, %v442
  %v447 = vadd.f32 %v427, %v442
  %v448 = vadd.f32 %v428, %v442
  %v449 = vadd.f32 %v429, %v442
  %v450 = vadd.f32 %v430, %v442
  %v451 = vadd.f32 %v431, %v442
  %v452 = vadd.f32 %v432, %v442
  %v453 = vadd.f32 %v433, %v442
  %v454 = vadd.f32 %v434, %v442
  %v455 = vadd.f32 %v435, %v442
  %v456 = vadd.f32 %v436, %v442
  %v457 = vadd.f32 %v437, %v442
  %v458 = vadd.f32 %v438, %v442
  %v459 = vmax.f32 %v443, 0.0
  %v460 = vmax.f32 %v444, 0.0
  %v461 = vmax.f32 %v445, 0.0
  %v462 = vmax.f32 %v446, 0.0
  %v463 = vmax.f32 %v447, 0.0
  %v464 = vmax.f32 %v448, 0.0
  %v465 = vmax.f32 %v449, 0.0
  %v466 = vmax.f32 %v450, 0.0
  %v467 = vmax.f32 %v451, 0.0
  %v468 = vmax.f32 %v452, 0.0
  %v469 = vmax.f32 %v453, 0.0
  %v470 = vmax.f32 %v454, 0.0
  %v471 = vmax.f32 %v455, 0.0
  %v472 = vmax.f32 %v456, 0.0
  %v473 = vmax.f32 %v457, 0.0
  %v474 = vmax.f32 %v458, 0.0
  %475 = vst [vmem:[%s3] sm:$0xff] %v459
  %476 = vst [vmem:[%s3 + $0x8] sm:$0xff] %v460
  %477 = vst [vmem:[%s3 + $0x10] sm:$0xff] %v461
  %478 = vst [vmem:[%s3 + $0x18] sm:$0xff] %v462
  %479 = vst [vmem:[%s3 + $0x20] sm:$0xff] %v463
  %480 = vst [vmem:[%s3 + $0x28] sm:$0xff] %v464
  %481 = vst [vmem:[%s3 + $0x30] sm:$0xff] %v465
  %482 = vst [vmem:[%s3 + $0x38] sm:$0xff] %v466
  %483 = vst [vmem:[%s3 + $0x40] sm:$0xff] %v467
  %484 = vst [vmem:[%s3 + $0x48] sm:$0xff] %v468
  %485 = vst [vmem:[%s3 + $0x50] sm:$0xff] %v469
  %486 = vst [vmem:[%s3 + $0x58] sm:$0xff] %v470
  %487 = vst [vmem:[%s3 + $0x60] sm:$0xff] %v471
  %488 = vst [vmem:[%s3 + $0x68] sm:$0xff] %v472
  %489 = vst [vmem:[%s3 + $0x70] sm:$0xff] %v473
  %490 = vst [vmem:[%s3 + $0x78] sm:$0xff] %v474
  // Predicated region
  $region14: #{generator_forward.18} parent=0 // pred_check
    _
  $region15: #{generator_forward.18} parent=0 // pred_check_branch
    %492 = sbr.rel (0) target = $region17
  $region16: #{generator_forward.18} parent=0 // pred_region
    _
  $region17: #{generator_forward.18} parent=0 // pred_fallthru
    _
  // Predicated region
  $region18: #{generator_forward.18} parent=0 // pred_check
    _
  $region19: #{generator_forward.18} parent=0 // pred_check_branch
    %494 = sbr.rel (0) target = $region21
  $region20: #{generator_forward.18} parent=0 // pred_region
    _
  $region21: #{generator_forward.18} parent=0 // pred_fallthru
    _

// kernel: generator_forward.19
$region0: #{generator_forward.19}
  #allocation0 [shape = 'u32[]', space=smem, size = 0x4, offset = 0x4, fixed_abs, tag = 'smem constant byte address 0x4 - core index']
  #allocation1 [shape = 'u32[144,128]{1,0:T(1,128)}', space=vmem, size = 0x12000, scoped, tag = 'internal scratch']
  %s0 = inlined_call_operand.vmem [shape: bf16[512,256], index: 0, kind: input, shape index: {}]
  %s1 = inlined_call_operand.vmem [shape: bf16[256,128], index: 1, kind: input, shape index: {}]
  %s2 = inlined_call_operand.vmem [shape: f32[512,128], index: 2, kind: output, shape index: {}]
  %s3 = sld [smem:[#allocation0]]
  $region18: #{generator_forward.19} parent=0
    _
  %s5 = ssub.s32 1, %s3
  %s6 = scalar_select 0, %s5, %s3
  // Predicated region
  $region2: #{generator_forward.19} parent=0 // pred_check
    _
  $region3: #{generator_forward.19} parent=0 // pred_check_branch
    %8 = sbr.rel (0) target = $region5
  $region4: #{generator_forward.19} parent=0 // pred_region
    _
  $region5: #{generator_forward.19} parent=0 // pred_fallthru
    _
  // Predicated region
  $region6: #{generator_forward.19} parent=0 // pred_check
    _
  $region7: #{generator_forward.19} parent=0 // pred_check_branch
    %10 = sbr.rel (0) target = $region9
  $region8: #{generator_forward.19} parent=0 // pred_region
    _
  $region9: #{generator_forward.19} parent=0 // pred_fallthru
    _
  %v12 = vld [vmem:[%s0] sm:$0xff]
  %v13 = vld [vmem:[%s0 + $0x8] sm:$0xff]
  %v14 = vld [vmem:[%s0 + $0x10] sm:$0xff]
  %v15 = vld [vmem:[%s0 + $0x18] sm:$0xff]
  %v16 = vld [vmem:[%s0 + $0x20] sm:$0xff]
  %v17 = vld [vmem:[%s0 + $0x28] sm:$0xff]
  %v18 = vld [vmem:[%s0 + $0x30] sm:$0xff]
  %v19 = vld [vmem:[%s0 + $0x38] sm:$0xff]
  %v20 = vld [vmem:[%s0 + $0x40] sm:$0xff]
  %v21 = vld [vmem:[%s0 + $0x48] sm:$0xff]
  %v22 = vld [vmem:[%s0 + $0x50] sm:$0xff]
  %v23 = vld [vmem:[%s0 + $0x58] sm:$0xff]
  %v24 = vld [vmem:[%s0 + $0x60] sm:$0xff]
  %v25 = vld [vmem:[%s0 + $0x68] sm:$0xff]
  %v26 = vld [vmem:[%s0 + $0x70] sm:$0xff]
  %v27 = vld [vmem:[%s0 + $0x78] sm:$0xff]
  %v28 = vld [vmem:[%s0 + $0x80] sm:$0xff]
  %v29 = vld [vmem:[%s0 + $0x88] sm:$0xff]
  %v30 = vld [vmem:[%s0 + $0x90] sm:$0xff]
  %v31 = vld [vmem:[%s0 + $0x98] sm:$0xff]
  %v32 = vld [vmem:[%s0 + $0xa0] sm:$0xff]
  %v33 = vld [vmem:[%s0 + $0xa8] sm:$0xff]
  %v34 = vld [vmem:[%s0 + $0xb0] sm:$0xff]
  %v35 = vld [vmem:[%s0 + $0xb8] sm:$0xff]
  %v36 = vld [vmem:[%s0 + $0xc0] sm:$0xff]
  %v37 = vld [vmem:[%s0 + $0xc8] sm:$0xff]
  %v38 = vld [vmem:[%s0 + $0xd0] sm:$0xff]
  %v39 = vld [vmem:[%s0 + $0xd8] sm:$0xff]
  %v40 = vld [vmem:[%s0 + $0xe0] sm:$0xff]
  %v41 = vld [vmem:[%s0 + $0xe8] sm:$0xff]
  %v42 = vld [vmem:[%s0 + $0xf0] sm:$0xff]
  %v43 = vld [vmem:[%s0 + $0xf8] sm:$0xff]
  %v44 = vld [vmem:[%s0 + $0x100] sm:$0xff]
  %v45 = vld [vmem:[%s0 + $0x108] sm:$0xff]
  %v46 = vld [vmem:[%s0 + $0x110] sm:$0xff]
  %v47 = vld [vmem:[%s0 + $0x118] sm:$0xff]
  %v48 = vld [vmem:[%s0 + $0x120] sm:$0xff]
  %v49 = vld [vmem:[%s0 + $0x128] sm:$0xff]
  %v50 = vld [vmem:[%s0 + $0x130] sm:$0xff]
  %v51 = vld [vmem:[%s0 + $0x138] sm:$0xff]
  %v52 = vld [vmem:[%s0 + $0x140] sm:$0xff]
  %v53 = vld [vmem:[%s0 + $0x148] sm:$0xff]
  %v54 = vld [vmem:[%s0 + $0x150] sm:$0xff]
  %v55 = vld [vmem:[%s0 + $0x158] sm:$0xff]
  %v56 = vld [vmem:[%s0 + $0x160] sm:$0xff]
  %v57 = vld [vmem:[%s0 + $0x168] sm:$0xff]
  %v58 = vld [vmem:[%s0 + $0x170] sm:$0xff]
  %v59 = vld [vmem:[%s0 + $0x178] sm:$0xff]
  %v60 = vld [vmem:[%s0 + $0x180] sm:$0xff]
  %v61 = vld [vmem:[%s0 + $0x188] sm:$0xff]
  %v62 = vld [vmem:[%s0 + $0x190] sm:$0xff]
  %v63 = vld [vmem:[%s0 + $0x198] sm:$0xff]
  %v64 = vld [vmem:[%s0 + $0x1a0] sm:$0xff]
  %v65 = vld [vmem:[%s0 + $0x1a8] sm:$0xff]
  %v66 = vld [vmem:[%s0 + $0x1b0] sm:$0xff]
  %v67 = vld [vmem:[%s0 + $0x1b8] sm:$0xff]
  %v68 = vld [vmem:[%s0 + $0x1c0] sm:$0xff]
  %v69 = vld [vmem:[%s0 + $0x1c8] sm:$0xff]
  %v70 = vld [vmem:[%s0 + $0x1d0] sm:$0xff]
  %v71 = vld [vmem:[%s0 + $0x1d8] sm:$0xff]
  %v72 = vld [vmem:[%s0 + $0x1e0] sm:$0xff]
  %v73 = vld [vmem:[%s0 + $0x1e8] sm:$0xff]
  %v74 = vld [vmem:[%s0 + $0x1f0] sm:$0xff]
  %v75 = vld [vmem:[%s0 + $0x1f8] sm:$0xff]
  %v76 = vld [vmem:[%s1] sm:$0xf]
  %v77 = vld [vmem:[%s1 + $0x4] sm:$0xf]
  %v78 = vld [vmem:[%s1 + $0x8] sm:$0xf]
  %v79 = vld [vmem:[%s1 + $0xc] sm:$0xf]
  %v80 = vld [vmem:[%s1 + $0x10] sm:$0xf]
  %v81 = vld [vmem:[%s1 + $0x14] sm:$0xf]
  %v82 = vld [vmem:[%s1 + $0x18] sm:$0xf]
  %v83 = vld [vmem:[%s1 + $0x1c] sm:$0xf]
  %v84 = vld [vmem:[%s1 + $0x20] sm:$0xf]
  %v85 = vld [vmem:[%s1 + $0x24] sm:$0xf]
  %v86 = vld [vmem:[%s1 + $0x28] sm:$0xf]
  %v87 = vld [vmem:[%s1 + $0x2c] sm:$0xf]
  %v88 = vld [vmem:[%s1 + $0x30] sm:$0xf]
  %v89 = vld [vmem:[%s1 + $0x34] sm:$0xf]
  %v90 = vld [vmem:[%s1 + $0x38] sm:$0xf]
  %v91 = vld [vmem:[%s1 + $0x3c] sm:$0xf]
  %v92 = vld [vmem:[%s1 + $0x40] sm:$0xf]
  %v93 = vld [vmem:[%s1 + $0x44] sm:$0xf]
  %v94 = vld [vmem:[%s1 + $0x48] sm:$0xf]
  %v95 = vld [vmem:[%s1 + $0x4c] sm:$0xf]
  %v96 = vld [vmem:[%s1 + $0x50] sm:$0xf]
  %v97 = vld [vmem:[%s1 + $0x54] sm:$0xf]
  %v98 = vld [vmem:[%s1 + $0x58] sm:$0xf]
  %v99 = vld [vmem:[%s1 + $0x5c] sm:$0xf]
  %v100 = vld [vmem:[%s1 + $0x60] sm:$0xf]
  %v101 = vld [vmem:[%s1 + $0x64] sm:$0xf]
  %v102 = vld [vmem:[%s1 + $0x68] sm:$0xf]
  %v103 = vld [vmem:[%s1 + $0x6c] sm:$0xf]
  %v104 = vld [vmem:[%s1 + $0x70] sm:$0xf]
  %v105 = vld [vmem:[%s1 + $0x74] sm:$0xf]
  %v106 = vld [vmem:[%s1 + $0x78] sm:$0xf]
  %v107 = vld [vmem:[%s1 + $0x7c] sm:$0xf]
  %v172 = vunpack.c.l.b16 %v12
  %v173 = vunpack.c.h.b16 %v12
  %v174 = vunpack.c.l.b16 %v13
  %v175 = vunpack.c.h.b16 %v13
  %v176 = vunpack.c.l.b16 %v14
  %v177 = vunpack.c.h.b16 %v14
  %v178 = vunpack.c.l.b16 %v15
  %v179 = vunpack.c.h.b16 %v15
  %v180 = vunpack.c.l.b16 %v16
  %v181 = vunpack.c.h.b16 %v16
  %v182 = vunpack.c.l.b16 %v17
  %v183 = vunpack.c.h.b16 %v17
  %v184 = vunpack.c.l.b16 %v18
  %v185 = vunpack.c.h.b16 %v18
  %v186 = vunpack.c.l.b16 %v19
  %v187 = vunpack.c.h.b16 %v19
  %v188 = vunpack.c.l.b16 %v20
  %v189 = vunpack.c.h.b16 %v20
  %v190 = vunpack.c.l.b16 %v21
  %v191 = vunpack.c.h.b16 %v21
  %v192 = vunpack.c.l.b16 %v22
  %v193 = vunpack.c.h.b16 %v22
  %v194 = vunpack.c.l.b16 %v23
  %v195 = vunpack.c.h.b16 %v23
  %v196 = vunpack.c.l.b16 %v24
  %v197 = vunpack.c.h.b16 %v24
  %v198 = vunpack.c.l.b16 %v25
  %v199 = vunpack.c.h.b16 %v25
  %v200 = vunpack.c.l.b16 %v26
  %v201 = vunpack.c.h.b16 %v26
  %v202 = vunpack.c.l.b16 %v27
  %v203 = vunpack.c.h.b16 %v27
  %v204 = vunpack.c.l.b16 %v28
  %v205 = vunpack.c.h.b16 %v28
  %v206 = vunpack.c.l.b16 %v29
  %v207 = vunpack.c.h.b16 %v29
  %v208 = vunpack.c.l.b16 %v30
  %v209 = vunpack.c.h.b16 %v30
  %v210 = vunpack.c.l.b16 %v31
  %v211 = vunpack.c.h.b16 %v31
  %v212 = vunpack.c.l.b16 %v32
  %v213 = vunpack.c.h.b16 %v32
  %v214 = vunpack.c.l.b16 %v33
  %v215 = vunpack.c.h.b16 %v33
  %v216 = vunpack.c.l.b16 %v34
  %v217 = vunpack.c.h.b16 %v34
  %v218 = vunpack.c.l.b16 %v35
  %v219 = vunpack.c.h.b16 %v35
  %v220 = vunpack.c.l.b16 %v36
  %v221 = vunpack.c.h.b16 %v36
  %v222 = vunpack.c.l.b16 %v37
  %v223 = vunpack.c.h.b16 %v37
  %v224 = vunpack.c.l.b16 %v38
  %v225 = vunpack.c.h.b16 %v38
  %v226 = vunpack.c.l.b16 %v39
  %v227 = vunpack.c.h.b16 %v39
  %v228 = vunpack.c.l.b16 %v40
  %v229 = vunpack.c.h.b16 %v40
  %v230 = vunpack.c.l.b16 %v41
  %v231 = vunpack.c.h.b16 %v41
  %v232 = vunpack.c.l.b16 %v42
  %v233 = vunpack.c.h.b16 %v42
  %v234 = vunpack.c.l.b16 %v43
  %v235 = vunpack.c.h.b16 %v43
  %v236 = vunpack.c.l.b16 %v44
  %v237 = vunpack.c.h.b16 %v44
  %v238 = vunpack.c.l.b16 %v45
  %v239 = vunpack.c.h.b16 %v45
  %v240 = vunpack.c.l.b16 %v46
  %v241 = vunpack.c.h.b16 %v46
  %v242 = vunpack.c.l.b16 %v47
  %v243 = vunpack.c.h.b16 %v47
  %v244 = vunpack.c.l.b16 %v48
  %v245 = vunpack.c.h.b16 %v48
  %v246 = vunpack.c.l.b16 %v49
  %v247 = vunpack.c.h.b16 %v49
  %v248 = vunpack.c.l.b16 %v50
  %v249 = vunpack.c.h.b16 %v50
  %v250 = vunpack.c.l.b16 %v51
  %v251 = vunpack.c.h.b16 %v51
  %v252 = vunpack.c.l.b16 %v52
  %v253 = vunpack.c.h.b16 %v52
  %v254 = vunpack.c.l.b16 %v53
  %v255 = vunpack.c.h.b16 %v53
  %v256 = vunpack.c.l.b16 %v54
  %v257 = vunpack.c.h.b16 %v54
  %v258 = vunpack.c.l.b16 %v55
  %v259 = vunpack.c.h.b16 %v55
  %v260 = vunpack.c.l.b16 %v56
  %v261 = vunpack.c.h.b16 %v56
  %v262 = vunpack.c.l.b16 %v57
  %v263 = vunpack.c.h.b16 %v57
  %v264 = vunpack.c.l.b16 %v58
  %v265 = vunpack.c.h.b16 %v58
  %v266 = vunpack.c.l.b16 %v59
  %v267 = vunpack.c.h.b16 %v59
  %v268 = vunpack.c.l.b16 %v60
  %v269 = vunpack.c.h.b16 %v60
  %v270 = vunpack.c.l.b16 %v61
  %v271 = vunpack.c.h.b16 %v61
  %v272 = vunpack.c.l.b16 %v62
  %v273 = vunpack.c.h.b16 %v62
  %v274 = vunpack.c.l.b16 %v63
  %v275 = vunpack.c.h.b16 %v63
  %v276 = vunpack.c.l.b16 %v64
  %v277 = vunpack.c.h.b16 %v64
  %v278 = vunpack.c.l.b16 %v65
  %v279 = vunpack.c.h.b16 %v65
  %v280 = vunpack.c.l.b16 %v66
  %v281 = vunpack.c.h.b16 %v66
  %v282 = vunpack.c.l.b16 %v67
  %v283 = vunpack.c.h.b16 %v67
  %v284 = vunpack.c.l.b16 %v68
  %v285 = vunpack.c.h.b16 %v68
  %v286 = vunpack.c.l.b16 %v69
  %v287 = vunpack.c.h.b16 %v69
  %v288 = vunpack.c.l.b16 %v70
  %v289 = vunpack.c.h.b16 %v70
  %v290 = vunpack.c.l.b16 %v71
  %v291 = vunpack.c.h.b16 %v71
  %v292 = vunpack.c.l.b16 %v72
  %v293 = vunpack.c.h.b16 %v72
  %v294 = vunpack.c.l.b16 %v73
  %v295 = vunpack.c.h.b16 %v73
  %v296 = vunpack.c.l.b16 %v74
  %v297 = vunpack.c.h.b16 %v74
  %v298 = vunpack.c.l.b16 %v75
  %v299 = vunpack.c.h.b16 %v75
  %v300 = vpack.c.b16 %v174, %v172
  %v301 = vpack.c.b16 %v175, %v173
  %v302 = vpack.c.b16 %v178, %v176
  %v303 = vpack.c.b16 %v179, %v177
  %v304 = vpack.c.b16 %v182, %v180
  %v305 = vpack.c.b16 %v183, %v181
  %v306 = vpack.c.b16 %v186, %v184
  %v307 = vpack.c.b16 %v187, %v185
  %v308 = vpack.c.b16 %v190, %v188
  %v309 = vpack.c.b16 %v191, %v189
  %v310 = vpack.c.b16 %v194, %v192
  %v311 = vpack.c.b16 %v195, %v193
  %v312 = vpack.c.b16 %v198, %v196
  %v313 = vpack.c.b16 %v199, %v197
  %v314 = vpack.c.b16 %v202, %v200
  %v315 = vpack.c.b16 %v203, %v201
  %v316 = vpack.c.b16 %v206, %v204
  %v317 = vpack.c.b16 %v207, %v205
  %v318 = vpack.c.b16 %v210, %v208
  %v319 = vpack.c.b16 %v211, %v209
  %v320 = vpack.c.b16 %v214, %v212
  %v321 = vpack.c.b16 %v215, %v213
  %v322 = vpack.c.b16 %v218, %v216
  %v323 = vpack.c.b16 %v219, %v217
  %v324 = vpack.c.b16 %v222, %v220
  %v325 = vpack.c.b16 %v223, %v221
  %v326 = vpack.c.b16 %v226, %v224
  %v327 = vpack.c.b16 %v227, %v225
  %v328 = vpack.c.b16 %v230, %v228
  %v329 = vpack.c.b16 %v231, %v229
  %v330 = vpack.c.b16 %v234, %v232
  %v331 = vpack.c.b16 %v235, %v233
  %v332 = vpack.c.b16 %v238, %v236
  %v333 = vpack.c.b16 %v239, %v237
  %v334 = vpack.c.b16 %v242, %v240
  %v335 = vpack.c.b16 %v243, %v241
  %v336 = vpack.c.b16 %v246, %v244
  %v337 = vpack.c.b16 %v247, %v245
  %v338 = vpack.c.b16 %v250, %v248
  %v339 = vpack.c.b16 %v251, %v249
  %v340 = vpack.c.b16 %v254, %v252
  %v341 = vpack.c.b16 %v255, %v253
  %v342 = vpack.c.b16 %v258, %v256
  %v343 = vpack.c.b16 %v259, %v257
  %v344 = vpack.c.b16 %v262, %v260
  %v345 = vpack.c.b16 %v263, %v261
  %v346 = vpack.c.b16 %v266, %v264
  %v347 = vpack.c.b16 %v267, %v265
  %v348 = vpack.c.b16 %v270, %v268
  %v349 = vpack.c.b16 %v271, %v269
  %v350 = vpack.c.b16 %v274, %v272
  %v351 = vpack.c.b16 %v275, %v273
  %v352 = vpack.c.b16 %v278, %v276
  %v353 = vpack.c.b16 %v279, %v277
  %v354 = vpack.c.b16 %v282, %v280
  %v355 = vpack.c.b16 %v283, %v281
  %v356 = vpack.c.b16 %v286, %v284
  %v357 = vpack.c.b16 %v287, %v285
  %v358 = vpack.c.b16 %v290, %v288
  %v359 = vpack.c.b16 %v291, %v289
  %v360 = vpack.c.b16 %v294, %v292
  %v361 = vpack.c.b16 %v295, %v293
  %v362 = vpack.c.b16 %v298, %v296
  %v363 = vpack.c.b16 %v299, %v297
  %v460 = vunpack.c.l.b16 %v76
  %v461 = vunpack.c.l.b16 %v77
  %v462 = vunpack.c.l.b16 %v78
  %v463 = vunpack.c.l.b16 %v79
  %v464 = vunpack.c.l.b16 %v80
  %v465 = vunpack.c.l.b16 %v81
  %v466 = vunpack.c.l.b16 %v82
  %v467 = vunpack.c.l.b16 %v83
  %v468 = vunpack.c.l.b16 %v84
  %v469 = vunpack.c.l.b16 %v85
  %v470 = vunpack.c.l.b16 %v86
  %v471 = vunpack.c.l.b16 %v87
  %v472 = vunpack.c.l.b16 %v88
  %v473 = vunpack.c.l.b16 %v89
  %v474 = vunpack.c.l.b16 %v90
  %v475 = vunpack.c.l.b16 %v91
  %v476 = vunpack.c.l.b16 %v92
  %v477 = vunpack.c.l.b16 %v93
  %v478 = vunpack.c.l.b16 %v94
  %v479 = vunpack.c.l.b16 %v95
  %v480 = vunpack.c.l.b16 %v96
  %v481 = vunpack.c.l.b16 %v97
  %v482 = vunpack.c.l.b16 %v98
  %v483 = vunpack.c.l.b16 %v99
  %v484 = vunpack.c.l.b16 %v100
  %v485 = vunpack.c.l.b16 %v101
  %v486 = vunpack.c.l.b16 %v102
  %v487 = vunpack.c.l.b16 %v103
  %v488 = vunpack.c.l.b16 %v104
  %v489 = vunpack.c.l.b16 %v105
  %v490 = vunpack.c.l.b16 %v106
  %v491 = vunpack.c.l.b16 %v107
  %v492 = vpack.c.b16 %v461, %v460
  %v493 = vpack.c.b16 %v463, %v462
  %v494 = vpack.c.b16 %v465, %v464
  %v495 = vpack.c.b16 %v467, %v466
  %v496 = vpack.c.b16 %v469, %v468
  %v497 = vpack.c.b16 %v471, %v470
  %v498 = vpack.c.b16 %v473, %v472
  %v499 = vpack.c.b16 %v475, %v474
  %v500 = vpack.c.b16 %v477, %v476
  %v501 = vpack.c.b16 %v479, %v478
  %v502 = vpack.c.b16 %v481, %v480
  %v503 = vpack.c.b16 %v483, %v482
  %v504 = vpack.c.b16 %v485, %v484
  %v505 = vpack.c.b16 %v487, %v486
  %v506 = vpack.c.b16 %v489, %v488
  %v507 = vpack.c.b16 %v491, %v490
  %524 = vmatprep.subr.bf16.mxu0 0
  %525 = vmatpush1.bf16.msra.mxu0 %v499
  %526 = vmatprep.subr.bf16.mxu0 0
  %527 = vmatpush1.bf16.msra.mxu0 %v498
  %528 = vmatprep.subr.bf16.mxu0 0
  %529 = vmatpush1.bf16.msra.mxu0 %v497
  %530 = vmatprep.subr.bf16.mxu0 0
  %531 = vmatpush1.bf16.msra.mxu0 %v496
  %532 = vmatprep.subr.bf16.mxu0 0
  %533 = vmatpush1.bf16.msra.mxu0 %v495
  %534 = vmatprep.subr.bf16.mxu0 0
  %535 = vmatpush1.bf16.msra.mxu0 %v494
  %536 = vmatprep.subr.bf16.mxu0 0
  %537 = vmatpush1.bf16.msra.mxu0 %v493
  %538 = vmatprep.subr.bf16.mxu0 0
  %539 = vmatpush1.bf16.msra.mxu0 %v492
  %540 = vmatprep.subr.bf16.mxu0 0
  %541 = vmatpush2.bf16.msra.mxu0 %v507
  %542 = vmatprep.subr.bf16.mxu0 0
  %543 = vmatpush2.bf16.msra.mxu0 %v506
  %544 = vmatprep.subr.bf16.mxu0 0
  %545 = vmatpush2.bf16.msra.mxu0 %v505
  %546 = vmatprep.subr.bf16.mxu0 0
  %547 = vmatpush2.bf16.msra.mxu0 %v504
  %548 = vmatprep.subr.bf16.mxu0 0
  %549 = vmatpush2.bf16.msra.mxu0 %v503
  %550 = vmatprep.subr.bf16.mxu0 0
  %551 = vmatpush2.bf16.msra.mxu0 %v502
  %552 = vmatprep.subr.bf16.mxu0 0
  %553 = vmatpush2.bf16.msra.mxu0 %v501
  %554 = vmatprep.subr.bf16.mxu0 0
  %555 = vmatpush2.bf16.msra.mxu0 %v500
  %556 = vmatprep.mubr.bf16.mxu0 %v301
  %557 = vmatmul.mubr.bf16.gmra.mxu0 %v300
  %v558 = vpop.f32.mrf.mxu0
  %v559 = vadd.f32 0.0, %v558
  %v560 = vpop.f32.mrf.mxu0
  %v561 = vpop.f32.mrf.mxu0
  %v562 = vadd.f32 0.0, %v561
  %v563 = vpop.f32.mrf.mxu0
  %564 = vmatprep.mubr.bf16.mxu0 %v303
  %565 = vmatmul.mubr.bf16.gmra.mxu0 %v302
  %v566 = vpop.f32.mrf.mxu0
  %v567 = vadd.f32 0.0, %v566
  %v568 = vpop.f32.mrf.mxu0
  %v569 = vpop.f32.mrf.mxu0
  %v570 = vadd.f32 0.0, %v569
  %v571 = vpop.f32.mrf.mxu0
  %572 = vmatprep.mubr.bf16.mxu0 %v305
  %573 = vmatmul.mubr.bf16.gmra.mxu0 %v304
  %v574 = vpop.f32.mrf.mxu0
  %v575 = vadd.f32 0.0, %v574
  %v576 = vpop.f32.mrf.mxu0
  %v577 = vpop.f32.mrf.mxu0
  %v578 = vadd.f32 0.0, %v577
  %v579 = vpop.f32.mrf.mxu0
  %580 = vmatprep.mubr.bf16.mxu0 %v307
  %581 = vmatmul.mubr.bf16.gmra.mxu0 %v306
  %v582 = vpop.f32.mrf.mxu0
  %v583 = vadd.f32 0.0, %v582
  %v584 = vpop.f32.mrf.mxu0
  %v585 = vpop.f32.mrf.mxu0
  %v586 = vadd.f32 0.0, %v585
  %v587 = vpop.f32.mrf.mxu0
  %588 = vmatprep.mubr.bf16.mxu0 %v309
  %589 = vmatmul.mubr.bf16.gmra.mxu0 %v308
  %v590 = vpop.f32.mrf.mxu0
  %v591 = vadd.f32 0.0, %v590
  %v592 = vpop.f32.mrf.mxu0
  %v593 = vpop.f32.mrf.mxu0
  %v594 = vadd.f32 0.0, %v593
  %v595 = vpop.f32.mrf.mxu0
  %596 = vmatprep.mubr.bf16.mxu0 %v311
  %597 = vmatmul.mubr.bf16.gmra.mxu0 %v310
  %v598 = vpop.f32.mrf.mxu0
  %v599 = vadd.f32 0.0, %v598
  %v600 = vpop.f32.mrf.mxu0
  %v601 = vpop.f32.mrf.mxu0
  %v602 = vadd.f32 0.0, %v601
  %v603 = vpop.f32.mrf.mxu0
  %604 = vmatprep.mubr.bf16.mxu0 %v313
  %605 = vmatmul.mubr.bf16.gmra.mxu0 %v312
  %v606 = vpop.f32.mrf.mxu0
  %v607 = vadd.f32 0.0, %v606
  %v608 = vpop.f32.mrf.mxu0
  %v609 = vpop.f32.mrf.mxu0
  %v610 = vadd.f32 0.0, %v609
  %v611 = vpop.f32.mrf.mxu0
  %612 = vmatprep.mubr.bf16.mxu0 %v315
  %613 = vmatmul.mubr.bf16.gmra.mxu0 %v314
  %v614 = vpop.f32.mrf.mxu0
  %v615 = vadd.f32 0.0, %v614
  %v616 = vpop.f32.mrf.mxu0
  %v617 = vpop.f32.mrf.mxu0
  %v618 = vadd.f32 0.0, %v617
  %v619 = vpop.f32.mrf.mxu0
  %620 = vmatprep.mubr.bf16.mxu0 %v317
  %621 = vmatmul.mubr.bf16.gmra.mxu0 %v316
  %v622 = vpop.f32.mrf.mxu0
  %v623 = vadd.f32 0.0, %v622
  %v624 = vpop.f32.mrf.mxu0
  %v625 = vpop.f32.mrf.mxu0
  %v626 = vadd.f32 0.0, %v625
  %v627 = vpop.f32.mrf.mxu0
  %628 = vmatprep.mubr.bf16.mxu0 %v319
  %629 = vmatmul.mubr.bf16.gmra.mxu0 %v318
  %v630 = vpop.f32.mrf.mxu0
  %v631 = vadd.f32 0.0, %v630
  %v632 = vpop.f32.mrf.mxu0
  %v633 = vpop.f32.mrf.mxu0
  %v634 = vadd.f32 0.0, %v633
  %v635 = vpop.f32.mrf.mxu0
  %636 = vmatprep.mubr.bf16.mxu0 %v321
  %637 = vmatmul.mubr.bf16.gmra.mxu0 %v320
  %v638 = vpop.f32.mrf.mxu0
  %v639 = vadd.f32 0.0, %v638
  %v640 = vpop.f32.mrf.mxu0
  %v641 = vpop.f32.mrf.mxu0
  %v642 = vadd.f32 0.0, %v641
  %v643 = vpop.f32.mrf.mxu0
  %644 = vmatprep.mubr.bf16.mxu0 %v323
  %645 = vmatmul.mubr.bf16.gmra.mxu0 %v322
  %v646 = vpop.f32.mrf.mxu0
  %v647 = vadd.f32 0.0, %v646
  %v648 = vpop.f32.mrf.mxu0
  %v649 = vpop.f32.mrf.mxu0
  %v650 = vadd.f32 0.0, %v649
  %v651 = vpop.f32.mrf.mxu0
  %652 = vmatprep.mubr.bf16.mxu0 %v325
  %653 = vmatmul.mubr.bf16.gmra.mxu0 %v324
  %v654 = vpop.f32.mrf.mxu0
  %v655 = vadd.f32 0.0, %v654
  %v656 = vpop.f32.mrf.mxu0
  %v657 = vpop.f32.mrf.mxu0
  %v658 = vadd.f32 0.0, %v657
  %v659 = vpop.f32.mrf.mxu0
  %660 = vmatprep.mubr.bf16.mxu0 %v327
  %661 = vmatmul.mubr.bf16.gmra.mxu0 %v326
  %v662 = vpop.f32.mrf.mxu0
  %v663 = vadd.f32 0.0, %v662
  %v664 = vpop.f32.mrf.mxu0
  %v665 = vpop.f32.mrf.mxu0
  %v666 = vadd.f32 0.0, %v665
  %v667 = vpop.f32.mrf.mxu0
  %668 = vmatprep.mubr.bf16.mxu0 %v329
  %669 = vmatmul.mubr.bf16.gmra.mxu0 %v328
  %v670 = vpop.f32.mrf.mxu0
  %v671 = vadd.f32 0.0, %v670
  %v672 = vpop.f32.mrf.mxu0
  %v673 = vpop.f32.mrf.mxu0
  %v674 = vadd.f32 0.0, %v673
  %v675 = vpop.f32.mrf.mxu0
  %676 = vmatprep.mubr.bf16.mxu0 %v331
  %677 = vmatmul.mubr.bf16.gmra.mxu0 %v330
  %v678 = vpop.f32.mrf.mxu0
  %v679 = vadd.f32 0.0, %v678
  %v680 = vpop.f32.mrf.mxu0
  %v681 = vpop.f32.mrf.mxu0
  %v682 = vadd.f32 0.0, %v681
  %v683 = vpop.f32.mrf.mxu0
  %684 = vmatprep.mubr.bf16.mxu0 %v333
  %685 = vmatmul.mubr.bf16.gmra.mxu0 %v332
  %v686 = vpop.f32.mrf.mxu0
  %v687 = vadd.f32 0.0, %v686
  %v688 = vpop.f32.mrf.mxu0
  %v689 = vpop.f32.mrf.mxu0
  %v690 = vadd.f32 0.0, %v689
  %v691 = vpop.f32.mrf.mxu0
  %692 = vmatprep.mubr.bf16.mxu0 %v335
  %693 = vmatmul.mubr.bf16.gmra.mxu0 %v334
  %v694 = vpop.f32.mrf.mxu0
  %v695 = vadd.f32 0.0, %v694
  %v696 = vpop.f32.mrf.mxu0
  %v697 = vpop.f32.mrf.mxu0
  %v698 = vadd.f32 0.0, %v697
  %v699 = vpop.f32.mrf.mxu0
  %700 = vmatprep.mubr.bf16.mxu0 %v337
  %701 = vmatmul.mubr.bf16.gmra.mxu0 %v336
  %v702 = vpop.f32.mrf.mxu0
  %v703 = vadd.f32 0.0, %v702
  %v704 = vpop.f32.mrf.mxu0
  %v705 = vpop.f32.mrf.mxu0
  %v706 = vadd.f32 0.0, %v705
  %v707 = vpop.f32.mrf.mxu0
  %708 = vmatprep.mubr.bf16.mxu0 %v339
  %709 = vmatmul.mubr.bf16.gmra.mxu0 %v338
  %v710 = vpop.f32.mrf.mxu0
  %v711 = vadd.f32 0.0, %v710
  %v712 = vpop.f32.mrf.mxu0
  %v713 = vpop.f32.mrf.mxu0
  %v714 = vadd.f32 0.0, %v713
  %v715 = vpop.f32.mrf.mxu0
  %716 = vmatprep.mubr.bf16.mxu0 %v341
  %717 = vmatmul.mubr.bf16.gmra.mxu0 %v340
  %v718 = vpop.f32.mrf.mxu0
  %v719 = vadd.f32 0.0, %v718
  %v720 = vpop.f32.mrf.mxu0
  %v721 = vpop.f32.mrf.mxu0
  %v722 = vadd.f32 0.0, %v721
  %v723 = vpop.f32.mrf.mxu0
  %724 = vmatprep.mubr.bf16.mxu0 %v343
  %725 = vmatmul.mubr.bf16.gmra.mxu0 %v342
  %v726 = vpop.f32.mrf.mxu0
  %v727 = vadd.f32 0.0, %v726
  %v728 = vpop.f32.mrf.mxu0
  %v729 = vpop.f32.mrf.mxu0
  %v730 = vadd.f32 0.0, %v729
  %v731 = vpop.f32.mrf.mxu0
  %732 = vmatprep.mubr.bf16.mxu0 %v345
  %733 = vmatmul.mubr.bf16.gmra.mxu0 %v344
  %v734 = vpop.f32.mrf.mxu0
  %v735 = vadd.f32 0.0, %v734
  %v736 = vpop.f32.mrf.mxu0
  %v737 = vpop.f32.mrf.mxu0
  %v738 = vadd.f32 0.0, %v737
  %v739 = vpop.f32.mrf.mxu0
  %740 = vmatprep.mubr.bf16.mxu0 %v347
  %741 = vmatmul.mubr.bf16.gmra.mxu0 %v346
  %v742 = vpop.f32.mrf.mxu0
  %v743 = vadd.f32 0.0, %v742
  %v744 = vpop.f32.mrf.mxu0
  %v745 = vpop.f32.mrf.mxu0
  %v746 = vadd.f32 0.0, %v745
  %v747 = vpop.f32.mrf.mxu0
  %748 = vmatprep.mubr.bf16.mxu0 %v349
  %749 = vmatmul.mubr.bf16.gmra.mxu0 %v348
  %v750 = vpop.f32.mrf.mxu0
  %v751 = vadd.f32 0.0, %v750
  %v752 = vpop.f32.mrf.mxu0
  %v753 = vpop.f32.mrf.mxu0
  %v754 = vadd.f32 0.0, %v753
  %v755 = vpop.f32.mrf.mxu0
  %756 = vmatprep.mubr.bf16.mxu0 %v351
  %757 = vmatmul.mubr.bf16.gmra.mxu0 %v350
  %v758 = vpop.f32.mrf.mxu0
  %v759 = vadd.f32 0.0, %v758
  %v760 = vpop.f32.mrf.mxu0
  %v761 = vpop.f32.mrf.mxu0
  %v762 = vadd.f32 0.0, %v761
  %v763 = vpop.f32.mrf.mxu0
  %764 = vmatprep.mubr.bf16.mxu0 %v353
  %765 = vmatmul.mubr.bf16.gmra.mxu0 %v352
  %v766 = vpop.f32.mrf.mxu0
  %v767 = vadd.f32 0.0, %v766
  %v768 = vpop.f32.mrf.mxu0
  %v769 = vpop.f32.mrf.mxu0
  %v770 = vadd.f32 0.0, %v769
  %v771 = vpop.f32.mrf.mxu0
  %772 = vmatprep.mubr.bf16.mxu0 %v355
  %773 = vmatmul.mubr.bf16.gmra.mxu0 %v354
  %v774 = vpop.f32.mrf.mxu0
  %v775 = vadd.f32 0.0, %v774
  %v776 = vpop.f32.mrf.mxu0
  %v777 = vpop.f32.mrf.mxu0
  %v778 = vadd.f32 0.0, %v777
  %v779 = vpop.f32.mrf.mxu0
  %780 = vmatprep.mubr.bf16.mxu0 %v357
  %781 = vmatmul.mubr.bf16.gmra.mxu0 %v356
  %v782 = vpop.f32.mrf.mxu0
  %v783 = vadd.f32 0.0, %v782
  %v784 = vpop.f32.mrf.mxu0
  %v785 = vpop.f32.mrf.mxu0
  %v786 = vadd.f32 0.0, %v785
  %v787 = vpop.f32.mrf.mxu0
  %788 = vmatprep.mubr.bf16.mxu0 %v359
  %789 = vmatmul.mubr.bf16.gmra.mxu0 %v358
  %v790 = vpop.f32.mrf.mxu0
  %v791 = vadd.f32 0.0, %v790
  %v792 = vpop.f32.mrf.mxu0
  %v793 = vpop.f32.mrf.mxu0
  %v794 = vadd.f32 0.0, %v793
  %v795 = vpop.f32.mrf.mxu0
  %796 = vmatprep.mubr.bf16.mxu0 %v361
  %797 = vmatmul.mubr.bf16.gmra.mxu0 %v360
  %v798 = vpop.f32.mrf.mxu0
  %v799 = vadd.f32 0.0, %v798
  %v800 = vpop.f32.mrf.mxu0
  %v801 = vpop.f32.mrf.mxu0
  %v802 = vadd.f32 0.0, %v801
  %v803 = vpop.f32.mrf.mxu0
  %804 = vmatprep.mubr.bf16.mxu0 %v363
  %805 = vmatmul.mubr.bf16.gmra.mxu0 %v362
  %v806 = vpop.f32.mrf.mxu0
  %v807 = vadd.f32 0.0, %v806
  %v808 = vpop.f32.mrf.mxu0
  %v809 = vpop.f32.mrf.mxu0
  %v810 = vadd.f32 0.0, %v809
  %v811 = vpop.f32.mrf.mxu0
  %812 = vdwg.mxu0
  %v813 = vxor.u32 %v559, 2147483648
  %v814 = vxor.u32 %v562, 2147483648
  %v815 = vxor.u32 %v567, 2147483648
  %v816 = vxor.u32 %v570, 2147483648
  %v817 = vxor.u32 %v575, 2147483648
  %v818 = vxor.u32 %v578, 2147483648
  %v819 = vxor.u32 %v583, 2147483648
  %v820 = vxor.u32 %v586, 2147483648
  %v821 = vxor.u32 %v591, 2147483648
  %v822 = vxor.u32 %v594, 2147483648
  %v823 = vxor.u32 %v599, 2147483648
  %v824 = vxor.u32 %v602, 2147483648
  %v825 = vxor.u32 %v607, 2147483648
  %v826 = vxor.u32 %v610, 2147483648
  %v827 = vxor.u32 %v615, 2147483648
  %v828 = vxor.u32 %v618, 2147483648
  %v829 = vxor.u32 %v623, 2147483648
  %v830 = vxor.u32 %v626, 2147483648
  %v831 = vxor.u32 %v631, 2147483648
  %v832 = vxor.u32 %v634, 2147483648
  %v833 = vxor.u32 %v639, 2147483648
  %v834 = vxor.u32 %v642, 2147483648
  %v835 = vxor.u32 %v647, 2147483648
  %v836 = vxor.u32 %v650, 2147483648
  %v837 = vxor.u32 %v655, 2147483648
  %v838 = vxor.u32 %v658, 2147483648
  %v839 = vxor.u32 %v663, 2147483648
  %v840 = vxor.u32 %v666, 2147483648
  %v841 = vxor.u32 %v671, 2147483648
  %v842 = vxor.u32 %v674, 2147483648
  %v843 = vxor.u32 %v679, 2147483648
  %v844 = vxor.u32 %v682, 2147483648
  %v845 = vxor.u32 %v687, 2147483648
  %v846 = vxor.u32 %v690, 2147483648
  %v847 = vxor.u32 %v695, 2147483648
  %v848 = vxor.u32 %v698, 2147483648
  %v849 = vxor.u32 %v703, 2147483648
  %v850 = vxor.u32 %v706, 2147483648
  %v851 = vxor.u32 %v711, 2147483648
  %v852 = vxor.u32 %v714, 2147483648
  %v853 = vxor.u32 %v719, 2147483648
  %v854 = vxor.u32 %v722, 2147483648
  %v855 = vxor.u32 %v727, 2147483648
  %v856 = vxor.u32 %v730, 2147483648
  %v857 = vxor.u32 %v735, 2147483648
  %v858 = vxor.u32 %v738, 2147483648
  %v859 = vxor.u32 %v743, 2147483648
  %v860 = vxor.u32 %v746, 2147483648
  %v861 = vxor.u32 %v751, 2147483648
  %v862 = vxor.u32 %v754, 2147483648
  %v863 = vxor.u32 %v759, 2147483648
  %v864 = vxor.u32 %v762, 2147483648
  %v865 = vxor.u32 %v767, 2147483648
  %v866 = vxor.u32 %v770, 2147483648
  %v867 = vxor.u32 %v775, 2147483648
  %v868 = vxor.u32 %v778, 2147483648
  %v869 = vxor.u32 %v783, 2147483648
  %v870 = vxor.u32 %v786, 2147483648
  %v871 = vxor.u32 %v791, 2147483648
  %v872 = vxor.u32 %v794, 2147483648
  %v873 = vxor.u32 %v799, 2147483648
  %v874 = vxor.u32 %v802, 2147483648
  %v875 = vxor.u32 %v807, 2147483648
  %v876 = vxor.u32 %v810, 2147483648
  %v877 = vmul.f32 %v813, 1.442695
  %v878 = vpow.pop %v877
  %v879 = vmul.f32 %v814, 1.442695
  %v880 = vpow.pop %v879
  %v881 = vmul.f32 %v815, 1.442695
  %v882 = vpow.pop %v881
  %v883 = vmul.f32 %v816, 1.442695
  %v884 = vpow.pop %v883
  %v885 = vmul.f32 %v817, 1.442695
  %v886 = vpow.pop %v885
  %v887 = vmul.f32 %v818, 1.442695
  %v888 = vpow.pop %v887
  %v889 = vmul.f32 %v819, 1.442695
  %v890 = vpow.pop %v889
  %v891 = vmul.f32 %v820, 1.442695
  %v892 = vpow.pop %v891
  %v893 = vmul.f32 %v821, 1.442695
  %v894 = vpow.pop %v893
  %v895 = vmul.f32 %v822, 1.442695
  %v896 = vpow.pop %v895
  %v897 = vmul.f32 %v823, 1.442695
  %v898 = vpow.pop %v897
  %v899 = vmul.f32 %v824, 1.442695
  %v900 = vpow.pop %v899
  %v901 = vmul.f32 %v825, 1.442695
  %v902 = vpow.pop %v901
  %v903 = vmul.f32 %v826, 1.442695
  %v904 = vpow.pop %v903
  %v905 = vmul.f32 %v827, 1.442695
  %v906 = vpow.pop %v905
  %v907 = vmul.f32 %v828, 1.442695
  %v908 = vpow.pop %v907
  %v909 = vmul.f32 %v829, 1.442695
  %v910 = vpow.pop %v909
  %v911 = vmul.f32 %v830, 1.442695
  %v912 = vpow.pop %v911
  %v913 = vmul.f32 %v831, 1.442695
  %v914 = vpow.pop %v913
  %v915 = vmul.f32 %v832, 1.442695
  %v916 = vpow.pop %v915
  %v917 = vmul.f32 %v833, 1.442695
  %v918 = vpow.pop %v917
  %v919 = vmul.f32 %v834, 1.442695
  %v920 = vpow.pop %v919
  %v921 = vmul.f32 %v835, 1.442695
  %v922 = vpow.pop %v921
  %v923 = vmul.f32 %v836, 1.442695
  %v924 = vpow.pop %v923
  %v925 = vmul.f32 %v837, 1.442695
  %v926 = vpow.pop %v925
  %v927 = vmul.f32 %v838, 1.442695
  %v928 = vpow.pop %v927
  %v929 = vmul.f32 %v839, 1.442695
  %v930 = vpow.pop %v929
  %v931 = vmul.f32 %v840, 1.442695
  %v932 = vpow.pop %v931
  %v933 = vmul.f32 %v841, 1.442695
  %v934 = vpow.pop %v933
  %v935 = vmul.f32 %v842, 1.442695
  %v936 = vpow.pop %v935
  %v937 = vmul.f32 %v843, 1.442695
  %v938 = vpow.pop %v937
  %v939 = vmul.f32 %v844, 1.442695
  %v940 = vpow.pop %v939
  %v941 = vmul.f32 %v845, 1.442695
  %v942 = vpow.pop %v941
  %v943 = vmul.f32 %v846, 1.442695
  %v944 = vpow.pop %v943
  %v945 = vmul.f32 %v847, 1.442695
  %v946 = vpow.pop %v945
  %v947 = vmul.f32 %v848, 1.442695
  %v948 = vpow.pop %v947
  %v949 = vmul.f32 %v849, 1.442695
  %v950 = vpow.pop %v949
  %v951 = vmul.f32 %v850, 1.442695
  %v952 = vpow.pop %v951
  %v953 = vmul.f32 %v851, 1.442695
  %v954 = vpow.pop %v953
  %v955 = vmul.f32 %v852, 1.442695
  %v956 = vpow.pop %v955
  %v957 = vmul.f32 %v853, 1.442695
  %v958 = vpow.pop %v957
  %v959 = vmul.f32 %v854, 1.442695
  %v960 = vpow.pop %v959
  %v961 = vmul.f32 %v855, 1.442695
  %v962 = vpow.pop %v961
  %v963 = vmul.f32 %v856, 1.442695
  %v964 = vpow.pop %v963
  %v965 = vmul.f32 %v857, 1.442695
  %v966 = vpow.pop %v965
  %v967 = vmul.f32 %v858, 1.442695
  %v968 = vpow.pop %v967
  %v969 = vmul.f32 %v859, 1.442695
  %v970 = vpow.pop %v969
  %v971 = vmul.f32 %v860, 1.442695
  %v972 = vpow.pop %v971
  %v973 = vmul.f32 %v861, 1.442695
  %v974 = vpow.pop %v973
  %v975 = vmul.f32 %v862, 1.442695
  %v976 = vpow.pop %v975
  %v977 = vmul.f32 %v863, 1.442695
  %v978 = vpow.pop %v977
  %v979 = vmul.f32 %v864, 1.442695
  %v980 = vpow.pop %v979
  %v981 = vmul.f32 %v865, 1.442695
  %v982 = vpow.pop %v981
  %v983 = vmul.f32 %v866, 1.442695
  %v984 = vpow.pop %v983
  %v985 = vmul.f32 %v867, 1.442695
  %v986 = vpow.pop %v985
  %v987 = vmul.f32 %v868, 1.442695
  %v988 = vpow.pop %v987
  %v989 = vmul.f32 %v869, 1.442695
  %v990 = vpow.pop %v989
  %v991 = vmul.f32 %v870, 1.442695
  %v992 = vpow.pop %v991
  %v993 = vmul.f32 %v871, 1.442695
  %v994 = vpow.pop %v993
  %v995 = vmul.f32 %v872, 1.442695
  %v996 = vpow.pop %v995
  %v997 = vmul.f32 %v873, 1.442695
  %v998 = vpow.pop %v997
  %v999 = vmul.f32 %v874, 1.442695
  %v1000 = vpow.pop %v999
  %v1001 = vmul.f32 %v875, 1.442695
  %v1002 = vpow.pop %v1001
  %v1003 = vmul.f32 %v876, 1.442695
  %v1004 = vpow.pop %v1003
  %v1005 = vadd.f32 %v878, 1.0
  %v1006 = vadd.f32 %v880, 1.0
  %v1007 = vadd.f32 %v882, 1.0
  %v1008 = vadd.f32 %v884, 1.0
  %v1009 = vadd.f32 %v886, 1.0
  %v1010 = vadd.f32 %v888, 1.0
  %v1011 = vadd.f32 %v890, 1.0
  %v1012 = vadd.f32 %v892, 1.0
  %v1013 = vadd.f32 %v894, 1.0
  %v1014 = vadd.f32 %v896, 1.0
  %v1015 = vadd.f32 %v898, 1.0
  %v1016 = vadd.f32 %v900, 1.0
  %v1017 = vadd.f32 %v902, 1.0
  %v1018 = vadd.f32 %v904, 1.0
  %v1019 = vadd.f32 %v906, 1.0
  %v1020 = vadd.f32 %v908, 1.0
  %v1021 = vadd.f32 %v910, 1.0
  %v1022 = vadd.f32 %v912, 1.0
  %v1023 = vadd.f32 %v914, 1.0
  %v1024 = vadd.f32 %v916, 1.0
  %v1025 = vadd.f32 %v918, 1.0
  %v1026 = vadd.f32 %v920, 1.0
  %v1027 = vadd.f32 %v922, 1.0
  %v1028 = vadd.f32 %v924, 1.0
  %v1029 = vadd.f32 %v926, 1.0
  %v1030 = vadd.f32 %v928, 1.0
  %v1031 = vadd.f32 %v930, 1.0
  %v1032 = vadd.f32 %v932, 1.0
  %v1033 = vadd.f32 %v934, 1.0
  %v1034 = vadd.f32 %v936, 1.0
  %v1035 = vadd.f32 %v938, 1.0
  %v1036 = vadd.f32 %v940, 1.0
  %v1037 = vadd.f32 %v942, 1.0
  %v1038 = vadd.f32 %v944, 1.0
  %v1039 = vadd.f32 %v946, 1.0
  %v1040 = vadd.f32 %v948, 1.0
  %v1041 = vadd.f32 %v950, 1.0
  %v1042 = vadd.f32 %v952, 1.0
  %v1043 = vadd.f32 %v954, 1.0
  %v1044 = vadd.f32 %v956, 1.0
  %v1045 = vadd.f32 %v958, 1.0
  %v1046 = vadd.f32 %v960, 1.0
  %v1047 = vadd.f32 %v962, 1.0
  %v1048 = vadd.f32 %v964, 1.0
  %v1049 = vadd.f32 %v966, 1.0
  %v1050 = vadd.f32 %v968, 1.0
  %v1051 = vadd.f32 %v970, 1.0
  %v1052 = vadd.f32 %v972, 1.0
  %v1053 = vadd.f32 %v974, 1.0
  %v1054 = vadd.f32 %v976, 1.0
  %v1055 = vadd.f32 %v978, 1.0
  %v1056 = vadd.f32 %v980, 1.0
  %v1057 = vadd.f32 %v982, 1.0
  %v1058 = vadd.f32 %v984, 1.0
  %v1059 = vadd.f32 %v986, 1.0
  %v1060 = vadd.f32 %v988, 1.0
  %v1061 = vadd.f32 %v990, 1.0
  %v1062 = vadd.f32 %v992, 1.0
  %v1063 = vadd.f32 %v994, 1.0
  %v1064 = vadd.f32 %v996, 1.0
  %v1065 = vadd.f32 %v998, 1.0
  %v1066 = vadd.f32 %v1000, 1.0
  %v1067 = vadd.f32 %v1002, 1.0
  %v1068 = vadd.f32 %v1004, 1.0
  %v1069 = vrcp.pop %v1005
  %v1070 = vmul.f32 1.0, %v1069
  %v1071 = vrcp.pop %v1006
  %v1072 = vmul.f32 1.0, %v1071
  %v1073 = vrcp.pop %v1007
  %v1074 = vmul.f32 1.0, %v1073
  %v1075 = vrcp.pop %v1008
  %v1076 = vmul.f32 1.0, %v1075
  %v1077 = vrcp.pop %v1009
  %v1078 = vmul.f32 1.0, %v1077
  %v1079 = vrcp.pop %v1010
  %v1080 = vmul.f32 1.0, %v1079
  %v1081 = vrcp.pop %v1011
  %v1082 = vmul.f32 1.0, %v1081
  %v1083 = vrcp.pop %v1012
  %v1084 = vmul.f32 1.0, %v1083
  %v1085 = vrcp.pop %v1013
  %v1086 = vmul.f32 1.0, %v1085
  %v1087 = vrcp.pop %v1014
  %v1088 = vmul.f32 1.0, %v1087
  %v1089 = vrcp.pop %v1015
  %v1090 = vmul.f32 1.0, %v1089
  %v1091 = vrcp.pop %v1016
  %v1092 = vmul.f32 1.0, %v1091
  %v1093 = vrcp.pop %v1017
  %v1094 = vmul.f32 1.0, %v1093
  %v1095 = vrcp.pop %v1018
  %v1096 = vmul.f32 1.0, %v1095
  %v1097 = vrcp.pop %v1019
  %v1098 = vmul.f32 1.0, %v1097
  %v1099 = vrcp.pop %v1020
  %v1100 = vmul.f32 1.0, %v1099
  %v1101 = vrcp.pop %v1021
  %v1102 = vmul.f32 1.0, %v1101
  %v1103 = vrcp.pop %v1022
  %v1104 = vmul.f32 1.0, %v1103
  %v1105 = vrcp.pop %v1023
  %v1106 = vmul.f32 1.0, %v1105
  %v1107 = vrcp.pop %v1024
  %v1108 = vmul.f32 1.0, %v1107
  %v1109 = vrcp.pop %v1025
  %v1110 = vmul.f32 1.0, %v1109
  %v1111 = vrcp.pop %v1026
  %v1112 = vmul.f32 1.0, %v1111
  %v1113 = vrcp.pop %v1027
  %v1114 = vmul.f32 1.0, %v1113
  %v1115 = vrcp.pop %v1028
  %v1116 = vmul.f32 1.0, %v1115
  %v1117 = vrcp.pop %v1029
  %v1118 = vmul.f32 1.0, %v1117
  %v1119 = vrcp.pop %v1030
  %v1120 = vmul.f32 1.0, %v1119
  %v1121 = vrcp.pop %v1031
  %v1122 = vmul.f32 1.0, %v1121
  %v1123 = vrcp.pop %v1032
  %v1124 = vmul.f32 1.0, %v1123
  %v1125 = vrcp.pop %v1033
  %v1126 = vmul.f32 1.0, %v1125
  %v1127 = vrcp.pop %v1034
  %v1128 = vmul.f32 1.0, %v1127
  %v1129 = vrcp.pop %v1035
  %v1130 = vmul.f32 1.0, %v1129
  %v1131 = vrcp.pop %v1036
  %v1132 = vmul.f32 1.0, %v1131
  %v1133 = vrcp.pop %v1037
  %v1134 = vmul.f32 1.0, %v1133
  %v1135 = vrcp.pop %v1038
  %v1136 = vmul.f32 1.0, %v1135
  %v1137 = vrcp.pop %v1039
  %v1138 = vmul.f32 1.0, %v1137
  %v1139 = vrcp.pop %v1040
  %v1140 = vmul.f32 1.0, %v1139
  %v1141 = vrcp.pop %v1041
  %v1142 = vmul.f32 1.0, %v1141
  %v1143 = vrcp.pop %v1042
  %v1144 = vmul.f32 1.0, %v1143
  %v1145 = vrcp.pop %v1043
  %v1146 = vmul.f32 1.0, %v1145
  %v1147 = vrcp.pop %v1044
  %v1148 = vmul.f32 1.0, %v1147
  %v1149 = vrcp.pop %v1045
  %v1150 = vmul.f32 1.0, %v1149
  %v1151 = vrcp.pop %v1046
  %v1152 = vmul.f32 1.0, %v1151
  %v1153 = vrcp.pop %v1047
  %v1154 = vmul.f32 1.0, %v1153
  %v1155 = vrcp.pop %v1048
  %v1156 = vmul.f32 1.0, %v1155
  %v1157 = vrcp.pop %v1049
  %v1158 = vmul.f32 1.0, %v1157
  %v1159 = vrcp.pop %v1050
  %v1160 = vmul.f32 1.0, %v1159
  %v1161 = vrcp.pop %v1051
  %v1162 = vmul.f32 1.0, %v1161
  %v1163 = vrcp.pop %v1052
  %v1164 = vmul.f32 1.0, %v1163
  %v1165 = vrcp.pop %v1053
  %v1166 = vmul.f32 1.0, %v1165
  %v1167 = vrcp.pop %v1054
  %v1168 = vmul.f32 1.0, %v1167
  %v1169 = vrcp.pop %v1055
  %v1170 = vmul.f32 1.0, %v1169
  %v1171 = vrcp.pop %v1056
  %v1172 = vmul.f32 1.0, %v1171
  %v1173 = vrcp.pop %v1057
  %v1174 = vmul.f32 1.0, %v1173
  %v1175 = vrcp.pop %v1058
  %v1176 = vmul.f32 1.0, %v1175
  %v1177 = vrcp.pop %v1059
  %v1178 = vmul.f32 1.0, %v1177
  %v1179 = vrcp.pop %v1060
  %v1180 = vmul.f32 1.0, %v1179
  %v1181 = vrcp.pop %v1061
  %v1182 = vmul.f32 1.0, %v1181
  %v1183 = vrcp.pop %v1062
  %v1184 = vmul.f32 1.0, %v1183
  %v1185 = vrcp.pop %v1063
  %v1186 = vmul.f32 1.0, %v1185
  %v1187 = vrcp.pop %v1064
  %v1188 = vmul.f32 1.0, %v1187
  %v1189 = vrcp.pop %v1065
  %v1190 = vmul.f32 1.0, %v1189
  %v1191 = vrcp.pop %v1066
  %v1192 = vmul.f32 1.0, %v1191
  %v1193 = vrcp.pop %v1067
  %v1194 = vmul.f32 1.0, %v1193
  %v1195 = vrcp.pop %v1068
  %v1196 = vmul.f32 1.0, %v1195
  %1197 = vst [vmem:[%s2] sm:$0xff] %v1070
  %1198 = vst [vmem:[%s2 + $0x8] sm:$0xff] %v1072
  %1199 = vst [vmem:[%s2 + $0x10] sm:$0xff] %v1074
  %1200 = vst [vmem:[%s2 + $0x18] sm:$0xff] %v1076
  %1201 = vst [vmem:[%s2 + $0x20] sm:$0xff] %v1078
  %1202 = vst [vmem:[%s2 + $0x28] sm:$0xff] %v1080
  %1203 = vst [vmem:[%s2 + $0x30] sm:$0xff] %v1082
  %1204 = vst [vmem:[%s2 + $0x38] sm:$0xff] %v1084
  %1205 = vst [vmem:[%s2 + $0x40] sm:$0xff] %v1086
  %1206 = vst [vmem:[%s2 + $0x48] sm:$0xff] %v1088
  %1207 = vst [vmem:[%s2 + $0x50] sm:$0xff] %v1090
  %1208 = vst [vmem:[%s2 + $0x58] sm:$0xff] %v1092
  %1209 = vst [vmem:[%s2 + $0x60] sm:$0xff] %v1094
  %1210 = vst [vmem:[%s2 + $0x68] sm:$0xff] %v1096
  %1211 = vst [vmem:[%s2 + $0x70] sm:$0xff] %v1098
  %1212 = vst [vmem:[%s2 + $0x78] sm:$0xff] %v1100
  %1213 = vst [vmem:[%s2 + $0x80] sm:$0xff] %v1102
  %1214 = vst [vmem:[%s2 + $0x88] sm:$0xff] %v1104
  %1215 = vst [vmem:[%s2 + $0x90] sm:$0xff] %v1106
  %1216 = vst [vmem:[%s2 + $0x98] sm:$0xff] %v1108
  %1217 = vst [vmem:[%s2 + $0xa0] sm:$0xff] %v1110
  %1218 = vst [vmem:[%s2 + $0xa8] sm:$0xff] %v1112
  %1219 = vst [vmem:[%s2 + $0xb0] sm:$0xff] %v1114
  %1220 = vst [vmem:[%s2 + $0xb8] sm:$0xff] %v1116
  %1221 = vst [vmem:[%s2 + $0xc0] sm:$0xff] %v1118
  %1222 = vst [vmem:[%s2 + $0xc8] sm:$0xff] %v1120
  %1223 = vst [vmem:[%s2 + $0xd0] sm:$0xff] %v1122
  %1224 = vst [vmem:[%s2 + $0xd8] sm:$0xff] %v1124
  %1225 = vst [vmem:[%s2 + $0xe0] sm:$0xff] %v1126
  %1226 = vst [vmem:[%s2 + $0xe8] sm:$0xff] %v1128
  %1227 = vst [vmem:[%s2 + $0xf0] sm:$0xff] %v1130
  %1228 = vst [vmem:[%s2 + $0xf8] sm:$0xff] %v1132
  %1229 = vst [vmem:[%s2 + $0x100] sm:$0xff] %v1134
  %1230 = vst [vmem:[%s2 + $0x108] sm:$0xff] %v1136
  %1231 = vst [vmem:[%s2 + $0x110] sm:$0xff] %v1138
  %1232 = vst [vmem:[%s2 + $0x118] sm:$0xff] %v1140
  %1233 = vst [vmem:[%s2 + $0x120] sm:$0xff] %v1142
  %1234 = vst [vmem:[%s2 + $0x128] sm:$0xff] %v1144
  %1235 = vst [vmem:[%s2 + $0x130] sm:$0xff] %v1146
  %1236 = vst [vmem:[%s2 + $0x138] sm:$0xff] %v1148
  %1237 = vst [vmem:[%s2 + $0x140] sm:$0xff] %v1150
  %1238 = vst [vmem:[%s2 + $0x148] sm:$0xff] %v1152
  %1239 = vst [vmem:[%s2 + $0x150] sm:$0xff] %v1154
  %1240 = vst [vmem:[%s2 + $0x158] sm:$0xff] %v1156
  %1241 = vst [vmem:[%s2 + $0x160] sm:$0xff] %v1158
  %1242 = vst [vmem:[%s2 + $0x168] sm:$0xff] %v1160
  %1243 = vst [vmem:[%s2 + $0x170] sm:$0xff] %v1162
  %1244 = vst [vmem:[%s2 + $0x178] sm:$0xff] %v1164
  %1245 = vst [vmem:[%s2 + $0x180] sm:$0xff] %v1166
  %1246 = vst [vmem:[%s2 + $0x188] sm:$0xff] %v1168
  %1247 = vst [vmem:[%s2 + $0x190] sm:$0xff] %v1170
  %1248 = vst [vmem:[%s2 + $0x198] sm:$0xff] %v1172
  %1249 = vst [vmem:[%s2 + $0x1a0] sm:$0xff] %v1174
  %1250 = vst [vmem:[%s2 + $0x1a8] sm:$0xff] %v1176
  %1251 = vst [vmem:[%s2 + $0x1b0] sm:$0xff] %v1178
  %1252 = vst [vmem:[%s2 + $0x1b8] sm:$0xff] %v1180
  %1253 = vst [vmem:[%s2 + $0x1c0] sm:$0xff] %v1182
  %1254 = vst [vmem:[%s2 + $0x1c8] sm:$0xff] %v1184
  %1255 = vst [vmem:[%s2 + $0x1d0] sm:$0xff] %v1186
  %1256 = vst [vmem:[%s2 + $0x1d8] sm:$0xff] %v1188
  %1257 = vst [vmem:[%s2 + $0x1e0] sm:$0xff] %v1190
  %1258 = vst [vmem:[%s2 + $0x1e8] sm:$0xff] %v1192
  %1259 = vst [vmem:[%s2 + $0x1f0] sm:$0xff] %v1194
  %1260 = vst [vmem:[%s2 + $0x1f8] sm:$0xff] %v1196
  // Predicated region
  $region10: #{generator_forward.19} parent=0 // pred_check
    _
  $region11: #{generator_forward.19} parent=0 // pred_check_branch
    %1262 = sbr.rel (0) target = $region13
  $region12: #{generator_forward.19} parent=0 // pred_region
    _
  $region13: #{generator_forward.19} parent=0 // pred_fallthru
    _
  // Predicated region
  $region14: #{generator_forward.19} parent=0 // pred_check
    _
  $region15: #{generator_forward.19} parent=0 // pred_check_branch
    %1264 = sbr.rel (0) target = $region17
  $region16: #{generator_forward.19} parent=0 // pred_region
    _
  $region17: #{generator_forward.19} parent=0 // pred_fallthru
    _

</llo_original>
